<compile_context>
chip_gen: v6e
topology: v6e:2x2x1
jax: 0.10.0
libtpu: 0.0.40
codegen_flags: <defaults>
</compile_context>

<pallas_src>
import functools

import jax
import jax.numpy as jnp
from jax import lax
from jax.experimental import pallas as pl
from jax.experimental.pallas import tpu as pltpu

EPS = 1e-5


def _round_up(x, m):
    return (x + m - 1) // m * m


def _padded_block_bytes(shape, dtype):
    """Rough VMEM footprint of one block: last two dims padded to (8, 128)."""
    dims = list(shape) if len(shape) >= 2 else [1] + list(shape)
    dims[-1] = _round_up(dims[-1], 128)
    dims[-2] = _round_up(dims[-2], 8)
    n = 1
    for d in dims:
        n *= d
    return n * jnp.dtype(dtype).itemsize


def _vmem_budget(raw_bytes):
    return int(min(max(2 * raw_bytes + (1 << 20), 4 << 20), 32 << 20))


# ----------------------------- Pallas kernels ------------------------------ #

def _conv5x5_stats_kernel(x_ref, w_ref, cm_ref, y_ref, s_ref, q_ref, xc_ref, *,
                          cin_p, wp, n_cols):
    """5x5 conv as one wide-K MXU matmul (in-VMEM im2col) + partial BN stats.

    x_ref : (Cin_p, Hp*Wp)      bf16  zero-padded image, spatial flattened on lanes
    w_ref : (Cout, 25*Cin_p)    bf16  tap-major (dy,dx) x channel conv weights
    cm_ref: (1, Ho*Wp)          f32   1.0 on valid output columns, 0.0 on pad cols
    y_ref : (Cout, Ho*Wp)       bf16  conv output (valid cols: lane % Wp < Wo)
    s_ref : (Cout, 1)           f32   per-image sum over valid pixels
    q_ref : (Cout, 1)           f32   per-image sum of squares over valid pixels
    xc_ref: (25*Cin_p, Ho*Wp)   bf16  scratch: im2col operand (K on sublanes)
    """
    # Build the wide-K operand: 25 contiguous lane-slices of the padded image,
    # each stored as an 8-row-aligned chunk (Cin padded to 8) -> clean vst.
    for t in range(25):
        dy, dx = divmod(t, 5)
        xc_ref[pl.ds(t * cin_p, cin_p), :] = x_ref[:, pl.ds(dy * wp + dx, n_cols)]

    # Single K = 25*Cin_p bf16 matmul, f32 accumulation on the MXU.
    acc = jnp.dot(w_ref[...], xc_ref[...], preferred_element_type=jnp.float32)

    y_ref[...] = acc.astype(y_ref.dtype)

    masked = acc * cm_ref[...]                       # zero out wrap-around columns
    s_ref[...] = jnp.sum(masked, axis=1, keepdims=True)
    q_ref[...] = jnp.sum(masked * masked, axis=1, keepdims=True)


def _bn_relu_maxpool_kernel(y_ref, sc_ref, sh_ref, selw_ref, o_ref, *,
                            wp, ho, po_n, qo_n, pad_pool):
    """Fused BN affine (precomputed scale/shift) + ReLU + 3x3/stride-3 max-pool.

    y_ref   : (Cout, Ho*Wp)  bf16  pre-activation conv outputs
    sc_ref  : (Cout, 1)      f32   gamma * rsqrt(var + eps)   (1.0 without BN)
    sh_ref  : (Cout, 1)      f32   beta - mean * scale        (conv bias w/o BN)
    selw_ref: (Wp, 3*Qo)     f32   0/1 selection matrix: col dx*Qo+q picks conv
                                   column 3q - pad_pool + dx (zero col if invalid)
    o_ref   : (Cout, Po*Qo)  f32   pooled output
    """
    scale = sc_ref[...]
    shift = sh_ref[...]
    selw = selw_ref[...]
    for po in range(po_n):
        rows = [3 * po - pad_pool + dy for dy in range(3)]
        rows = [r for r in rows if 0 <= r < ho]
        assert rows, "every pool window must contain at least one valid row"
        # H-direction max over the (<=3) valid conv rows after BN + ReLU.
        acc = None
        for r in rows:
            slab = y_ref[:, r * wp:(r + 1) * wp].astype(jnp.float32)
            a = jnp.maximum(slab * scale + shift, 0.0)
            acc = a if acc is None else jnp.maximum(acc, a)
        # W-direction stride-3 downsample as a tiny selection matmul (exact up
        # to bf16 MXU rounding); invalid (pool-pad / wrap) columns give 0 and
        # can never exceed the post-ReLU (>= 0) valid entries.
        g = jnp.dot(acc, selw, preferred_element_type=jnp.float32)
        pooled = jnp.maximum(jnp.maximum(g[:, 0:qo_n], g[:, qo_n:2 * qo_n]),
                             g[:, 2 * qo_n:3 * qo_n])
        o_ref[:, po * qo_n:(po + 1) * qo_n] = pooled


# ------------------------------ forward pass -------------------------------- #

def alex_conv_block_forward(x_nchw, params, *, pad_5x5, pad_pool,
                            batch_norm=True):
    """x_nchw: (N, Cin, H, W) f32 -> (N, Cout, Po, Qo) f32."""
    w = params["w"]                      # (Cout, Cin, 5, 5)
    N, Cin, H, W = x_nchw.shape
    Cout = w.shape[0]
    p5, pp = pad_5x5, pad_pool
    assert 2 * pp < 3, "MaxPool2d padding must be <= kernel_size // 2"

    Ho, Wo = H + 2 * p5 - 4, W + 2 * p5 - 4        # conv output spatial dims
    Po = (Ho + 2 * pp - 3) // 3 + 1                # pooled output dims
    Qo = (Wo + 2 * pp - 3) // 3 + 1
    Wp = Wo + 4                                    # padded width
    Hp = Ho + 5                                    # padded height (+1 halo row)
    HoWp = Ho * Wp
    Cin_p = _round_up(Cin, 8)                      # 8-row aligned im2col chunks
    K = 25 * Cin_p

    # -------- pass 1 operands (NCHW-native, spatial flattened on lanes) ------ #
    xp = jnp.pad(x_nchw.astype(jnp.float32),
                 ((0, 0), (0, Cin_p - Cin), (p5, p5 + 1), (p5, p5)))
    x_in = xp.reshape(N, Cin_p, Hp * Wp).astype(jnp.bfloat16)

    w2 = jnp.pad(w.astype(jnp.float32), ((0, 0), (0, Cin_p - Cin), (0, 0), (0, 0)))
    w2 = jnp.transpose(w2, (0, 2, 3, 1)).reshape(Cout, K).astype(jnp.bfloat16)

    colmask = (jnp.arange(HoWp, dtype=jnp.int32) % Wp < Wo)
    colmask = colmask.astype(jnp.float32).reshape(1, HoWp)       # lane-dense

    kern1 = functools.partial(_conv5x5_stats_kernel,
                              cin_p=Cin_p, wp=Wp, n_cols=HoWp)
    vmem1 = (2 * _padded_block_bytes((Cin_p, Hp * Wp), jnp.bfloat16)
             + 2 * _padded_block_bytes((Cout, K), jnp.bfloat16)
             + 2 * _padded_block_bytes((1, HoWp), jnp.float32)
             + 2 * _padded_block_bytes((Cout, HoWp), jnp.bfloat16)
             + 4 * _padded_block_bytes((Cout, 1), jnp.float32)
             + _padded_block_bytes((K, HoWp), jnp.bfloat16))
    cost1 = pl.CostEstimate(
        flops=2 * N * Cout * K * HoWp,
        transcendentals=0,
        bytes_accessed=(N * Cin_p * Hp * Wp * 2 + Cout * K * 2 + HoWp * 4
                        + N * Cout * HoWp * 2 + 2 * N * Cout * 4))

    y, psum, psumsq = pl.pallas_call(
        kern1,
        grid=(N,),
        in_specs=[
            pl.BlockSpec((None, Cin_p, Hp * Wp), lambda n: (n, 0, 0)),
            pl.BlockSpec((Cout, K), lambda n: (0, 0)),
            pl.BlockSpec((1, HoWp), lambda n: (0, 0)),
        ],
        out_specs=[
            pl.BlockSpec((None, Cout, HoWp), lambda n: (n, 0, 0)),
            pl.BlockSpec((None, Cout, 1), lambda n: (n, 0, 0)),
            pl.BlockSpec((None, Cout, 1), lambda n: (n, 0, 0)),
        ],
        out_shape=[
            jax.ShapeDtypeStruct((N, Cout, HoWp), jnp.bfloat16),
            jax.ShapeDtypeStruct((N, Cout, 1), jnp.float32),
            jax.ShapeDtypeStruct((N, Cout, 1), jnp.float32),
        ],
        scratch_shapes=[pltpu.VMEM((K, HoWp), jnp.bfloat16)],
        compiler_params=pltpu.CompilerParams(
            dimension_semantics=("parallel",),
            vmem_limit_bytes=_vmem_budget(vmem1)),
        cost_estimate=cost1,
    )(x_in, w2, colmask)

    # ----------- glue: fold BN (or bias) into a single scale/shift ---------- #
    if batch_norm:
        cnt = float(N * Ho * Wo)
        s_tot = jnp.sum(psum, axis=0)[:, 0]                       # (Cout,)
        q_tot = jnp.sum(psumsq, axis=0)[:, 0]
        mean = s_tot / cnt
        var = jnp.maximum(q_tot / cnt - mean * mean, 0.0)         # biased var
        scale = params["gamma"].astype(jnp.float32) * lax.rsqrt(var + EPS)
        shift = params["beta"].astype(jnp.float32) - mean * scale   # bias cancels
    else:
        scale = jnp.ones((Cout,), jnp.float32)
        shift = params["b"].astype(jnp.float32)

    # ------ glue: 0/1 selection matrix for the stride-3 W-direction max ----- #
    q_idx = jnp.arange(Qo, dtype=jnp.int32)
    col = (3 * q_idx[None, :] - pp) + jnp.arange(3, dtype=jnp.int32)[:, None]
    w_idx = jnp.arange(Wp, dtype=jnp.int32)[:, None, None]
    selw = ((w_idx == col[None]) & (col[None] >= 0) & (col[None] < Wo))
    selw = selw.astype(jnp.float32).reshape(Wp, 3 * Qo)

    # ------- pass 2: scale/shift + ReLU + 3x3/stride-3 max-pool (per image) -- #
    kern2 = functools.partial(_bn_relu_maxpool_kernel,
                              wp=Wp, ho=Ho, po_n=Po, qo_n=Qo, pad_pool=pp)
    vmem2 = (2 * _padded_block_bytes((Cout, HoWp), jnp.bfloat16)
             + 4 * _padded_block_bytes((Cout, 1), jnp.float32)
             + 2 * _padded_block_bytes((Wp, 3 * Qo), jnp.float32)
             + 2 * _padded_block_bytes((Cout, Po * Qo), jnp.float32))
    cost2 = pl.CostEstimate(
        flops=2 * N * Po * Cout * Wp * 3 * Qo + 6 * N * Cout * HoWp,
        transcendentals=0,
        bytes_accessed=(N * Cout * HoWp * 2 + N * Cout * Po * Qo * 4
                        + 2 * Cout * 4 + Wp * 3 * Qo * 4))

    out = pl.pallas_call(
        kern2,
        grid=(N,),
        in_specs=[
            pl.BlockSpec((None, Cout, HoWp), lambda n: (n, 0, 0)),
            pl.BlockSpec((Cout, 1), lambda n: (0, 0)),
            pl.BlockSpec((Cout, 1), lambda n: (0, 0)),
            pl.BlockSpec((Wp, 3 * Qo), lambda n: (0, 0)),
        ],
        out_specs=pl.BlockSpec((None, Cout, Po * Qo), lambda n: (n, 0, 0)),
        out_shape=jax.ShapeDtypeStruct((N, Cout, Po * Qo), jnp.float32),
        compiler_params=pltpu.CompilerParams(
            dimension_semantics=("parallel",),
            vmem_limit_bytes=_vmem_budget(vmem2)),
        cost_estimate=cost2,
    )(y, scale.reshape(Cout, 1), shift.reshape(Cout, 1), selw)

    return out.reshape(N, Cout, Po, Qo)            # already NCHW - no transpose


# --------------------------- pure-JAX reference ----------------------------- #

def _ref_alex_conv_block(x, p, pad_5x5, pad_pool, batch_norm=True):
    y = lax.conv_general_dilated(
        x, p["w"], (1, 1), [(pad_5x5, pad_5x5), (pad_5x5, pad_5x5)],
        dimension_numbers=("NCHW", "OIHW", "NCHW")) + p["b"][None, :, None, None]
    if batch_norm:
        mean = jnp.mean(y, axis=(0, 2, 3), keepdims=True)
        var = jnp.mean((y - mean) ** 2, axis=(0, 2, 3), keepdims=True)
        y = (y - mean) * lax.rsqrt(var + EPS)
        y = y * p["gamma"][None, :, None, None] + p["beta"][None, :, None, None]
    y = jnp.maximum(y, 0.0)
    return lax.reduce_window(
        y, -jnp.inf, lax.max, (1, 1, 3, 3), (1, 1, 3, 3),
        [(0, 0), (0, 0), (pad_pool, pad_pool), (pad_pool, pad_pool)])


# ----------------------------------- main ----------------------------------- #

if __name__ == "__main__":
    key = jax.random.PRNGKey(0)
    kx, kw, kb, kg, kbt = jax.random.split(key, 5)

    # alex_conv_block(in_planes=4, n5x5=32, pad_5x5=2, pad_pool=1, batch_norm=True)
    N, Cin, H, W = 2, 4, 16, 16
    n5x5, pad_5x5, pad_pool = 32, 2, 1

    x = jax.random.normal(kx, (N, Cin, H, W), jnp.float32)
    params = dict(
        w=0.1 * jax.random.normal(kw, (n5x5, Cin, 5, 5), jnp.float32),
        b=0.1 * jax.random.normal(kb, (n5x5,), jnp.float32),
        gamma=1.0 + 0.1 * jax.random.normal(kg, (n5x5,), jnp.float32),
        beta=0.1 * jax.random.normal(kbt, (n5x5,), jnp.float32),
    )

    fwd = jax.jit(functools.partial(alex_conv_block_forward,
                                    pad_5x5=pad_5x5, pad_pool=pad_pool,
                                    batch_norm=True))
    out = jax.block_until_ready(fwd(x, params))

    Ho = H + 2 * pad_5x5 - 4
    Po = (Ho + 2 * pad_pool - 3) // 3 + 1
    assert out.shape == (N, n5x5, Po, Po), out.shape

    ref = _ref_alex_conv_block(x, params, pad_5x5, pad_pool, batch_norm=True)
    if not jnp.allclose(out, ref, rtol=5e-2, atol=5e-2):
        err = float(jnp.max(jnp.abs(out - ref)))
        raise AssertionError(f"Pallas output mismatch vs reference (max abs err {err})")

    print("KERNEL_OK")
</pallas_src>

<mosaic_0001>
module attributes {stable_mosaic.version = 11 : i64} {
  func.func @_conv5x5_stats_kernel(%arg0: i32, %arg1: memref<1x8x420xbf16, #tpu.memory_space<vmem>>, %arg2: memref<32x200xbf16, #tpu.memory_space<vmem>>, %arg3: memref<1x320xf32, #tpu.memory_space<vmem>>, %arg4: memref<1x32x320xbf16, #tpu.memory_space<vmem>>, %arg5: memref<1x32x1xf32, #tpu.memory_space<vmem>>, %arg6: memref<1x32x1xf32, #tpu.memory_space<vmem>>, %arg7: memref<200x320xbf16, #tpu.memory_space<vmem>>) attributes {dimension_semantics = [#tpu.dimension_semantics<parallel>], iteration_bounds = array<i64: 2>, scalar_prefetch = 0 : i64, scratch_operands = 1 : i64, tpu.core_type = #tpu.core_type<tc>, window_params = [{transform_indices = @transform_0, window_bounds = array<i64: 1, 8, 420>}, {pipeline_mode = #tpu.pipeline_mode<synchronous>, transform_indices = @transform_1, window_bounds = array<i64: 32, 200>}, {pipeline_mode = #tpu.pipeline_mode<synchronous>, transform_indices = @transform_2, window_bounds = array<i64: 1, 320>}, {transform_indices = @transform_3, window_bounds = array<i64: 1, 32, 320>}, {transform_indices = @transform_4, window_bounds = array<i64: 1, 32, 1>}, {transform_indices = @transform_5, window_bounds = array<i64: 1, 32, 1>}]} {
    %c0 = arith.constant 0 : index
    %c0_0 = arith.constant 0 : index
    %c0_1 = arith.constant 0 : index
    %0 = vector.load %arg1[%c0, %c0_0, %c0_1] : memref<1x8x420xbf16, #tpu.memory_space<vmem>>, vector<1x8x320xbf16>
    %1 = vector.shape_cast %0 : vector<1x8x320xbf16> to vector<8x320xbf16>
    %c0_2 = arith.constant 0 : index
    %c0_3 = arith.constant 0 : index
    %2 = vector.load %arg7[%c0_2, %c0_3] : memref<200x320xbf16, #tpu.memory_space<vmem>>, vector<8x320xbf16>
    tpu.vector_store %arg7[%c0_2, %c0_3], %1 {strides = array<i32>} : memref<200x320xbf16, #tpu.memory_space<vmem>>, vector<8x320xbf16>,
    %c0_4 = arith.constant 0 : index
    %c0_5 = arith.constant 0 : index
    %c1 = arith.constant 1 : index
    %3 = vector.load %arg1[%c0_4, %c0_5, %c1] : memref<1x8x420xbf16, #tpu.memory_space<vmem>>, vector<1x8x320xbf16>
    %4 = vector.shape_cast %3 : vector<1x8x320xbf16> to vector<8x320xbf16>
    %c8 = arith.constant 8 : index
    %c0_6 = arith.constant 0 : index
    %5 = vector.load %arg7[%c8, %c0_6] : memref<200x320xbf16, #tpu.memory_space<vmem>>, vector<8x320xbf16>
    tpu.vector_store %arg7[%c8, %c0_6], %4 {strides = array<i32>} : memref<200x320xbf16, #tpu.memory_space<vmem>>, vector<8x320xbf16>,
    %c0_7 = arith.constant 0 : index
    %c0_8 = arith.constant 0 : index
    %c2 = arith.constant 2 : index
    %6 = vector.load %arg1[%c0_7, %c0_8, %c2] : memref<1x8x420xbf16, #tpu.memory_space<vmem>>, vector<1x8x320xbf16>
    %7 = vector.shape_cast %6 : vector<1x8x320xbf16> to vector<8x320xbf16>
    %c16 = arith.constant 16 : index
    %c0_9 = arith.constant 0 : index
    %8 = vector.load %arg7[%c16, %c0_9] : memref<200x320xbf16, #tpu.memory_space<vmem>>, vector<8x320xbf16>
    tpu.vector_store %arg7[%c16, %c0_9], %7 {strides = array<i32>} : memref<200x320xbf16, #tpu.memory_space<vmem>>, vector<8x320xbf16>,
    %c0_10 = arith.constant 0 : index
    %c0_11 = arith.constant 0 : index
    %c3 = arith.constant 3 : index
    %9 = vector.load %arg1[%c0_10, %c0_11, %c3] : memref<1x8x420xbf16, #tpu.memory_space<vmem>>, vector<1x8x320xbf16>
    %10 = vector.shape_cast %9 : vector<1x8x320xbf16> to vector<8x320xbf16>
    %c24 = arith.constant 24 : index
    %c0_12 = arith.constant 0 : index
    %11 = vector.load %arg7[%c24, %c0_12] : memref<200x320xbf16, #tpu.memory_space<vmem>>, vector<8x320xbf16>
    tpu.vector_store %arg7[%c24, %c0_12], %10 {strides = array<i32>} : memref<200x320xbf16, #tpu.memory_space<vmem>>, vector<8x320xbf16>,
    %c0_13 = arith.constant 0 : index
    %c0_14 = arith.constant 0 : index
    %c4 = arith.constant 4 : index
    %12 = vector.load %arg1[%c0_13, %c0_14, %c4] : memref<1x8x420xbf16, #tpu.memory_space<vmem>>, vector<1x8x320xbf16>
    %13 = vector.shape_cast %12 : vector<1x8x320xbf16> to vector<8x320xbf16>
    %c32 = arith.constant 32 : index
    %c0_15 = arith.constant 0 : index
    %14 = vector.load %arg7[%c32, %c0_15] : memref<200x320xbf16, #tpu.memory_space<vmem>>, vector<8x320xbf16>
    tpu.vector_store %arg7[%c32, %c0_15], %13 {strides = array<i32>} : memref<200x320xbf16, #tpu.memory_space<vmem>>, vector<8x320xbf16>,
    %c0_16 = arith.constant 0 : index
    %c0_17 = arith.constant 0 : index
    %c20 = arith.constant 20 : index
    %15 = vector.load %arg1[%c0_16, %c0_17, %c20] : memref<1x8x420xbf16, #tpu.memory_space<vmem>>, vector<1x8x320xbf16>
    %16 = vector.shape_cast %15 : vector<1x8x320xbf16> to vector<8x320xbf16>
    %c40 = arith.constant 40 : index
    %c0_18 = arith.constant 0 : index
    %17 = vector.load %arg7[%c40, %c0_18] : memref<200x320xbf16, #tpu.memory_space<vmem>>, vector<8x320xbf16>
    tpu.vector_store %arg7[%c40, %c0_18], %16 {strides = array<i32>} : memref<200x320xbf16, #tpu.memory_space<vmem>>, vector<8x320xbf16>,
    %c0_19 = arith.constant 0 : index
    %c0_20 = arith.constant 0 : index
    %c21 = arith.constant 21 : index
    %18 = vector.load %arg1[%c0_19, %c0_20, %c21] : memref<1x8x420xbf16, #tpu.memory_space<vmem>>, vector<1x8x320xbf16>
    %19 = vector.shape_cast %18 : vector<1x8x320xbf16> to vector<8x320xbf16>
    %c48 = arith.constant 48 : index
    %c0_21 = arith.constant 0 : index
    %20 = vector.load %arg7[%c48, %c0_21] : memref<200x320xbf16, #tpu.memory_space<vmem>>, vector<8x320xbf16>
    tpu.vector_store %arg7[%c48, %c0_21], %19 {strides = array<i32>} : memref<200x320xbf16, #tpu.memory_space<vmem>>, vector<8x320xbf16>,
    %c0_22 = arith.constant 0 : index
    %c0_23 = arith.constant 0 : index
    %c22 = arith.constant 22 : index
    %21 = vector.load %arg1[%c0_22, %c0_23, %c22] : memref<1x8x420xbf16, #tpu.memory_space<vmem>>, vector<1x8x320xbf16>
    %22 = vector.shape_cast %21 : vector<1x8x320xbf16> to vector<8x320xbf16>
    %c56 = arith.constant 56 : index
    %c0_24 = arith.constant 0 : index
    %23 = vector.load %arg7[%c56, %c0_24] : memref<200x320xbf16, #tpu.memory_space<vmem>>, vector<8x320xbf16>
    tpu.vector_store %arg7[%c56, %c0_24], %22 {strides = array<i32>} : memref<200x320xbf16, #tpu.memory_space<vmem>>, vector<8x320xbf16>,
    %c0_25 = arith.constant 0 : index
    %c0_26 = arith.constant 0 : index
    %c23 = arith.constant 23 : index
    %24 = vector.load %arg1[%c0_25, %c0_26, %c23] : memref<1x8x420xbf16, #tpu.memory_space<vmem>>, vector<1x8x320xbf16>
    %25 = vector.shape_cast %24 : vector<1x8x320xbf16> to vector<8x320xbf16>
    %c64 = arith.constant 64 : index
    %c0_27 = arith.constant 0 : index
    %26 = vector.load %arg7[%c64, %c0_27] : memref<200x320xbf16, #tpu.memory_space<vmem>>, vector<8x320xbf16>
    tpu.vector_store %arg7[%c64, %c0_27], %25 {strides = array<i32>} : memref<200x320xbf16, #tpu.memory_space<vmem>>, vector<8x320xbf16>,
    %c0_28 = arith.constant 0 : index
    %c0_29 = arith.constant 0 : index
    %c24_30 = arith.constant 24 : index
    %27 = vector.load %arg1[%c0_28, %c0_29, %c24_30] : memref<1x8x420xbf16, #tpu.memory_space<vmem>>, vector<1x8x320xbf16>
    %28 = vector.shape_cast %27 : vector<1x8x320xbf16> to vector<8x320xbf16>
    %c72 = arith.constant 72 : index
    %c0_31 = arith.constant 0 : index
    %29 = vector.load %arg7[%c72, %c0_31] : memref<200x320xbf16, #tpu.memory_space<vmem>>, vector<8x320xbf16>
    tpu.vector_store %arg7[%c72, %c0_31], %28 {strides = array<i32>} : memref<200x320xbf16, #tpu.memory_space<vmem>>, vector<8x320xbf16>,
    %c0_32 = arith.constant 0 : index
    %c0_33 = arith.constant 0 : index
    %c40_34 = arith.constant 40 : index
    %30 = vector.load %arg1[%c0_32, %c0_33, %c40_34] : memref<1x8x420xbf16, #tpu.memory_space<vmem>>, vector<1x8x320xbf16>
    %31 = vector.shape_cast %30 : vector<1x8x320xbf16> to vector<8x320xbf16>
    %c80 = arith.constant 80 : index
    %c0_35 = arith.constant 0 : index
    %32 = vector.load %arg7[%c80, %c0_35] : memref<200x320xbf16, #tpu.memory_space<vmem>>, vector<8x320xbf16>
    tpu.vector_store %arg7[%c80, %c0_35], %31 {strides = array<i32>} : memref<200x320xbf16, #tpu.memory_space<vmem>>, vector<8x320xbf16>,
    %c0_36 = arith.constant 0 : index
    %c0_37 = arith.constant 0 : index
    %c41 = arith.constant 41 : index
    %33 = vector.load %arg1[%c0_36, %c0_37, %c41] : memref<1x8x420xbf16, #tpu.memory_space<vmem>>, vector<1x8x320xbf16>
    %34 = vector.shape_cast %33 : vector<1x8x320xbf16> to vector<8x320xbf16>
    %c88 = arith.constant 88 : index
    %c0_38 = arith.constant 0 : index
    %35 = vector.load %arg7[%c88, %c0_38] : memref<200x320xbf16, #tpu.memory_space<vmem>>, vector<8x320xbf16>
    tpu.vector_store %arg7[%c88, %c0_38], %34 {strides = array<i32>} : memref<200x320xbf16, #tpu.memory_space<vmem>>, vector<8x320xbf16>,
    %c0_39 = arith.constant 0 : index
    %c0_40 = arith.constant 0 : index
    %c42 = arith.constant 42 : index
    %36 = vector.load %arg1[%c0_39, %c0_40, %c42] : memref<1x8x420xbf16, #tpu.memory_space<vmem>>, vector<1x8x320xbf16>
    %37 = vector.shape_cast %36 : vector<1x8x320xbf16> to vector<8x320xbf16>
    %c96 = arith.constant 96 : index
    %c0_41 = arith.constant 0 : index
    %38 = vector.load %arg7[%c96, %c0_41] : memref<200x320xbf16, #tpu.memory_space<vmem>>, vector<8x320xbf16>
    tpu.vector_store %arg7[%c96, %c0_41], %37 {strides = array<i32>} : memref<200x320xbf16, #tpu.memory_space<vmem>>, vector<8x320xbf16>,
    %c0_42 = arith.constant 0 : index
    %c0_43 = arith.constant 0 : index
    %c43 = arith.constant 43 : index
    %39 = vector.load %arg1[%c0_42, %c0_43, %c43] : memref<1x8x420xbf16, #tpu.memory_space<vmem>>, vector<1x8x320xbf16>
    %40 = vector.shape_cast %39 : vector<1x8x320xbf16> to vector<8x320xbf16>
    %c104 = arith.constant 104 : index
    %c0_44 = arith.constant 0 : index
    %41 = vector.load %arg7[%c104, %c0_44] : memref<200x320xbf16, #tpu.memory_space<vmem>>, vector<8x320xbf16>
    tpu.vector_store %arg7[%c104, %c0_44], %40 {strides = array<i32>} : memref<200x320xbf16, #tpu.memory_space<vmem>>, vector<8x320xbf16>,
    %c0_45 = arith.constant 0 : index
    %c0_46 = arith.constant 0 : index
    %c44 = arith.constant 44 : index
    %42 = vector.load %arg1[%c0_45, %c0_46, %c44] : memref<1x8x420xbf16, #tpu.memory_space<vmem>>, vector<1x8x320xbf16>
    %43 = vector.shape_cast %42 : vector<1x8x320xbf16> to vector<8x320xbf16>
    %c112 = arith.constant 112 : index
    %c0_47 = arith.constant 0 : index
    %44 = vector.load %arg7[%c112, %c0_47] : memref<200x320xbf16, #tpu.memory_space<vmem>>, vector<8x320xbf16>
    tpu.vector_store %arg7[%c112, %c0_47], %43 {strides = array<i32>} : memref<200x320xbf16, #tpu.memory_space<vmem>>, vector<8x320xbf16>,
    %c0_48 = arith.constant 0 : index
    %c0_49 = arith.constant 0 : index
    %c60 = arith.constant 60 : index
    %45 = vector.load %arg1[%c0_48, %c0_49, %c60] : memref<1x8x420xbf16, #tpu.memory_space<vmem>>, vector<1x8x320xbf16>
    %46 = vector.shape_cast %45 : vector<1x8x320xbf16> to vector<8x320xbf16>
    %c120 = arith.constant 120 : index
    %c0_50 = arith.constant 0 : index
    %47 = vector.load %arg7[%c120, %c0_50] : memref<200x320xbf16, #tpu.memory_space<vmem>>, vector<8x320xbf16>
    tpu.vector_store %arg7[%c120, %c0_50], %46 {strides = array<i32>} : memref<200x320xbf16, #tpu.memory_space<vmem>>, vector<8x320xbf16>,
    %c0_51 = arith.constant 0 : index
    %c0_52 = arith.constant 0 : index
    %c61 = arith.constant 61 : index
    %48 = vector.load %arg1[%c0_51, %c0_52, %c61] : memref<1x8x420xbf16, #tpu.memory_space<vmem>>, vector<1x8x320xbf16>
    %49 = vector.shape_cast %48 : vector<1x8x320xbf16> to vector<8x320xbf16>
    %c128 = arith.constant 128 : index
    %c0_53 = arith.constant 0 : index
    %50 = vector.load %arg7[%c128, %c0_53] : memref<200x320xbf16, #tpu.memory_space<vmem>>, vector<8x320xbf16>
    tpu.vector_store %arg7[%c128, %c0_53], %49 {strides = array<i32>} : memref<200x320xbf16, #tpu.memory_space<vmem>>, vector<8x320xbf16>,
    %c0_54 = arith.constant 0 : index
    %c0_55 = arith.constant 0 : index
    %c62 = arith.constant 62 : index
    %51 = vector.load %arg1[%c0_54, %c0_55, %c62] : memref<1x8x420xbf16, #tpu.memory_space<vmem>>, vector<1x8x320xbf16>
    %52 = vector.shape_cast %51 : vector<1x8x320xbf16> to vector<8x320xbf16>
    %c136 = arith.constant 136 : index
    %c0_56 = arith.constant 0 : index
    %53 = vector.load %arg7[%c136, %c0_56] : memref<200x320xbf16, #tpu.memory_space<vmem>>, vector<8x320xbf16>
    tpu.vector_store %arg7[%c136, %c0_56], %52 {strides = array<i32>} : memref<200x320xbf16, #tpu.memory_space<vmem>>, vector<8x320xbf16>,
    %c0_57 = arith.constant 0 : index
    %c0_58 = arith.constant 0 : index
    %c63 = arith.constant 63 : index
    %54 = vector.load %arg1[%c0_57, %c0_58, %c63] : memref<1x8x420xbf16, #tpu.memory_space<vmem>>, vector<1x8x320xbf16>
    %55 = vector.shape_cast %54 : vector<1x8x320xbf16> to vector<8x320xbf16>
    %c144 = arith.constant 144 : index
    %c0_59 = arith.constant 0 : index
    %56 = vector.load %arg7[%c144, %c0_59] : memref<200x320xbf16, #tpu.memory_space<vmem>>, vector<8x320xbf16>
    tpu.vector_store %arg7[%c144, %c0_59], %55 {strides = array<i32>} : memref<200x320xbf16, #tpu.memory_space<vmem>>, vector<8x320xbf16>,
    %c0_60 = arith.constant 0 : index
    %c0_61 = arith.constant 0 : index
    %c64_62 = arith.constant 64 : index
    %57 = vector.load %arg1[%c0_60, %c0_61, %c64_62] : memref<1x8x420xbf16, #tpu.memory_space<vmem>>, vector<1x8x320xbf16>
    %58 = vector.shape_cast %57 : vector<1x8x320xbf16> to vector<8x320xbf16>
    %c152 = arith.constant 152 : index
    %c0_63 = arith.constant 0 : index
    %59 = vector.load %arg7[%c152, %c0_63] : memref<200x320xbf16, #tpu.memory_space<vmem>>, vector<8x320xbf16>
    tpu.vector_store %arg7[%c152, %c0_63], %58 {strides = array<i32>} : memref<200x320xbf16, #tpu.memory_space<vmem>>, vector<8x320xbf16>,
    %c0_64 = arith.constant 0 : index
    %c0_65 = arith.constant 0 : index
    %c80_66 = arith.constant 80 : index
    %60 = vector.load %arg1[%c0_64, %c0_65, %c80_66] : memref<1x8x420xbf16, #tpu.memory_space<vmem>>, vector<1x8x320xbf16>
    %61 = vector.shape_cast %60 : vector<1x8x320xbf16> to vector<8x320xbf16>
    %c160 = arith.constant 160 : index
    %c0_67 = arith.constant 0 : index
    %62 = vector.load %arg7[%c160, %c0_67] : memref<200x320xbf16, #tpu.memory_space<vmem>>, vector<8x320xbf16>
    tpu.vector_store %arg7[%c160, %c0_67], %61 {strides = array<i32>} : memref<200x320xbf16, #tpu.memory_space<vmem>>, vector<8x320xbf16>,
    %c0_68 = arith.constant 0 : index
    %c0_69 = arith.constant 0 : index
    %c81 = arith.constant 81 : index
    %63 = vector.load %arg1[%c0_68, %c0_69, %c81] : memref<1x8x420xbf16, #tpu.memory_space<vmem>>, vector<1x8x320xbf16>
    %64 = vector.shape_cast %63 : vector<1x8x320xbf16> to vector<8x320xbf16>
    %c168 = arith.constant 168 : index
    %c0_70 = arith.constant 0 : index
    %65 = vector.load %arg7[%c168, %c0_70] : memref<200x320xbf16, #tpu.memory_space<vmem>>, vector<8x320xbf16>
    tpu.vector_store %arg7[%c168, %c0_70], %64 {strides = array<i32>} : memref<200x320xbf16, #tpu.memory_space<vmem>>, vector<8x320xbf16>,
    %c0_71 = arith.constant 0 : index
    %c0_72 = arith.constant 0 : index
    %c82 = arith.constant 82 : index
    %66 = vector.load %arg1[%c0_71, %c0_72, %c82] : memref<1x8x420xbf16, #tpu.memory_space<vmem>>, vector<1x8x320xbf16>
    %67 = vector.shape_cast %66 : vector<1x8x320xbf16> to vector<8x320xbf16>
    %c176 = arith.constant 176 : index
    %c0_73 = arith.constant 0 : index
    %68 = vector.load %arg7[%c176, %c0_73] : memref<200x320xbf16, #tpu.memory_space<vmem>>, vector<8x320xbf16>
    tpu.vector_store %arg7[%c176, %c0_73], %67 {strides = array<i32>} : memref<200x320xbf16, #tpu.memory_space<vmem>>, vector<8x320xbf16>,
    %c0_74 = arith.constant 0 : index
    %c0_75 = arith.constant 0 : index
    %c83 = arith.constant 83 : index
    %69 = vector.load %arg1[%c0_74, %c0_75, %c83] : memref<1x8x420xbf16, #tpu.memory_space<vmem>>, vector<1x8x320xbf16>
    %70 = vector.shape_cast %69 : vector<1x8x320xbf16> to vector<8x320xbf16>
    %c184 = arith.constant 184 : index
    %c0_76 = arith.constant 0 : index
    %71 = vector.load %arg7[%c184, %c0_76] : memref<200x320xbf16, #tpu.memory_space<vmem>>, vector<8x320xbf16>
    tpu.vector_store %arg7[%c184, %c0_76], %70 {strides = array<i32>} : memref<200x320xbf16, #tpu.memory_space<vmem>>, vector<8x320xbf16>,
    %c0_77 = arith.constant 0 : index
    %c0_78 = arith.constant 0 : index
    %c84 = arith.constant 84 : index
    %72 = vector.load %arg1[%c0_77, %c0_78, %c84] : memref<1x8x420xbf16, #tpu.memory_space<vmem>>, vector<1x8x320xbf16>
    %73 = vector.shape_cast %72 : vector<1x8x320xbf16> to vector<8x320xbf16>
    %c192 = arith.constant 192 : index
    %c0_79 = arith.constant 0 : index
    %74 = vector.load %arg7[%c192, %c0_79] : memref<200x320xbf16, #tpu.memory_space<vmem>>, vector<8x320xbf16>
    tpu.vector_store %arg7[%c192, %c0_79], %73 {strides = array<i32>} : memref<200x320xbf16, #tpu.memory_space<vmem>>, vector<8x320xbf16>,
    %c0_80 = arith.constant 0 : index
    %c0_81 = arith.constant 0 : index
    %75 = vector.load %arg2[%c0_80, %c0_81] : memref<32x200xbf16, #tpu.memory_space<vmem>>, vector<32x200xbf16>
    %c0_82 = arith.constant 0 : index
    %c0_83 = arith.constant 0 : index
    %76 = vector.load %arg7[%c0_82, %c0_83] : memref<200x320xbf16, #tpu.memory_space<vmem>>, vector<200x320xbf16>
    %cst = arith.constant dense<0.000000e+00> : vector<32x320xf32>
    %77 = tpu.matmul %75, %76, %cst {dimension_numbers = #tpu.dot_dimension_numbers<[1], [0], [0], [1], [0, 0, 1, 1], [], []>} : vector<32x200xbf16>, vector<200x320xbf16>, vector<32x320xf32> -> vector<32x320xf32>
    %78 = arith.truncf %77 : vector<32x320xf32> to vector<32x320xbf16>
    %c0_84 = arith.constant 0 : index
    %c0_85 = arith.constant 0 : index
    %c0_86 = arith.constant 0 : index
    %79 = vector.load %arg4[%c0_84, %c0_85, %c0_86] : memref<1x32x320xbf16, #tpu.memory_space<vmem>>, vector<1x32x320xbf16>
    %80 = vector.shape_cast %79 : vector<1x32x320xbf16> to vector<32x320xbf16>
    %81 = vector.shape_cast %78 : vector<32x320xbf16> to vector<1x32x320xbf16>
    tpu.vector_store %arg4[%c0_84, %c0_85, %c0_86], %81 {strides = array<i32>} : memref<1x32x320xbf16, #tpu.memory_space<vmem>>, vector<1x32x320xbf16>,
    %c0_87 = arith.constant 0 : index
    %c0_88 = arith.constant 0 : index
    %82 = vector.load %arg3[%c0_87, %c0_88] : memref<1x320xf32, #tpu.memory_space<vmem>>, vector<1x320xf32>
    %83 = vector.broadcast %82 : vector<1x320xf32> to vector<32x320xf32>
    %84 = arith.mulf %77, %83 : vector<32x320xf32>
    %cst_89 = arith.constant dense<0.000000e+00> : vector<32xf32>
    %85 = vector.multi_reduction <add>, %84, %cst_89 [1] : vector<32x320xf32> to vector<32xf32>
    %86 = vector.shape_cast %85 : vector<32xf32> to vector<32x1xf32>
    %c0_90 = arith.constant 0 : index
    %c0_91 = arith.constant 0 : index
    %c0_92 = arith.constant 0 : index
    %87 = vector.load %arg5[%c0_90, %c0_91, %c0_92] : memref<1x32x1xf32, #tpu.memory_space<vmem>>, vector<1x32x1xf32>
    %88 = vector.shape_cast %87 : vector<1x32x1xf32> to vector<32x1xf32>
    %89 = vector.shape_cast %86 : vector<32x1xf32> to vector<1x32x1xf32>
    tpu.vector_store %arg5[%c0_90, %c0_91, %c0_92], %89 {strides = array<i32>} : memref<1x32x1xf32, #tpu.memory_space<vmem>>, vector<1x32x1xf32>,
    %90 = arith.mulf %84, %84 : vector<32x320xf32>
    %cst_93 = arith.constant dense<0.000000e+00> : vector<32xf32>
    %91 = vector.multi_reduction <add>, %90, %cst_93 [1] : vector<32x320xf32> to vector<32xf32>
    %92 = vector.shape_cast %91 : vector<32xf32> to vector<32x1xf32>
    %c0_94 = arith.constant 0 : index
    %c0_95 = arith.constant 0 : index
    %c0_96 = arith.constant 0 : index
    %93 = vector.load %arg6[%c0_94, %c0_95, %c0_96] : memref<1x32x1xf32, #tpu.memory_space<vmem>>, vector<1x32x1xf32>
    %94 = vector.shape_cast %93 : vector<1x32x1xf32> to vector<32x1xf32>
    %95 = vector.shape_cast %92 : vector<32x1xf32> to vector<1x32x1xf32>
    tpu.vector_store %arg6[%c0_94, %c0_95, %c0_96], %95 {strides = array<i32>} : memref<1x32x1xf32, #tpu.memory_space<vmem>>, vector<1x32x1xf32>,
    return
  }
  func.func @transform_0(%arg0: i32) -> (i32, i32, i32) {
    %c0_i32 = arith.constant 0 : i32
    %c0_i32_0 = arith.constant 0 : i32
    %c0_i32_1 = arith.constant 0 : i32
    return %arg0, %c0_i32, %c0_i32_0 : i32, i32, i32
  }
  func.func @transform_1(%arg0: i32) -> (i32, i32) {
    %c0_i32 = arith.constant 0 : i32
    %c0_i32_0 = arith.constant 0 : i32
    %c0_i32_1 = arith.constant 0 : i32
    return %c0_i32, %c0_i32_0 : i32, i32
  }
  func.func @transform_2(%arg0: i32) -> (i32, i32) {
    %c0_i32 = arith.constant 0 : i32
    %c0_i32_0 = arith.constant 0 : i32
    %c0_i32_1 = arith.constant 0 : i32
    return %c0_i32, %c0_i32_0 : i32, i32
  }
  func.func @transform_3(%arg0: i32) -> (i32, i32, i32) {
    %c0_i32 = arith.constant 0 : i32
    %c0_i32_0 = arith.constant 0 : i32
    %c0_i32_1 = arith.constant 0 : i32
    return %arg0, %c0_i32, %c0_i32_0 : i32, i32, i32
  }
  func.func @transform_4(%arg0: i32) -> (i32, i32, i32) {
    %c0_i32 = arith.constant 0 : i32
    %c0_i32_0 = arith.constant 0 : i32
    %c0_i32_1 = arith.constant 0 : i32
    return %arg0, %c0_i32, %c0_i32_0 : i32, i32, i32
  }
  func.func @transform_5(%arg0: i32) -> (i32, i32, i32) {
    %c0_i32 = arith.constant 0 : i32
    %c0_i32_0 = arith.constant 0 : i32
    %c0_i32_1 = arith.constant 0 : i32
    return %arg0, %c0_i32, %c0_i32_0 : i32, i32, i32
  }
}

module attributes {stable_mosaic.version = 11 : i64} {
  func.func @_bn_relu_maxpool_kernel(%arg0: i32, %arg1: memref<1x32x320xbf16, #tpu.memory_space<vmem>>, %arg2: memref<32x1xf32, #tpu.memory_space<vmem>>, %arg3: memref<32x1xf32, #tpu.memory_space<vmem>>, %arg4: memref<20x18xf32, #tpu.memory_space<vmem>>, %arg5: memref<1x32x36xf32, #tpu.memory_space<vmem>>) attributes {dimension_semantics = [#tpu.dimension_semantics<parallel>], iteration_bounds = array<i64: 2>, scalar_prefetch = 0 : i64, scratch_operands = 0 : i64, tpu.core_type = #tpu.core_type<tc>, window_params = [{transform_indices = @transform_0, window_bounds = array<i64: 1, 32, 320>}, {pipeline_mode = #tpu.pipeline_mode<synchronous>, transform_indices = @transform_1, window_bounds = array<i64: 32, 1>}, {pipeline_mode = #tpu.pipeline_mode<synchronous>, transform_indices = @transform_2, window_bounds = array<i64: 32, 1>}, {pipeline_mode = #tpu.pipeline_mode<synchronous>, transform_indices = @transform_3, window_bounds = array<i64: 20, 18>}, {transform_indices = @transform_4, window_bounds = array<i64: 1, 32, 36>}]} {
    %c0 = arith.constant 0 : index
    %c0_0 = arith.constant 0 : index
    %0 = vector.load %arg2[%c0, %c0_0] : memref<32x1xf32, #tpu.memory_space<vmem>>, vector<32x1xf32>
    %c0_1 = arith.constant 0 : index
    %c0_2 = arith.constant 0 : index
    %1 = vector.load %arg3[%c0_1, %c0_2] : memref<32x1xf32, #tpu.memory_space<vmem>>, vector<32x1xf32>
    %c0_3 = arith.constant 0 : index
    %c0_4 = arith.constant 0 : index
    %2 = vector.load %arg4[%c0_3, %c0_4] : memref<20x18xf32, #tpu.memory_space<vmem>>, vector<20x18xf32>
    %c0_5 = arith.constant 0 : index
    %c0_6 = arith.constant 0 : index
    %c0_7 = arith.constant 0 : index
    %3 = vector.load %arg1[%c0_5, %c0_6, %c0_7] : memref<1x32x320xbf16, #tpu.memory_space<vmem>>, vector<1x32x20xbf16>
    %4 = vector.shape_cast %3 : vector<1x32x20xbf16> to vector<32x20xbf16>
    %5 = arith.extf %4 : vector<32x20xbf16> to vector<32x20xf32>
    %6 = vector.broadcast %0 : vector<32x1xf32> to vector<32x20xf32>
    %7 = arith.mulf %5, %6 : vector<32x20xf32>
    %8 = vector.broadcast %1 : vector<32x1xf32> to vector<32x20xf32>
    %9 = arith.addf %7, %8 : vector<32x20xf32>
    %cst = arith.constant 0.000000e+00 : f32
    %10 = vector.broadcast %cst : f32 to vector<32x20xf32>
    %11 = arith.maximumf %9, %10 : vector<32x20xf32>
    %c0_8 = arith.constant 0 : index
    %c0_9 = arith.constant 0 : index
    %c20 = arith.constant 20 : index
    %12 = vector.load %arg1[%c0_8, %c0_9, %c20] : memref<1x32x320xbf16, #tpu.memory_space<vmem>>, vector<1x32x20xbf16>
    %13 = vector.shape_cast %12 : vector<1x32x20xbf16> to vector<32x20xbf16>
    %14 = arith.extf %13 : vector<32x20xbf16> to vector<32x20xf32>
    %15 = vector.broadcast %0 : vector<32x1xf32> to vector<32x20xf32>
    %16 = arith.mulf %14, %15 : vector<32x20xf32>
    %17 = vector.broadcast %1 : vector<32x1xf32> to vector<32x20xf32>
    %18 = arith.addf %16, %17 : vector<32x20xf32>
    %cst_10 = arith.constant 0.000000e+00 : f32
    %19 = vector.broadcast %cst_10 : f32 to vector<32x20xf32>
    %20 = arith.maximumf %18, %19 : vector<32x20xf32>
    %21 = arith.maximumf %11, %20 : vector<32x20xf32>
    %cst_11 = arith.constant dense<0.000000e+00> : vector<32x18xf32>
    %22 = tpu.matmul %21, %2, %cst_11 {dimension_numbers = #tpu.dot_dimension_numbers<[1], [0], [0], [1], [0, 0, 1, 1], [], []>} : vector<32x20xf32>, vector<20x18xf32>, vector<32x18xf32> -> vector<32x18xf32>
    %23 = vector.extract_strided_slice %22 {offsets = [0, 0], sizes = [32, 6], strides = [1, 1]} : vector<32x18xf32> to vector<32x6xf32>
    %24 = vector.extract_strided_slice %22 {offsets = [0, 6], sizes = [32, 6], strides = [1, 1]} : vector<32x18xf32> to vector<32x6xf32>
    %25 = arith.maximumf %23, %24 : vector<32x6xf32>
    %26 = vector.extract_strided_slice %22 {offsets = [0, 12], sizes = [32, 6], strides = [1, 1]} : vector<32x18xf32> to vector<32x6xf32>
    %27 = arith.maximumf %25, %26 : vector<32x6xf32>
    %c0_12 = arith.constant 0 : index
    %c0_13 = arith.constant 0 : index
    %c0_14 = arith.constant 0 : index
    %28 = vector.load %arg5[%c0_12, %c0_13, %c0_14] : memref<1x32x36xf32, #tpu.memory_space<vmem>>, vector<1x32x6xf32>
    %29 = vector.shape_cast %28 : vector<1x32x6xf32> to vector<32x6xf32>
    %30 = vector.shape_cast %27 : vector<32x6xf32> to vector<1x32x6xf32>
    tpu.vector_store %arg5[%c0_12, %c0_13, %c0_14], %30 {strides = array<i32>} : memref<1x32x36xf32, #tpu.memory_space<vmem>>, vector<1x32x6xf32>,
    %c0_15 = arith.constant 0 : index
    %c0_16 = arith.constant 0 : index
    %c40 = arith.constant 40 : index
    %31 = vector.load %arg1[%c0_15, %c0_16, %c40] : memref<1x32x320xbf16, #tpu.memory_space<vmem>>, vector<1x32x20xbf16>
    %32 = vector.shape_cast %31 : vector<1x32x20xbf16> to vector<32x20xbf16>
    %33 = arith.extf %32 : vector<32x20xbf16> to vector<32x20xf32>
    %34 = vector.broadcast %0 : vector<32x1xf32> to vector<32x20xf32>
    %35 = arith.mulf %33, %34 : vector<32x20xf32>
    %36 = vector.broadcast %1 : vector<32x1xf32> to vector<32x20xf32>
    %37 = arith.addf %35, %36 : vector<32x20xf32>
    %cst_17 = arith.constant 0.000000e+00 : f32
    %38 = vector.broadcast %cst_17 : f32 to vector<32x20xf32>
    %39 = arith.maximumf %37, %38 : vector<32x20xf32>
    %c0_18 = arith.constant 0 : index
    %c0_19 = arith.constant 0 : index
    %c60 = arith.constant 60 : index
    %40 = vector.load %arg1[%c0_18, %c0_19, %c60] : memref<1x32x320xbf16, #tpu.memory_space<vmem>>, vector<1x32x20xbf16>
    %41 = vector.shape_cast %40 : vector<1x32x20xbf16> to vector<32x20xbf16>
    %42 = arith.extf %41 : vector<32x20xbf16> to vector<32x20xf32>
    %43 = vector.broadcast %0 : vector<32x1xf32> to vector<32x20xf32>
    %44 = arith.mulf %42, %43 : vector<32x20xf32>
    %45 = vector.broadcast %1 : vector<32x1xf32> to vector<32x20xf32>
    %46 = arith.addf %44, %45 : vector<32x20xf32>
    %cst_20 = arith.constant 0.000000e+00 : f32
    %47 = vector.broadcast %cst_20 : f32 to vector<32x20xf32>
    %48 = arith.maximumf %46, %47 : vector<32x20xf32>
    %49 = arith.maximumf %39, %48 : vector<32x20xf32>
    %c0_21 = arith.constant 0 : index
    %c0_22 = arith.constant 0 : index
    %c80 = arith.constant 80 : index
    %50 = vector.load %arg1[%c0_21, %c0_22, %c80] : memref<1x32x320xbf16, #tpu.memory_space<vmem>>, vector<1x32x20xbf16>
    %51 = vector.shape_cast %50 : vector<1x32x20xbf16> to vector<32x20xbf16>
    %52 = arith.extf %51 : vector<32x20xbf16> to vector<32x20xf32>
    %53 = vector.broadcast %0 : vector<32x1xf32> to vector<32x20xf32>
    %54 = arith.mulf %52, %53 : vector<32x20xf32>
    %55 = vector.broadcast %1 : vector<32x1xf32> to vector<32x20xf32>
    %56 = arith.addf %54, %55 : vector<32x20xf32>
    %cst_23 = arith.constant 0.000000e+00 : f32
    %57 = vector.broadcast %cst_23 : f32 to vector<32x20xf32>
    %58 = arith.maximumf %56, %57 : vector<32x20xf32>
    %59 = arith.maximumf %49, %58 : vector<32x20xf32>
    %cst_24 = arith.constant dense<0.000000e+00> : vector<32x18xf32>
    %60 = tpu.matmul %59, %2, %cst_24 {dimension_numbers = #tpu.dot_dimension_numbers<[1], [0], [0], [1], [0, 0, 1, 1], [], []>} : vector<32x20xf32>, vector<20x18xf32>, vector<32x18xf32> -> vector<32x18xf32>
    %61 = vector.extract_strided_slice %60 {offsets = [0, 0], sizes = [32, 6], strides = [1, 1]} : vector<32x18xf32> to vector<32x6xf32>
    %62 = vector.extract_strided_slice %60 {offsets = [0, 6], sizes = [32, 6], strides = [1, 1]} : vector<32x18xf32> to vector<32x6xf32>
    %63 = arith.maximumf %61, %62 : vector<32x6xf32>
    %64 = vector.extract_strided_slice %60 {offsets = [0, 12], sizes = [32, 6], strides = [1, 1]} : vector<32x18xf32> to vector<32x6xf32>
    %65 = arith.maximumf %63, %64 : vector<32x6xf32>
    %c0_25 = arith.constant 0 : index
    %c0_26 = arith.constant 0 : index
    %c6 = arith.constant 6 : index
    %66 = vector.load %arg5[%c0_25, %c0_26, %c6] : memref<1x32x36xf32, #tpu.memory_space<vmem>>, vector<1x32x6xf32>
    %67 = vector.shape_cast %66 : vector<1x32x6xf32> to vector<32x6xf32>
    %68 = vector.shape_cast %65 : vector<32x6xf32> to vector<1x32x6xf32>
    tpu.vector_store %arg5[%c0_25, %c0_26, %c6], %68 {strides = array<i32>} : memref<1x32x36xf32, #tpu.memory_space<vmem>>, vector<1x32x6xf32>,
    %c0_27 = arith.constant 0 : index
    %c0_28 = arith.constant 0 : index
    %c100 = arith.constant 100 : index
    %69 = vector.load %arg1[%c0_27, %c0_28, %c100] : memref<1x32x320xbf16, #tpu.memory_space<vmem>>, vector<1x32x20xbf16>
    %70 = vector.shape_cast %69 : vector<1x32x20xbf16> to vector<32x20xbf16>
    %71 = arith.extf %70 : vector<32x20xbf16> to vector<32x20xf32>
    %72 = vector.broadcast %0 : vector<32x1xf32> to vector<32x20xf32>
    %73 = arith.mulf %71, %72 : vector<32x20xf32>
    %74 = vector.broadcast %1 : vector<32x1xf32> to vector<32x20xf32>
    %75 = arith.addf %73, %74 : vector<32x20xf32>
    %cst_29 = arith.constant 0.000000e+00 : f32
    %76 = vector.broadcast %cst_29 : f32 to vector<32x20xf32>
    %77 = arith.maximumf %75, %76 : vector<32x20xf32>
    %c0_30 = arith.constant 0 : index
    %c0_31 = arith.constant 0 : index
    %c120 = arith.constant 120 : index
    %78 = vector.load %arg1[%c0_30, %c0_31, %c120] : memref<1x32x320xbf16, #tpu.memory_space<vmem>>, vector<1x32x20xbf16>
    %79 = vector.shape_cast %78 : vector<1x32x20xbf16> to vector<32x20xbf16>
    %80 = arith.extf %79 : vector<32x20xbf16> to vector<32x20xf32>
    %81 = vector.broadcast %0 : vector<32x1xf32> to vector<32x20xf32>
    %82 = arith.mulf %80, %81 : vector<32x20xf32>
    %83 = vector.broadcast %1 : vector<32x1xf32> to vector<32x20xf32>
    %84 = arith.addf %82, %83 : vector<32x20xf32>
    %cst_32 = arith.constant 0.000000e+00 : f32
    %85 = vector.broadcast %cst_32 : f32 to vector<32x20xf32>
    %86 = arith.maximumf %84, %85 : vector<32x20xf32>
    %87 = arith.maximumf %77, %86 : vector<32x20xf32>
    %c0_33 = arith.constant 0 : index
    %c0_34 = arith.constant 0 : index
    %c140 = arith.constant 140 : index
    %88 = vector.load %arg1[%c0_33, %c0_34, %c140] : memref<1x32x320xbf16, #tpu.memory_space<vmem>>, vector<1x32x20xbf16>
    %89 = vector.shape_cast %88 : vector<1x32x20xbf16> to vector<32x20xbf16>
    %90 = arith.extf %89 : vector<32x20xbf16> to vector<32x20xf32>
    %91 = vector.broadcast %0 : vector<32x1xf32> to vector<32x20xf32>
    %92 = arith.mulf %90, %91 : vector<32x20xf32>
    %93 = vector.broadcast %1 : vector<32x1xf32> to vector<32x20xf32>
    %94 = arith.addf %92, %93 : vector<32x20xf32>
    %cst_35 = arith.constant 0.000000e+00 : f32
    %95 = vector.broadcast %cst_35 : f32 to vector<32x20xf32>
    %96 = arith.maximumf %94, %95 : vector<32x20xf32>
    %97 = arith.maximumf %87, %96 : vector<32x20xf32>
    %cst_36 = arith.constant dense<0.000000e+00> : vector<32x18xf32>
    %98 = tpu.matmul %97, %2, %cst_36 {dimension_numbers = #tpu.dot_dimension_numbers<[1], [0], [0], [1], [0, 0, 1, 1], [], []>} : vector<32x20xf32>, vector<20x18xf32>, vector<32x18xf32> -> vector<32x18xf32>
    %99 = vector.extract_strided_slice %98 {offsets = [0, 0], sizes = [32, 6], strides = [1, 1]} : vector<32x18xf32> to vector<32x6xf32>
    %100 = vector.extract_strided_slice %98 {offsets = [0, 6], sizes = [32, 6], strides = [1, 1]} : vector<32x18xf32> to vector<32x6xf32>
    %101 = arith.maximumf %99, %100 : vector<32x6xf32>
    %102 = vector.extract_strided_slice %98 {offsets = [0, 12], sizes = [32, 6], strides = [1, 1]} : vector<32x18xf32> to vector<32x6xf32>
    %103 = arith.maximumf %101, %102 : vector<32x6xf32>
    %c0_37 = arith.constant 0 : index
    %c0_38 = arith.constant 0 : index
    %c12 = arith.constant 12 : index
    %104 = vector.load %arg5[%c0_37, %c0_38, %c12] : memref<1x32x36xf32, #tpu.memory_space<vmem>>, vector<1x32x6xf32>
    %105 = vector.shape_cast %104 : vector<1x32x6xf32> to vector<32x6xf32>
    %106 = vector.shape_cast %103 : vector<32x6xf32> to vector<1x32x6xf32>
    tpu.vector_store %arg5[%c0_37, %c0_38, %c12], %106 {strides = array<i32>} : memref<1x32x36xf32, #tpu.memory_space<vmem>>, vector<1x32x6xf32>,
    %c0_39 = arith.constant 0 : index
    %c0_40 = arith.constant 0 : index
    %c160 = arith.constant 160 : index
    %107 = vector.load %arg1[%c0_39, %c0_40, %c160] : memref<1x32x320xbf16, #tpu.memory_space<vmem>>, vector<1x32x20xbf16>
    %108 = vector.shape_cast %107 : vector<1x32x20xbf16> to vector<32x20xbf16>
    %109 = arith.extf %108 : vector<32x20xbf16> to vector<32x20xf32>
    %110 = vector.broadcast %0 : vector<32x1xf32> to vector<32x20xf32>
    %111 = arith.mulf %109, %110 : vector<32x20xf32>
    %112 = vector.broadcast %1 : vector<32x1xf32> to vector<32x20xf32>
    %113 = arith.addf %111, %112 : vector<32x20xf32>
    %cst_41 = arith.constant 0.000000e+00 : f32
    %114 = vector.broadcast %cst_41 : f32 to vector<32x20xf32>
    %115 = arith.maximumf %113, %114 : vector<32x20xf32>
    %c0_42 = arith.constant 0 : index
    %c0_43 = arith.constant 0 : index
    %c180 = arith.constant 180 : index
    %116 = vector.load %arg1[%c0_42, %c0_43, %c180] : memref<1x32x320xbf16, #tpu.memory_space<vmem>>, vector<1x32x20xbf16>
    %117 = vector.shape_cast %116 : vector<1x32x20xbf16> to vector<32x20xbf16>
    %118 = arith.extf %117 : vector<32x20xbf16> to vector<32x20xf32>
    %119 = vector.broadcast %0 : vector<32x1xf32> to vector<32x20xf32>
    %120 = arith.mulf %118, %119 : vector<32x20xf32>
    %121 = vector.broadcast %1 : vector<32x1xf32> to vector<32x20xf32>
    %122 = arith.addf %120, %121 : vector<32x20xf32>
    %cst_44 = arith.constant 0.000000e+00 : f32
    %123 = vector.broadcast %cst_44 : f32 to vector<32x20xf32>
    %124 = arith.maximumf %122, %123 : vector<32x20xf32>
    %125 = arith.maximumf %115, %124 : vector<32x20xf32>
    %c0_45 = arith.constant 0 : index
    %c0_46 = arith.constant 0 : index
    %c200 = arith.constant 200 : index
    %126 = vector.load %arg1[%c0_45, %c0_46, %c200] : memref<1x32x320xbf16, #tpu.memory_space<vmem>>, vector<1x32x20xbf16>
    %127 = vector.shape_cast %126 : vector<1x32x20xbf16> to vector<32x20xbf16>
    %128 = arith.extf %127 : vector<32x20xbf16> to vector<32x20xf32>
    %129 = vector.broadcast %0 : vector<32x1xf32> to vector<32x20xf32>
    %130 = arith.mulf %128, %129 : vector<32x20xf32>
    %131 = vector.broadcast %1 : vector<32x1xf32> to vector<32x20xf32>
    %132 = arith.addf %130, %131 : vector<32x20xf32>
    %cst_47 = arith.constant 0.000000e+00 : f32
    %133 = vector.broadcast %cst_47 : f32 to vector<32x20xf32>
    %134 = arith.maximumf %132, %133 : vector<32x20xf32>
    %135 = arith.maximumf %125, %134 : vector<32x20xf32>
    %cst_48 = arith.constant dense<0.000000e+00> : vector<32x18xf32>
    %136 = tpu.matmul %135, %2, %cst_48 {dimension_numbers = #tpu.dot_dimension_numbers<[1], [0], [0], [1], [0, 0, 1, 1], [], []>} : vector<32x20xf32>, vector<20x18xf32>, vector<32x18xf32> -> vector<32x18xf32>
    %137 = vector.extract_strided_slice %136 {offsets = [0, 0], sizes = [32, 6], strides = [1, 1]} : vector<32x18xf32> to vector<32x6xf32>
    %138 = vector.extract_strided_slice %136 {offsets = [0, 6], sizes = [32, 6], strides = [1, 1]} : vector<32x18xf32> to vector<32x6xf32>
    %139 = arith.maximumf %137, %138 : vector<32x6xf32>
    %140 = vector.extract_strided_slice %136 {offsets = [0, 12], sizes = [32, 6], strides = [1, 1]} : vector<32x18xf32> to vector<32x6xf32>
    %141 = arith.maximumf %139, %140 : vector<32x6xf32>
    %c0_49 = arith.constant 0 : index
    %c0_50 = arith.constant 0 : index
    %c18 = arith.constant 18 : index
    %142 = vector.load %arg5[%c0_49, %c0_50, %c18] : memref<1x32x36xf32, #tpu.memory_space<vmem>>, vector<1x32x6xf32>
    %143 = vector.shape_cast %142 : vector<1x32x6xf32> to vector<32x6xf32>
    %144 = vector.shape_cast %141 : vector<32x6xf32> to vector<1x32x6xf32>
    tpu.vector_store %arg5[%c0_49, %c0_50, %c18], %144 {strides = array<i32>} : memref<1x32x36xf32, #tpu.memory_space<vmem>>, vector<1x32x6xf32>,
    %c0_51 = arith.constant 0 : index
    %c0_52 = arith.constant 0 : index
    %c220 = arith.constant 220 : index
    %145 = vector.load %arg1[%c0_51, %c0_52, %c220] : memref<1x32x320xbf16, #tpu.memory_space<vmem>>, vector<1x32x20xbf16>
    %146 = vector.shape_cast %145 : vector<1x32x20xbf16> to vector<32x20xbf16>
    %147 = arith.extf %146 : vector<32x20xbf16> to vector<32x20xf32>
    %148 = vector.broadcast %0 : vector<32x1xf32> to vector<32x20xf32>
    %149 = arith.mulf %147, %148 : vector<32x20xf32>
    %150 = vector.broadcast %1 : vector<32x1xf32> to vector<32x20xf32>
    %151 = arith.addf %149, %150 : vector<32x20xf32>
    %cst_53 = arith.constant 0.000000e+00 : f32
    %152 = vector.broadcast %cst_53 : f32 to vector<32x20xf32>
    %153 = arith.maximumf %151, %152 : vector<32x20xf32>
    %c0_54 = arith.constant 0 : index
    %c0_55 = arith.constant 0 : index
    %c240 = arith.constant 240 : index
    %154 = vector.load %arg1[%c0_54, %c0_55, %c240] : memref<1x32x320xbf16, #tpu.memory_space<vmem>>, vector<1x32x20xbf16>
    %155 = vector.shape_cast %154 : vector<1x32x20xbf16> to vector<32x20xbf16>
    %156 = arith.extf %155 : vector<32x20xbf16> to vector<32x20xf32>
    %157 = vector.broadcast %0 : vector<32x1xf32> to vector<32x20xf32>
    %158 = arith.mulf %156, %157 : vector<32x20xf32>
    %159 = vector.broadcast %1 : vector<32x1xf32> to vector<32x20xf32>
    %160 = arith.addf %158, %159 : vector<32x20xf32>
    %cst_56 = arith.constant 0.000000e+00 : f32
    %161 = vector.broadcast %cst_56 : f32 to vector<32x20xf32>
    %162 = arith.maximumf %160, %161 : vector<32x20xf32>
    %163 = arith.maximumf %153, %162 : vector<32x20xf32>
    %c0_57 = arith.constant 0 : index
    %c0_58 = arith.constant 0 : index
    %c260 = arith.constant 260 : index
    %164 = vector.load %arg1[%c0_57, %c0_58, %c260] : memref<1x32x320xbf16, #tpu.memory_space<vmem>>, vector<1x32x20xbf16>
    %165 = vector.shape_cast %164 : vector<1x32x20xbf16> to vector<32x20xbf16>
    %166 = arith.extf %165 : vector<32x20xbf16> to vector<32x20xf32>
    %167 = vector.broadcast %0 : vector<32x1xf32> to vector<32x20xf32>
    %168 = arith.mulf %166, %167 : vector<32x20xf32>
    %169 = vector.broadcast %1 : vector<32x1xf32> to vector<32x20xf32>
    %170 = arith.addf %168, %169 : vector<32x20xf32>
    %cst_59 = arith.constant 0.000000e+00 : f32
    %171 = vector.broadcast %cst_59 : f32 to vector<32x20xf32>
    %172 = arith.maximumf %170, %171 : vector<32x20xf32>
    %173 = arith.maximumf %163, %172 : vector<32x20xf32>
    %cst_60 = arith.constant dense<0.000000e+00> : vector<32x18xf32>
    %174 = tpu.matmul %173, %2, %cst_60 {dimension_numbers = #tpu.dot_dimension_numbers<[1], [0], [0], [1], [0, 0, 1, 1], [], []>} : vector<32x20xf32>, vector<20x18xf32>, vector<32x18xf32> -> vector<32x18xf32>
    %175 = vector.extract_strided_slice %174 {offsets = [0, 0], sizes = [32, 6], strides = [1, 1]} : vector<32x18xf32> to vector<32x6xf32>
    %176 = vector.extract_strided_slice %174 {offsets = [0, 6], sizes = [32, 6], strides = [1, 1]} : vector<32x18xf32> to vector<32x6xf32>
    %177 = arith.maximumf %175, %176 : vector<32x6xf32>
    %178 = vector.extract_strided_slice %174 {offsets = [0, 12], sizes = [32, 6], strides = [1, 1]} : vector<32x18xf32> to vector<32x6xf32>
    %179 = arith.maximumf %177, %178 : vector<32x6xf32>
    %c0_61 = arith.constant 0 : index
    %c0_62 = arith.constant 0 : index
    %c24 = arith.constant 24 : index
    %180 = vector.load %arg5[%c0_61, %c0_62, %c24] : memref<1x32x36xf32, #tpu.memory_space<vmem>>, vector<1x32x6xf32>
    %181 = vector.shape_cast %180 : vector<1x32x6xf32> to vector<32x6xf32>
    %182 = vector.shape_cast %179 : vector<32x6xf32> to vector<1x32x6xf32>
    tpu.vector_store %arg5[%c0_61, %c0_62, %c24], %182 {strides = array<i32>} : memref<1x32x36xf32, #tpu.memory_space<vmem>>, vector<1x32x6xf32>,
    %c0_63 = arith.constant 0 : index
    %c0_64 = arith.constant 0 : index
    %c280 = arith.constant 280 : index
    %183 = vector.load %arg1[%c0_63, %c0_64, %c280] : memref<1x32x320xbf16, #tpu.memory_space<vmem>>, vector<1x32x20xbf16>
    %184 = vector.shape_cast %183 : vector<1x32x20xbf16> to vector<32x20xbf16>
    %185 = arith.extf %184 : vector<32x20xbf16> to vector<32x20xf32>
    %186 = vector.broadcast %0 : vector<32x1xf32> to vector<32x20xf32>
    %187 = arith.mulf %185, %186 : vector<32x20xf32>
    %188 = vector.broadcast %1 : vector<32x1xf32> to vector<32x20xf32>
    %189 = arith.addf %187, %188 : vector<32x20xf32>
    %cst_65 = arith.constant 0.000000e+00 : f32
    %190 = vector.broadcast %cst_65 : f32 to vector<32x20xf32>
    %191 = arith.maximumf %189, %190 : vector<32x20xf32>
    %c0_66 = arith.constant 0 : index
    %c0_67 = arith.constant 0 : index
    %c300 = arith.constant 300 : index
    %192 = vector.load %arg1[%c0_66, %c0_67, %c300] : memref<1x32x320xbf16, #tpu.memory_space<vmem>>, vector<1x32x20xbf16>
    %193 = vector.shape_cast %192 : vector<1x32x20xbf16> to vector<32x20xbf16>
    %194 = arith.extf %193 : vector<32x20xbf16> to vector<32x20xf32>
    %195 = vector.broadcast %0 : vector<32x1xf32> to vector<32x20xf32>
    %196 = arith.mulf %194, %195 : vector<32x20xf32>
    %197 = vector.broadcast %1 : vector<32x1xf32> to vector<32x20xf32>
    %198 = arith.addf %196, %197 : vector<32x20xf32>
    %cst_68 = arith.constant 0.000000e+00 : f32
    %199 = vector.broadcast %cst_68 : f32 to vector<32x20xf32>
    %200 = arith.maximumf %198, %199 : vector<32x20xf32>
    %201 = arith.maximumf %191, %200 : vector<32x20xf32>
    %cst_69 = arith.constant dense<0.000000e+00> : vector<32x18xf32>
    %202 = tpu.matmul %201, %2, %cst_69 {dimension_numbers = #tpu.dot_dimension_numbers<[1], [0], [0], [1], [0, 0, 1, 1], [], []>} : vector<32x20xf32>, vector<20x18xf32>, vector<32x18xf32> -> vector<32x18xf32>
    %203 = vector.extract_strided_slice %202 {offsets = [0, 0], sizes = [32, 6], strides = [1, 1]} : vector<32x18xf32> to vector<32x6xf32>
    %204 = vector.extract_strided_slice %202 {offsets = [0, 6], sizes = [32, 6], strides = [1, 1]} : vector<32x18xf32> to vector<32x6xf32>
    %205 = arith.maximumf %203, %204 : vector<32x6xf32>
    %206 = vector.extract_strided_slice %202 {offsets = [0, 12], sizes = [32, 6], strides = [1, 1]} : vector<32x18xf32> to vector<32x6xf32>
    %207 = arith.maximumf %205, %206 : vector<32x6xf32>
    %c0_70 = arith.constant 0 : index
    %c0_71 = arith.constant 0 : index
    %c30 = arith.constant 30 : index
    %208 = vector.load %arg5[%c0_70, %c0_71, %c30] : memref<1x32x36xf32, #tpu.memory_space<vmem>>, vector<1x32x6xf32>
    %209 = vector.shape_cast %208 : vector<1x32x6xf32> to vector<32x6xf32>
    %210 = vector.shape_cast %207 : vector<32x6xf32> to vector<1x32x6xf32>
    tpu.vector_store %arg5[%c0_70, %c0_71, %c30], %210 {strides = array<i32>} : memref<1x32x36xf32, #tpu.memory_space<vmem>>, vector<1x32x6xf32>,
    return
  }
  func.func @transform_0(%arg0: i32) -> (i32, i32, i32) {
    %c0_i32 = arith.constant 0 : i32
    %c0_i32_0 = arith.constant 0 : i32
    %c0_i32_1 = arith.constant 0 : i32
    return %arg0, %c0_i32, %c0_i32_0 : i32, i32, i32
  }
  func.func @transform_1(%arg0: i32) -> (i32, i32) {
    %c0_i32 = arith.constant 0 : i32
    %c0_i32_0 = arith.constant 0 : i32
    %c0_i32_1 = arith.constant 0 : i32
    return %c0_i32, %c0_i32_0 : i32, i32
  }
  func.func @transform_2(%arg0: i32) -> (i32, i32) {
    %c0_i32 = arith.constant 0 : i32
    %c0_i32_0 = arith.constant 0 : i32
    %c0_i32_1 = arith.constant 0 : i32
    return %c0_i32, %c0_i32_0 : i32, i32
  }
  func.func @transform_3(%arg0: i32) -> (i32, i32) {
    %c0_i32 = arith.constant 0 : i32
    %c0_i32_0 = arith.constant 0 : i32
    %c0_i32_1 = arith.constant 0 : i32
    return %c0_i32, %c0_i32_0 : i32, i32
  }
  func.func @transform_4(%arg0: i32) -> (i32, i32, i32) {
    %c0_i32 = arith.constant 0 : i32
    %c0_i32_0 = arith.constant 0 : i32
    %c0_i32_1 = arith.constant 0 : i32
    return %arg0, %c0_i32, %c0_i32_0 : i32, i32, i32
  }
}

</mosaic_0001>

<llo_original>
// kernel: alex_conv_block_forward.3
$region0: #{alex_conv_block_forward.3}
  #allocation0 [shape = 'u32[]', space=smem, size = 0x4, offset = 0x4, fixed_abs, tag = 'smem constant byte address 0x4 - core index']
  #allocation1 [shape = 'u32[144,128]{1,0:T(1,128)}', space=vmem, size = 0x12000, scoped, tag = 'internal scratch']
  %s0 = inlined_call_operand.vmem [shape: bf16[2,32,320], index: 0, kind: input, shape index: {}]
  %s1 = inlined_call_operand.vmem [shape: f32[32,1], index: 1, kind: input, shape index: {}]
  %s2 = inlined_call_operand.vmem [shape: f32[32,1], index: 2, kind: input, shape index: {}]
  %s3 = inlined_call_operand.vmem [shape: f32[20,18], index: 3, kind: input, shape index: {}]
  %s4 = inlined_call_operand.vmem [shape: f32[2,32,36], index: 4, kind: output, shape index: {}]
  %s5 = sld [smem:[#allocation0]]
  $region49: #{alex_conv_block_forward.3} parent=0
    _
  %s7 = ssub.s32 1, %s5
  %s8 = scalar_select 0, %s7, %s5
  loop: start=0, step=1, limit=4
  $region2: #{alex_conv_block_forward.3} parent=0 // loop_pre_header
    _
  $region3: #{alex_conv_block_forward.3} parent=0 // loop_header
    %s10 = sphi 0, %s14
    %p11 = scmp.ge.s32.totalorder %s10, 4
    %s20 = sphi 0, %s22
    %s23 = sphi 0, %s20
    %s24 = sphi 0, %s23
    %s40 = sphi 0, %s24
    %s44 = sphi 0, %s44
    %s46 = sphi 0, %s44
    %s47 = sphi 0, %s46
    %s61 = sphi 0, %s47
    %s65 = sphi 0, %s65
    %s67 = sphi 0, %s65
    %s68 = sphi 0, %s67
    %s82 = sphi 0, %s68
    %s86 = sphi 0, %s86
    %s88 = sphi 0, %s86
    %s89 = sphi 0, %s88
    %s103 = sphi 0, %s89
    %s109 = sphi 0, %s111
    %s112 = sphi 0, %s109
    %s113 = sphi 0, %s112
    %s129 = sphi 0, %s113
  $region4: #{alex_conv_block_forward.3} parent=0 // loop_header_branch
    %13 = sbr.rel (%p11) target = $region8
  $region5: #{alex_conv_block_forward.3} parent=0 // loop_body
    %s15 = ssub.s32 %s10, 1
    %s16 = ssub.s32 %s10, 2
    %s17 = sadd.s32 %s10, 1
    %s18 = ssub.s32 %s10, %s17
    %p19 = scmp.eq.s32.totalorder %s18, 0
    %s21 = sadd.s32 %s20, 1
    %s22 = scalar_select %p19, %s20, %s21
    %p25 = pneg %p19
    %p26 = scmp.eq.s32.totalorder %s10, 1
    %p27 = por %p25, %p26
    %p28 = scmp.ne.s32.totalorder %s20, %s23
    %p29 = scmp.eq.s32.totalorder %s10, 0
    %p30 = por %p28, %p29
    %p31 = scmp.ne.s32.totalorder %s20, %s23
    %p32 = scmp.eq.s32.totalorder %s15, 1
    %p33 = por %p31, %p32
    %p34 = scmp.ne.s32.totalorder %s23, %s24
    %p35 = scmp.eq.s32.totalorder %s15, 0
    %p36 = por %p34, %p35
    %p37 = scmp.ne.s32.totalorder %s23, %s24
    %p38 = scmp.eq.s32.totalorder %s16, 1
    %p39 = por %p37, %p38
    %p41 = scmp.ne.s32.totalorder %s24, %s40
    %p42 = scmp.eq.s32.totalorder %s16, 0
    %p43 = por %p41, %p42
    %s45 = sadd.s32 %s44, 1
    %p48 = scmp.eq.s32.totalorder %s10, 1
    %p49 = scmp.ne.s32.totalorder %s44, %s46
    %p50 = scmp.eq.s32.totalorder %s10, 0
    %p51 = por %p49, %p50
    %p52 = scmp.ne.s32.totalorder %s44, %s46
    %p53 = scmp.eq.s32.totalorder %s15, 1
    %p54 = por %p52, %p53
    %p55 = scmp.ne.s32.totalorder %s46, %s47
    %p56 = scmp.eq.s32.totalorder %s15, 0
    %p57 = por %p55, %p56
    %p58 = scmp.ne.s32.totalorder %s46, %s47
    %p59 = scmp.eq.s32.totalorder %s16, 1
    %p60 = por %p58, %p59
    %p62 = scmp.ne.s32.totalorder %s47, %s61
    %p63 = scmp.eq.s32.totalorder %s16, 0
    %p64 = por %p62, %p63
    %s66 = sadd.s32 %s65, 1
    %p69 = scmp.eq.s32.totalorder %s10, 1
    %p70 = scmp.ne.s32.totalorder %s65, %s67
    %p71 = scmp.eq.s32.totalorder %s10, 0
    %p72 = por %p70, %p71
    %p73 = scmp.ne.s32.totalorder %s65, %s67
    %p74 = scmp.eq.s32.totalorder %s15, 1
    %p75 = por %p73, %p74
    %p76 = scmp.ne.s32.totalorder %s67, %s68
    %p77 = scmp.eq.s32.totalorder %s15, 0
    %p78 = por %p76, %p77
    %p79 = scmp.ne.s32.totalorder %s67, %s68
    %p80 = scmp.eq.s32.totalorder %s16, 1
    %p81 = por %p79, %p80
    %p83 = scmp.ne.s32.totalorder %s68, %s82
    %p84 = scmp.eq.s32.totalorder %s16, 0
    %p85 = por %p83, %p84
    %s87 = sadd.s32 %s86, 1
    %p90 = scmp.eq.s32.totalorder %s10, 1
    %p91 = scmp.ne.s32.totalorder %s86, %s88
    %p92 = scmp.eq.s32.totalorder %s10, 0
    %p93 = por %p91, %p92
    %p94 = scmp.ne.s32.totalorder %s86, %s88
    %p95 = scmp.eq.s32.totalorder %s15, 1
    %p96 = por %p94, %p95
    %p97 = scmp.ne.s32.totalorder %s88, %s89
    %p98 = scmp.eq.s32.totalorder %s15, 0
    %p99 = por %p97, %p98
    %p100 = scmp.ne.s32.totalorder %s88, %s89
    %p101 = scmp.eq.s32.totalorder %s16, 1
    %p102 = por %p100, %p101
    %p104 = scmp.ne.s32.totalorder %s89, %s103
    %p105 = scmp.eq.s32.totalorder %s16, 0
    %p106 = por %p104, %p105
    %s107 = ssub.s32 %s10, %s17
    %p108 = scmp.eq.s32.totalorder %s107, 0
    %s110 = sadd.s32 %s109, 1
    %s111 = scalar_select %p108, %s109, %s110
    %p114 = pneg %p108
    %p115 = scmp.eq.s32.totalorder %s10, 1
    %p116 = por %p114, %p115
    %p117 = scmp.ne.s32.totalorder %s109, %s112
    %p118 = scmp.eq.s32.totalorder %s10, 0
    %p119 = por %p117, %p118
    %p120 = scmp.ne.s32.totalorder %s109, %s112
    %p121 = scmp.eq.s32.totalorder %s15, 1
    %p122 = por %p120, %p121
    %p123 = scmp.ne.s32.totalorder %s112, %s113
    %p124 = scmp.eq.s32.totalorder %s15, 0
    %p125 = por %p123, %p124
    %p126 = scmp.ne.s32.totalorder %s112, %s113
    %p127 = scmp.eq.s32.totalorder %s16, 1
    %p128 = por %p126, %p127
    %p130 = scmp.ne.s32.totalorder %s113, %s129
    %p131 = scmp.eq.s32.totalorder %s16, 0
    %p132 = por %p130, %p131
    %p133 = scmp.le.s32.totalorder 1, %s10
    %p134 = scmp.lt.s32.totalorder %s10, 3
    %p135 = pnand %p133, %p134
    %p136 = pneg %p135
    // Predicated region
    $region9: #{alex_conv_block_forward.3} parent=5 // pred_check
      _
    $region10: #{alex_conv_block_forward.3} parent=5 // pred_check_branch
      %138 = sbr.rel (%p135) target = $region12
    $region11: #{alex_conv_block_forward.3} parent=5 // pred_region
      %s139 = ssub.s32 %s10, 1
      // Predicated region
      $region13: #{alex_conv_block_forward.3} parent=11 // pred_check
        %p140 = pneg %p57
      $region14: #{alex_conv_block_forward.3} parent=11 // pred_check_branch
        %142 = sbr.rel (%p140) target = $region16
      $region15: #{alex_conv_block_forward.3} parent=11 // pred_region
        _
      $region16: #{alex_conv_block_forward.3} parent=11 // pred_fallthru
        _
      // Predicated region
      $region17: #{alex_conv_block_forward.3} parent=11 // pred_check
        %p143 = pneg %p78
      $region18: #{alex_conv_block_forward.3} parent=11 // pred_check_branch
        %145 = sbr.rel (%p143) target = $region20
      $region19: #{alex_conv_block_forward.3} parent=11 // pred_region
        _
      $region20: #{alex_conv_block_forward.3} parent=11 // pred_fallthru
        _
      // Predicated region
      $region21: #{alex_conv_block_forward.3} parent=11 // pred_check
        %p146 = pneg %p99
      $region22: #{alex_conv_block_forward.3} parent=11 // pred_check_branch
        %148 = sbr.rel (%p146) target = $region24
      $region23: #{alex_conv_block_forward.3} parent=11 // pred_region
        _
      $region24: #{alex_conv_block_forward.3} parent=11 // pred_fallthru
        _
    $region12: #{alex_conv_block_forward.3} parent=5 // pred_fallthru
      _
    %p149 = scmp.lt.s32.totalorder %s10, 2
    // Predicated region
    $region25: #{alex_conv_block_forward.3} parent=5 // pred_check
      %p150 = pneg %p149
    $region26: #{alex_conv_block_forward.3} parent=5 // pred_check_branch
      %152 = sbr.rel (%p150) target = $region28
    $region27: #{alex_conv_block_forward.3} parent=5 // pred_region
      // Predicated region
      $region29: #{alex_conv_block_forward.3} parent=27 // pred_check
        %p153 = pneg %p30
      $region30: #{alex_conv_block_forward.3} parent=27 // pred_check_branch
        %155 = sbr.rel (%p153) target = $region32
      $region31: #{alex_conv_block_forward.3} parent=27 // pred_region
        %p156 = scmp.lt.s32.totalorder %s10, 1
        %s157 = scalar_select %p156, %s10, 1
        %s158 = smul.addr %s157, 12
        %s159 = smul.addr %s158, 4
        %s160 = scalar_lea.vmem %s0, %s159
      $region32: #{alex_conv_block_forward.3} parent=27 // pred_fallthru
        _
    $region28: #{alex_conv_block_forward.3} parent=5 // pred_fallthru
      _
    %p161 = scmp.le.s32.totalorder 1, %s10
    %p162 = scmp.lt.s32.totalorder %s10, 3
    %p163 = pnand %p161, %p162
    %p164 = pneg %p163
    // Predicated region
    $region33: #{alex_conv_block_forward.3} parent=5 // pred_check
      _
    $region34: #{alex_conv_block_forward.3} parent=5 // pred_check_branch
      %166 = sbr.rel (%p163) target = $region36
    $region35: #{alex_conv_block_forward.3} parent=5 // pred_region
      %s167 = ssub.s32 %s10, 1
      %p168 = scmp.lt.s32.totalorder %s15, 1
      %s169 = scalar_select %p168, %s15, 1
      %s170 = smul.addr %s169, 12
      %s171 = smul.addr %s170, 4
      %s172 = scalar_lea.vmem %s0, %s171
      %p173 = pneg %p36
      %p174 = pneg %p33
      %p175 = pneg %p57
      %p176 = pneg %p54
      %p177 = pneg %p78
      %p178 = pneg %p75
      %p179 = pneg %p99
      %p180 = pneg %p96
      %p181 = pneg %p125
      %p182 = pneg %p122
      %p183 = scmp.lt.s32.totalorder %s15, 1
      %s184 = scalar_select %p183, %s15, 1
      %s185 = smul.addr %s184, 4
      %s186 = smul.addr %s185, 8
      %s187 = scalar_lea.vmem %s4, %s186
      %p188 = scmp.lt.s32.totalorder %s15, 1
      %s189 = scalar_select %p188, %s15, 1
      %s190 = smul.addr %s189, 12
      %s191 = smul.addr %s190, 4
      %s192 = scalar_lea.vmem %s0, %s191
      %p193 = scmp.lt.s32.totalorder %s15, 1
      %s194 = scalar_select %p193, %s15, 1
      %s195 = smul.addr %s194, 4
      %s196 = smul.addr %s195, 8
      %s197 = scalar_lea.vmem %s4, %s196
      %v198 = vld [vmem:[%s1] sm:$0xff]
      %v199 = vld [vmem:[%s1 + $0x8] sm:$0xff]
      %v200 = vld [vmem:[%s1 + $0x10] sm:$0xff]
      %v201 = vld [vmem:[%s1 + $0x18] sm:$0xff]
      %v202 = vld [vmem:[%s2] sm:$0xff]
      %v203 = vld [vmem:[%s2 + $0x8] sm:$0xff]
      %v204 = vld [vmem:[%s2 + $0x10] sm:$0xff]
      %v205 = vld [vmem:[%s2 + $0x18] sm:$0xff]
      %v206 = vld [vmem:[%s3] sm:$0xff]
      %v207 = vld [vmem:[%s3 + $0x8] sm:$0xff]
      %v208 = vld [vmem:[%s3 + $0x10] sm:$0xf]
      %v209 = vld [vmem:[%s192] sm:$0xf]
      %v210 = vld [vmem:[%s192 + $0xc] sm:$0xf]
      %v211 = vld [vmem:[%s192 + $0x18] sm:$0xf]
      %v212 = vld [vmem:[%s192 + $0x24] sm:$0xf]
      %v213 = vunpack.c.l.bf16 %v209
      %v214 = vunpack.c.l.bf16 %v210
      %v215 = vunpack.c.l.bf16 %v211
      %v216 = vunpack.c.l.bf16 %v212
      %218 = vset.pattern.permute.xlu0 0
      %219 = vperm.xlu0 %218, %v198
      %v220 = vpop.permute.xlu0 %219
      %223 = vset.pattern.permute.xlu0 0
      %224 = vperm.xlu0 %223, %v199
      %v225 = vpop.permute.xlu0 %224
      %228 = vset.pattern.permute.xlu0 0
      %229 = vperm.xlu0 %228, %v200
      %v230 = vpop.permute.xlu0 %229
      %233 = vset.pattern.permute.xlu0 0
      %234 = vperm.xlu0 %233, %v201
      %v235 = vpop.permute.xlu0 %234
      %v237 = vmul.f32 %v213, %v220
      %v238 = vmul.f32 %v214, %v225
      %v239 = vmul.f32 %v215, %v230
      %v240 = vmul.f32 %v216, %v235
      %242 = vset.pattern.permute.xlu0 0
      %243 = vperm.xlu0 %242, %v202
      %v244 = vpop.permute.xlu0 %243
      %247 = vset.pattern.permute.xlu0 0
      %248 = vperm.xlu0 %247, %v203
      %v249 = vpop.permute.xlu0 %248
      %252 = vset.pattern.permute.xlu0 0
      %253 = vperm.xlu0 %252, %v204
      %v254 = vpop.permute.xlu0 %253
      %257 = vset.pattern.permute.xlu0 0
      %258 = vperm.xlu0 %257, %v205
      %v259 = vpop.permute.xlu0 %258
      %v261 = vadd.f32 %v237, %v244
      %v262 = vadd.f32 %v238, %v249
      %v263 = vadd.f32 %v239, %v254
      %v264 = vadd.f32 %v240, %v259
      %v265 = vmax.f32 %v261, 0.0
      %v266 = vmax.f32 %v262, 0.0
      %v267 = vmax.f32 %v263, 0.0
      %v268 = vmax.f32 %v264, 0.0
      %273 = vrot.lane.b32.xlu0 %v265, 108
      %v274 = vpop.permute.xlu0 %273
      %275 = vrot.lane.b32.xlu0 %v266, 108
      %v276 = vpop.permute.xlu0 %275
      %277 = vrot.lane.b32.xlu0 %v267, 108
      %v278 = vpop.permute.xlu0 %277
      %279 = vrot.lane.b32.xlu0 %v268, 108
      %v280 = vpop.permute.xlu0 %279
      %v285 = vmax.f32 %v265, %v274
      %v286 = vmax.f32 %v266, %v276
      %v287 = vmax.f32 %v267, %v278
      %v288 = vmax.f32 %v268, %v280
      %vm289 = vcmask 162816
      %v291 = vsel %vm289, %v285, 0
      %v294 = vsel %vm289, %v286, 0
      %v297 = vsel %vm289, %v287, 0
      %v300 = vsel %vm289, %v288, 0
      %vm302 = vcmask 1043456
      %v304 = vsel %vm302, %v208, 0
      %306 = vmatprep.subr.mxu0 0.0
      %307 = vmatpush1.msra.mxu0 0.0
      %308 = vmatprep.subr.mxu0 0.0
      %309 = vmatpush1.msra.mxu0 0.0
      %310 = vmatprep.subr.mxu0 0.0
      %311 = vmatpush1.msra.mxu0 0.0
      %312 = vmatprep.subr.mxu0 0.0
      %313 = vmatpush1.msra.mxu0 0.0
      %314 = vmatprep.subr.mxu0 0.0
      %315 = vmatpush1.msra.mxu0 0.0
      %316 = vmatprep.subr.mxu0 0.0
      %317 = vmatpush1.msra.mxu0 0.0
      %318 = vmatprep.subr.mxu0 0.0
      %319 = vmatpush1.msra.mxu0 0.0
      %320 = vmatprep.subr.mxu0 0.0
      %321 = vmatpush1.msra.mxu0 0.0
      %322 = vmatprep.subr.mxu0 0.0
      %323 = vmatpush1.msra.mxu0 0.0
      %324 = vmatprep.subr.mxu0 0.0
      %325 = vmatpush1.msra.mxu0 0.0
      %326 = vmatprep.subr.mxu0 0.0
      %327 = vmatpush1.msra.mxu0 0.0
      %328 = vmatprep.subr.mxu0 0.0
      %329 = vmatpush1.msra.mxu0 0.0
      %330 = vmatprep.subr.mxu0 0.0
      %331 = vmatpush1.msra.mxu0 0.0
      %332 = vmatprep.subr.mxu0 0.0
      %333 = vmatpush1.msra.mxu0 %v304
      %334 = vmatprep.subr.mxu0 0.0
      %335 = vmatpush1.msra.mxu0 %v207
      %336 = vmatprep.subr.mxu0 0.0
      %337 = vmatpush1.msra.mxu0 %v206
      %338 = vmatprep.subr.mxu0 0.0
      %339 = vmatpush2.msra.mxu0 0.0
      %340 = vmatprep.subr.mxu0 0.0
      %341 = vmatpush2.msra.mxu0 0.0
      %342 = vmatprep.subr.mxu0 0.0
      %343 = vmatpush2.msra.mxu0 0.0
      %344 = vmatprep.subr.mxu0 0.0
      %345 = vmatpush2.msra.mxu0 0.0
      %346 = vmatprep.subr.mxu0 0.0
      %347 = vmatpush2.msra.mxu0 0.0
      %348 = vmatprep.subr.mxu0 0.0
      %349 = vmatpush2.msra.mxu0 0.0
      %350 = vmatprep.subr.mxu0 0.0
      %351 = vmatpush2.msra.mxu0 0.0
      %352 = vmatprep.subr.mxu0 0.0
      %353 = vmatpush2.msra.mxu0 0.0
      %354 = vmatprep.subr.mxu0 0.0
      %355 = vmatpush2.msra.mxu0 0.0
      %356 = vmatprep.subr.mxu0 0.0
      %357 = vmatpush2.msra.mxu0 0.0
      %358 = vmatprep.subr.mxu0 0.0
      %359 = vmatpush2.msra.mxu0 0.0
      %360 = vmatprep.subr.mxu0 0.0
      %361 = vmatpush2.msra.mxu0 0.0
      %362 = vmatprep.subr.mxu0 0.0
      %363 = vmatpush2.msra.mxu0 0.0
      %364 = vmatprep.subr.mxu0 0.0
      %365 = vmatpush2.msra.mxu0 0.0
      %366 = vmatprep.subr.mxu0 0.0
      %367 = vmatpush2.msra.mxu0 0.0
      %368 = vmatprep.subr.mxu0 0.0
      %369 = vmatpush2.msra.mxu0 0.0
      %370 = vmatprep.mubr.f32.mxu0 0.0
      %371 = vmatmul.mubr.f32.gmra.mxu0 %v291
      %v372 = vpop.f32.mrf.mxu0
      %v373 = vadd.f32 0.0, %v372
      %v374 = vpop.f32.mrf.mxu0
      %375 = vmatprep.mubr.f32.mxu0 0.0
      %376 = vmatmul.mubr.f32.gmra.mxu0 %v294
      %v377 = vpop.f32.mrf.mxu0
      %v378 = vadd.f32 0.0, %v377
      %v379 = vpop.f32.mrf.mxu0
      %380 = vmatprep.mubr.f32.mxu0 0.0
      %381 = vmatmul.mubr.f32.gmra.mxu0 %v297
      %v382 = vpop.f32.mrf.mxu0
      %v383 = vadd.f32 0.0, %v382
      %v384 = vpop.f32.mrf.mxu0
      %385 = vmatprep.mubr.f32.mxu0 0.0
      %386 = vmatmul.mubr.f32.gmra.mxu0 %v300
      %v387 = vpop.f32.mrf.mxu0
      %v388 = vadd.f32 0.0, %v387
      %v389 = vpop.f32.mrf.mxu0
      %390 = vdwg.mxu0
      %395 = vrot.lane.b32.xlu0 %v373, 122
      %v396 = vpop.permute.xlu0 %395
      %397 = vrot.lane.b32.xlu0 %v378, 122
      %v398 = vpop.permute.xlu0 %397
      %399 = vrot.lane.b32.xlu0 %v383, 122
      %v400 = vpop.permute.xlu0 %399
      %401 = vrot.lane.b32.xlu0 %v388, 122
      %v402 = vpop.permute.xlu0 %401
      %v407 = vmax.f32 %v373, %v396
      %v408 = vmax.f32 %v378, %v398
      %v409 = vmax.f32 %v383, %v400
      %v410 = vmax.f32 %v388, %v402
      %411 = vrot.lane.b32.xlu0 %v373, 116
      %v412 = vpop.permute.xlu0 %411
      %413 = vrot.lane.b32.xlu0 %v378, 116
      %v414 = vpop.permute.xlu0 %413
      %415 = vrot.lane.b32.xlu0 %v383, 116
      %v416 = vpop.permute.xlu0 %415
      %417 = vrot.lane.b32.xlu0 %v388, 116
      %v418 = vpop.permute.xlu0 %417
      %v423 = vmax.f32 %v407, %v412
      %v424 = vmax.f32 %v408, %v414
      %v425 = vmax.f32 %v409, %v416
      %v426 = vmax.f32 %v410, %v418
      %vm427 = vcmask 48128
      %428 = vst.msk [vmem:[%s197] sm:$0xff] %vm427, %v423
      %429 = vst.msk [vmem:[%s197 + $0x8] sm:$0xff] %vm427, %v424
      %430 = vst.msk [vmem:[%s197 + $0x10] sm:$0xff] %vm427, %v425
      %431 = vst.msk [vmem:[%s197 + $0x18] sm:$0xff] %vm427, %v426
      %v432 = vld [vmem:[%s192] sm:$0xf]
      %v433 = vld [vmem:[%s192 + $0xc] sm:$0xf]
      %v434 = vld [vmem:[%s192 + $0x18] sm:$0xf]
      %v435 = vld [vmem:[%s192 + $0x24] sm:$0xf]
      %v436 = vunpack.c.l.bf16 %v432
      %v437 = vunpack.c.l.bf16 %v433
      %v438 = vunpack.c.l.bf16 %v434
      %v439 = vunpack.c.l.bf16 %v435
      %v440 = vmul.f32 %v436, %v220
      %v441 = vmul.f32 %v437, %v225
      %v442 = vmul.f32 %v438, %v230
      %v443 = vmul.f32 %v439, %v235
      %v444 = vadd.f32 %v440, %v244
      %v445 = vadd.f32 %v441, %v249
      %v446 = vadd.f32 %v442, %v254
      %v447 = vadd.f32 %v443, %v259
      %v448 = vmax.f32 %v444, 0.0
      %v449 = vmax.f32 %v445, 0.0
      %v450 = vmax.f32 %v446, 0.0
      %v451 = vmax.f32 %v447, 0.0
      %456 = vrot.lane.b32.xlu0 %v448, 108
      %v457 = vpop.permute.xlu0 %456
      %458 = vrot.lane.b32.xlu0 %v449, 108
      %v459 = vpop.permute.xlu0 %458
      %460 = vrot.lane.b32.xlu0 %v450, 108
      %v461 = vpop.permute.xlu0 %460
      %462 = vrot.lane.b32.xlu0 %v451, 108
      %v463 = vpop.permute.xlu0 %462
      %v468 = vmax.f32 %v448, %v457
      %v469 = vmax.f32 %v449, %v459
      %v470 = vmax.f32 %v450, %v461
      %v471 = vmax.f32 %v451, %v463
      %472 = vrot.lane.b32.xlu0 %v448, 88
      %v473 = vpop.permute.xlu0 %472
      %474 = vrot.lane.b32.xlu0 %v449, 88
      %v475 = vpop.permute.xlu0 %474
      %476 = vrot.lane.b32.xlu0 %v450, 88
      %v477 = vpop.permute.xlu0 %476
      %478 = vrot.lane.b32.xlu0 %v451, 88
      %v479 = vpop.permute.xlu0 %478
      %v484 = vmax.f32 %v468, %v473
      %v485 = vmax.f32 %v469, %v475
      %v486 = vmax.f32 %v470, %v477
      %v487 = vmax.f32 %v471, %v479
      %492 = vrot.lane.b32.xlu0 %v484, 88
      %v493 = vpop.permute.xlu0 %492
      %494 = vrot.lane.b32.xlu0 %v485, 88
      %v495 = vpop.permute.xlu0 %494
      %496 = vrot.lane.b32.xlu0 %v486, 88
      %v497 = vpop.permute.xlu0 %496
      %498 = vrot.lane.b32.xlu0 %v487, 88
      %v499 = vpop.permute.xlu0 %498
      %v500 = vsel %vm289, %v493, 0
      %v502 = vsel %vm289, %v495, 0
      %v504 = vsel %vm289, %v497, 0
      %v506 = vsel %vm289, %v499, 0
      %508 = vmatprep.subr.mxu0 0.0
      %509 = vmatpush1.msra.mxu0 0.0
      %510 = vmatprep.subr.mxu0 0.0
      %511 = vmatpush1.msra.mxu0 0.0
      %512 = vmatprep.subr.mxu0 0.0
      %513 = vmatpush1.msra.mxu0 0.0
      %514 = vmatprep.subr.mxu0 0.0
      %515 = vmatpush1.msra.mxu0 0.0
      %516 = vmatprep.subr.mxu0 0.0
      %517 = vmatpush1.msra.mxu0 0.0
      %518 = vmatprep.subr.mxu0 0.0
      %519 = vmatpush1.msra.mxu0 0.0
      %520 = vmatprep.subr.mxu0 0.0
      %521 = vmatpush1.msra.mxu0 0.0
      %522 = vmatprep.subr.mxu0 0.0
      %523 = vmatpush1.msra.mxu0 0.0
      %524 = vmatprep.subr.mxu0 0.0
      %525 = vmatpush1.msra.mxu0 0.0
      %526 = vmatprep.subr.mxu0 0.0
      %527 = vmatpush1.msra.mxu0 0.0
      %528 = vmatprep.subr.mxu0 0.0
      %529 = vmatpush1.msra.mxu0 0.0
      %530 = vmatprep.subr.mxu0 0.0
      %531 = vmatpush1.msra.mxu0 0.0
      %532 = vmatprep.subr.mxu0 0.0
      %533 = vmatpush1.msra.mxu0 0.0
      %534 = vmatprep.subr.mxu0 0.0
      %535 = vmatpush1.msra.mxu0 %v304
      %536 = vmatprep.subr.mxu0 0.0
      %537 = vmatpush1.msra.mxu0 %v207
      %538 = vmatprep.subr.mxu0 0.0
      %539 = vmatpush1.msra.mxu0 %v206
      %540 = vmatprep.subr.mxu0 0.0
      %541 = vmatpush2.msra.mxu0 0.0
      %542 = vmatprep.subr.mxu0 0.0
      %543 = vmatpush2.msra.mxu0 0.0
      %544 = vmatprep.subr.mxu0 0.0
      %545 = vmatpush2.msra.mxu0 0.0
      %546 = vmatprep.subr.mxu0 0.0
      %547 = vmatpush2.msra.mxu0 0.0
      %548 = vmatprep.subr.mxu0 0.0
      %549 = vmatpush2.msra.mxu0 0.0
      %550 = vmatprep.subr.mxu0 0.0
      %551 = vmatpush2.msra.mxu0 0.0
      %552 = vmatprep.subr.mxu0 0.0
      %553 = vmatpush2.msra.mxu0 0.0
      %554 = vmatprep.subr.mxu0 0.0
      %555 = vmatpush2.msra.mxu0 0.0
      %556 = vmatprep.subr.mxu0 0.0
      %557 = vmatpush2.msra.mxu0 0.0
      %558 = vmatprep.subr.mxu0 0.0
      %559 = vmatpush2.msra.mxu0 0.0
      %560 = vmatprep.subr.mxu0 0.0
      %561 = vmatpush2.msra.mxu0 0.0
      %562 = vmatprep.subr.mxu0 0.0
      %563 = vmatpush2.msra.mxu0 0.0
      %564 = vmatprep.subr.mxu0 0.0
      %565 = vmatpush2.msra.mxu0 0.0
      %566 = vmatprep.subr.mxu0 0.0
      %567 = vmatpush2.msra.mxu0 0.0
      %568 = vmatprep.subr.mxu0 0.0
      %569 = vmatpush2.msra.mxu0 0.0
      %570 = vmatprep.subr.mxu0 0.0
      %571 = vmatpush2.msra.mxu0 0.0
      %572 = vmatprep.mubr.f32.mxu0 0.0
      %573 = vmatmul.mubr.f32.gmra.mxu0 %v500
      %v574 = vpop.f32.mrf.mxu0
      %v575 = vadd.f32 0.0, %v574
      %v576 = vpop.f32.mrf.mxu0
      %577 = vmatprep.mubr.f32.mxu0 0.0
      %578 = vmatmul.mubr.f32.gmra.mxu0 %v502
      %v579 = vpop.f32.mrf.mxu0
      %v580 = vadd.f32 0.0, %v579
      %v581 = vpop.f32.mrf.mxu0
      %582 = vmatprep.mubr.f32.mxu0 0.0
      %583 = vmatmul.mubr.f32.gmra.mxu0 %v504
      %v584 = vpop.f32.mrf.mxu0
      %v585 = vadd.f32 0.0, %v584
      %v586 = vpop.f32.mrf.mxu0
      %587 = vmatprep.mubr.f32.mxu0 0.0
      %588 = vmatmul.mubr.f32.gmra.mxu0 %v506
      %v589 = vpop.f32.mrf.mxu0
      %v590 = vadd.f32 0.0, %v589
      %v591 = vpop.f32.mrf.mxu0
      %592 = vdwg.mxu0
      %597 = vrot.lane.b32.xlu0 %v575, 122
      %v598 = vpop.permute.xlu0 %597
      %599 = vrot.lane.b32.xlu0 %v580, 122
      %v600 = vpop.permute.xlu0 %599
      %601 = vrot.lane.b32.xlu0 %v585, 122
      %v602 = vpop.permute.xlu0 %601
      %603 = vrot.lane.b32.xlu0 %v590, 122
      %v604 = vpop.permute.xlu0 %603
      %v609 = vmax.f32 %v575, %v598
      %v610 = vmax.f32 %v580, %v600
      %v611 = vmax.f32 %v585, %v602
      %v612 = vmax.f32 %v590, %v604
      %613 = vrot.lane.b32.xlu0 %v575, 116
      %v614 = vpop.permute.xlu0 %613
      %615 = vrot.lane.b32.xlu0 %v580, 116
      %v616 = vpop.permute.xlu0 %615
      %617 = vrot.lane.b32.xlu0 %v585, 116
      %v618 = vpop.permute.xlu0 %617
      %619 = vrot.lane.b32.xlu0 %v590, 116
      %v620 = vpop.permute.xlu0 %619
      %v625 = vmax.f32 %v609, %v614
      %v626 = vmax.f32 %v610, %v616
      %v627 = vmax.f32 %v611, %v618
      %v628 = vmax.f32 %v612, %v620
      %633 = vrot.lane.b32.xlu0 %v625, 6
      %v634 = vpop.permute.xlu0 %633
      %635 = vrot.lane.b32.xlu0 %v626, 6
      %v636 = vpop.permute.xlu0 %635
      %637 = vrot.lane.b32.xlu0 %v627, 6
      %v638 = vpop.permute.xlu0 %637
      %639 = vrot.lane.b32.xlu0 %v628, 6
      %v640 = vpop.permute.xlu0 %639
      %vm645 = vcmask 97328
      %646 = vst.msk [vmem:[%s197] sm:$0xff] %vm645, %v634
      %647 = vst.msk [vmem:[%s197 + $0x8] sm:$0xff] %vm645, %v636
      %648 = vst.msk [vmem:[%s197 + $0x10] sm:$0xff] %vm645, %v638
      %649 = vst.msk [vmem:[%s197 + $0x18] sm:$0xff] %vm645, %v640
      %v650 = vld [vmem:[%s192] sm:$0xf]
      %v651 = vld [vmem:[%s192 + $0xc] sm:$0xf]
      %v652 = vld [vmem:[%s192 + $0x18] sm:$0xf]
      %v653 = vld [vmem:[%s192 + $0x24] sm:$0xf]
      %v654 = vunpack.c.l.bf16 %v650
      %v655 = vunpack.c.l.bf16 %v651
      %v656 = vunpack.c.l.bf16 %v652
      %v657 = vunpack.c.l.bf16 %v653
      %v658 = vmul.f32 %v654, %v220
      %v659 = vmul.f32 %v655, %v225
      %v660 = vmul.f32 %v656, %v230
      %v661 = vmul.f32 %v657, %v235
      %v662 = vadd.f32 %v658, %v244
      %v663 = vadd.f32 %v659, %v249
      %v664 = vadd.f32 %v660, %v254
      %v665 = vadd.f32 %v661, %v259
      %v666 = vmax.f32 %v662, 0.0
      %v667 = vmax.f32 %v663, 0.0
      %v668 = vmax.f32 %v664, 0.0
      %v669 = vmax.f32 %v665, 0.0
      %v670 = vld [vmem:[%s192] sm:$0xff]
      %v671 = vld [vmem:[%s192 + $0xc] sm:$0xff]
      %v672 = vld [vmem:[%s192 + $0x18] sm:$0xff]
      %v673 = vld [vmem:[%s192 + $0x24] sm:$0xff]
      %v674 = vunpack.c.l.bf16 %v670
      %v675 = vunpack.c.h.bf16 %v670
      %v676 = vunpack.c.l.bf16 %v671
      %v677 = vunpack.c.h.bf16 %v671
      %v678 = vunpack.c.l.bf16 %v672
      %v679 = vunpack.c.h.bf16 %v672
      %v680 = vunpack.c.l.bf16 %v673
      %v681 = vunpack.c.h.bf16 %v673
      %v682 = vmul.f32 %v674, %v220
      %v683 = vmul.f32 %v675, %v220
      %v684 = vmul.f32 %v676, %v225
      %v685 = vmul.f32 %v677, %v225
      %v686 = vmul.f32 %v678, %v230
      %v687 = vmul.f32 %v679, %v230
      %v688 = vmul.f32 %v680, %v235
      %v689 = vmul.f32 %v681, %v235
      %v690 = vadd.f32 %v682, %v244
      %v691 = vadd.f32 %v683, %v244
      %v692 = vadd.f32 %v684, %v249
      %v693 = vadd.f32 %v685, %v249
      %v694 = vadd.f32 %v686, %v254
      %v695 = vadd.f32 %v687, %v254
      %v696 = vadd.f32 %v688, %v259
      %v697 = vadd.f32 %v689, %v259
      %v698 = vmax.f32 %v690, 0.0
      %v699 = vmax.f32 %v691, 0.0
      %v700 = vmax.f32 %v692, 0.0
      %v701 = vmax.f32 %v693, 0.0
      %v702 = vmax.f32 %v694, 0.0
      %v703 = vmax.f32 %v695, 0.0
      %v704 = vmax.f32 %v696, 0.0
      %v705 = vmax.f32 %v697, 0.0
      %714 = vrot.lane.b32.xlu0 %v698, 108
      %v715 = vpop.permute.xlu0 %714
      %716 = vrot.lane.b32.xlu0 %v699, 108
      %v717 = vpop.permute.xlu0 %716
      %718 = vrot.lane.b32.xlu0 %v700, 108
      %v719 = vpop.permute.xlu0 %718
      %720 = vrot.lane.b32.xlu0 %v701, 108
      %v721 = vpop.permute.xlu0 %720
      %722 = vrot.lane.b32.xlu0 %v702, 108
      %v723 = vpop.permute.xlu0 %722
      %724 = vrot.lane.b32.xlu0 %v703, 108
      %v725 = vpop.permute.xlu0 %724
      %726 = vrot.lane.b32.xlu0 %v704, 108
      %v727 = vpop.permute.xlu0 %726
      %728 = vrot.lane.b32.xlu0 %v705, 108
      %v729 = vpop.permute.xlu0 %728
      %vm730 = vcmask 883712
      %v731 = vsel %vm730, %v715, %v717
      %v732 = vsel %vm730, %v719, %v721
      %v733 = vsel %vm730, %v723, %v725
      %v734 = vsel %vm730, %v727, %v729
      %v739 = vmax.f32 %v666, %v731
      %v740 = vmax.f32 %v667, %v732
      %v741 = vmax.f32 %v668, %v733
      %v742 = vmax.f32 %v669, %v734
      %v743 = vld [vmem:[%s192 + $0x4] sm:$0xf]
      %v744 = vld [vmem:[%s192 + $0x10] sm:$0xf]
      %v745 = vld [vmem:[%s192 + $0x1c] sm:$0xf]
      %v746 = vld [vmem:[%s192 + $0x28] sm:$0xf]
      %v747 = vunpack.c.l.bf16 %v743
      %v748 = vunpack.c.l.bf16 %v744
      %v749 = vunpack.c.l.bf16 %v745
      %v750 = vunpack.c.l.bf16 %v746
      %v751 = vmul.f32 %v747, %v220
      %v752 = vmul.f32 %v748, %v225
      %v753 = vmul.f32 %v749, %v230
      %v754 = vmul.f32 %v750, %v235
      %v755 = vadd.f32 %v751, %v244
      %v756 = vadd.f32 %v752, %v249
      %v757 = vadd.f32 %v753, %v254
      %v758 = vadd.f32 %v754, %v259
      %v759 = vmax.f32 %v755, 0.0
      %v760 = vmax.f32 %v756, 0.0
      %v761 = vmax.f32 %v757, 0.0
      %v762 = vmax.f32 %v758, 0.0
      %767 = vrot.lane.b32.xlu0 %v759, 88
      %v768 = vpop.permute.xlu0 %767
      %769 = vrot.lane.b32.xlu0 %v760, 88
      %v770 = vpop.permute.xlu0 %769
      %771 = vrot.lane.b32.xlu0 %v761, 88
      %v772 = vpop.permute.xlu0 %771
      %773 = vrot.lane.b32.xlu0 %v762, 88
      %v774 = vpop.permute.xlu0 %773
      %v779 = vmax.f32 %v739, %v768
      %v780 = vmax.f32 %v740, %v770
      %v781 = vmax.f32 %v741, %v772
      %v782 = vmax.f32 %v742, %v774
      %787 = vrot.lane.b32.xlu0 %v779, 28
      %v788 = vpop.permute.xlu0 %787
      %789 = vrot.lane.b32.xlu0 %v780, 28
      %v790 = vpop.permute.xlu0 %789
      %791 = vrot.lane.b32.xlu0 %v781, 28
      %v792 = vpop.permute.xlu0 %791
      %793 = vrot.lane.b32.xlu0 %v782, 28
      %v794 = vpop.permute.xlu0 %793
      %v795 = vsel %vm289, %v788, 0
      %v797 = vsel %vm289, %v790, 0
      %v799 = vsel %vm289, %v792, 0
      %v801 = vsel %vm289, %v794, 0
      %803 = vmatprep.subr.mxu0 0.0
      %804 = vmatpush1.msra.mxu0 0.0
      %805 = vmatprep.subr.mxu0 0.0
      %806 = vmatpush1.msra.mxu0 0.0
      %807 = vmatprep.subr.mxu0 0.0
      %808 = vmatpush1.msra.mxu0 0.0
      %809 = vmatprep.subr.mxu0 0.0
      %810 = vmatpush1.msra.mxu0 0.0
      %811 = vmatprep.subr.mxu0 0.0
      %812 = vmatpush1.msra.mxu0 0.0
      %813 = vmatprep.subr.mxu0 0.0
      %814 = vmatpush1.msra.mxu0 0.0
      %815 = vmatprep.subr.mxu0 0.0
      %816 = vmatpush1.msra.mxu0 0.0
      %817 = vmatprep.subr.mxu0 0.0
      %818 = vmatpush1.msra.mxu0 0.0
      %819 = vmatprep.subr.mxu0 0.0
      %820 = vmatpush1.msra.mxu0 0.0
      %821 = vmatprep.subr.mxu0 0.0
      %822 = vmatpush1.msra.mxu0 0.0
      %823 = vmatprep.subr.mxu0 0.0
      %824 = vmatpush1.msra.mxu0 0.0
      %825 = vmatprep.subr.mxu0 0.0
      %826 = vmatpush1.msra.mxu0 0.0
      %827 = vmatprep.subr.mxu0 0.0
      %828 = vmatpush1.msra.mxu0 0.0
      %829 = vmatprep.subr.mxu0 0.0
      %830 = vmatpush1.msra.mxu0 %v304
      %831 = vmatprep.subr.mxu0 0.0
      %832 = vmatpush1.msra.mxu0 %v207
      %833 = vmatprep.subr.mxu0 0.0
      %834 = vmatpush1.msra.mxu0 %v206
      %835 = vmatprep.subr.mxu0 0.0
      %836 = vmatpush2.msra.mxu0 0.0
      %837 = vmatprep.subr.mxu0 0.0
      %838 = vmatpush2.msra.mxu0 0.0
      %839 = vmatprep.subr.mxu0 0.0
      %840 = vmatpush2.msra.mxu0 0.0
      %841 = vmatprep.subr.mxu0 0.0
      %842 = vmatpush2.msra.mxu0 0.0
      %843 = vmatprep.subr.mxu0 0.0
      %844 = vmatpush2.msra.mxu0 0.0
      %845 = vmatprep.subr.mxu0 0.0
      %846 = vmatpush2.msra.mxu0 0.0
      %847 = vmatprep.subr.mxu0 0.0
      %848 = vmatpush2.msra.mxu0 0.0
      %849 = vmatprep.subr.mxu0 0.0
      %850 = vmatpush2.msra.mxu0 0.0
      %851 = vmatprep.subr.mxu0 0.0
      %852 = vmatpush2.msra.mxu0 0.0
      %853 = vmatprep.subr.mxu0 0.0
      %854 = vmatpush2.msra.mxu0 0.0
      %855 = vmatprep.subr.mxu0 0.0
      %856 = vmatpush2.msra.mxu0 0.0
      %857 = vmatprep.subr.mxu0 0.0
      %858 = vmatpush2.msra.mxu0 0.0
      %859 = vmatprep.subr.mxu0 0.0
      %860 = vmatpush2.msra.mxu0 0.0
      %861 = vmatprep.subr.mxu0 0.0
      %862 = vmatpush2.msra.mxu0 0.0
      %863 = vmatprep.subr.mxu0 0.0
      %864 = vmatpush2.msra.mxu0 0.0
      %865 = vmatprep.subr.mxu0 0.0
      %866 = vmatpush2.msra.mxu0 0.0
      %867 = vmatprep.mubr.f32.mxu0 0.0
      %868 = vmatmul.mubr.f32.gmra.mxu0 %v795
      %v869 = vpop.f32.mrf.mxu0
      %v870 = vadd.f32 0.0, %v869
      %v871 = vpop.f32.mrf.mxu0
      %872 = vmatprep.mubr.f32.mxu0 0.0
      %873 = vmatmul.mubr.f32.gmra.mxu0 %v797
      %v874 = vpop.f32.mrf.mxu0
      %v875 = vadd.f32 0.0, %v874
      %v876 = vpop.f32.mrf.mxu0
      %877 = vmatprep.mubr.f32.mxu0 0.0
      %878 = vmatmul.mubr.f32.gmra.mxu0 %v799
      %v879 = vpop.f32.mrf.mxu0
      %v880 = vadd.f32 0.0, %v879
      %v881 = vpop.f32.mrf.mxu0
      %882 = vmatprep.mubr.f32.mxu0 0.0
      %883 = vmatmul.mubr.f32.gmra.mxu0 %v801
      %v884 = vpop.f32.mrf.mxu0
      %v885 = vadd.f32 0.0, %v884
      %v886 = vpop.f32.mrf.mxu0
      %887 = vdwg.mxu0
      %892 = vrot.lane.b32.xlu0 %v870, 122
      %v893 = vpop.permute.xlu0 %892
      %894 = vrot.lane.b32.xlu0 %v875, 122
      %v895 = vpop.permute.xlu0 %894
      %896 = vrot.lane.b32.xlu0 %v880, 122
      %v897 = vpop.permute.xlu0 %896
      %898 = vrot.lane.b32.xlu0 %v885, 122
      %v899 = vpop.permute.xlu0 %898
      %v904 = vmax.f32 %v870, %v893
      %v905 = vmax.f32 %v875, %v895
      %v906 = vmax.f32 %v880, %v897
      %v907 = vmax.f32 %v885, %v899
      %908 = vrot.lane.b32.xlu0 %v870, 116
      %v909 = vpop.permute.xlu0 %908
      %910 = vrot.lane.b32.xlu0 %v875, 116
      %v911 = vpop.permute.xlu0 %910
      %912 = vrot.lane.b32.xlu0 %v880, 116
      %v913 = vpop.permute.xlu0 %912
      %914 = vrot.lane.b32.xlu0 %v885, 116
      %v915 = vpop.permute.xlu0 %914
      %v920 = vmax.f32 %v904, %v909
      %v921 = vmax.f32 %v905, %v911
      %v922 = vmax.f32 %v906, %v913
      %v923 = vmax.f32 %v907, %v915
      %928 = vrot.lane.b32.xlu0 %v920, 12
      %v929 = vpop.permute.xlu0 %928
      %930 = vrot.lane.b32.xlu0 %v921, 12
      %v931 = vpop.permute.xlu0 %930
      %932 = vrot.lane.b32.xlu0 %v922, 12
      %v933 = vpop.permute.xlu0 %932
      %934 = vrot.lane.b32.xlu0 %v923, 12
      %v935 = vpop.permute.xlu0 %934
      %vm940 = vcmask 146528
      %941 = vst.msk [vmem:[%s197] sm:$0xff] %vm940, %v929
      %942 = vst.msk [vmem:[%s197 + $0x8] sm:$0xff] %vm940, %v931
      %943 = vst.msk [vmem:[%s197 + $0x10] sm:$0xff] %vm940, %v933
      %944 = vst.msk [vmem:[%s197 + $0x18] sm:$0xff] %vm940, %v935
      %v945 = vld [vmem:[%s192 + $0x4] sm:$0xf]
      %v946 = vld [vmem:[%s192 + $0x10] sm:$0xf]
      %v947 = vld [vmem:[%s192 + $0x1c] sm:$0xf]
      %v948 = vld [vmem:[%s192 + $0x28] sm:$0xf]
      %v949 = vunpack.c.l.bf16 %v945
      %v950 = vunpack.c.l.bf16 %v946
      %v951 = vunpack.c.l.bf16 %v947
      %v952 = vunpack.c.l.bf16 %v948
      %v953 = vmul.f32 %v949, %v220
      %v954 = vmul.f32 %v950, %v225
      %v955 = vmul.f32 %v951, %v230
      %v956 = vmul.f32 %v952, %v235
      %v957 = vadd.f32 %v953, %v244
      %v958 = vadd.f32 %v954, %v249
      %v959 = vadd.f32 %v955, %v254
      %v960 = vadd.f32 %v956, %v259
      %v961 = vmax.f32 %v957, 0.0
      %v962 = vmax.f32 %v958, 0.0
      %v963 = vmax.f32 %v959, 0.0
      %v964 = vmax.f32 %v960, 0.0
      %969 = vrot.lane.b32.xlu0 %v961, 108
      %v970 = vpop.permute.xlu0 %969
      %971 = vrot.lane.b32.xlu0 %v962, 108
      %v972 = vpop.permute.xlu0 %971
      %973 = vrot.lane.b32.xlu0 %v963, 108
      %v974 = vpop.permute.xlu0 %973
      %975 = vrot.lane.b32.xlu0 %v964, 108
      %v976 = vpop.permute.xlu0 %975
      %v981 = vmax.f32 %v961, %v970
      %v982 = vmax.f32 %v962, %v972
      %v983 = vmax.f32 %v963, %v974
      %v984 = vmax.f32 %v964, %v976
      %985 = vrot.lane.b32.xlu0 %v961, 88
      %v986 = vpop.permute.xlu0 %985
      %987 = vrot.lane.b32.xlu0 %v962, 88
      %v988 = vpop.permute.xlu0 %987
      %989 = vrot.lane.b32.xlu0 %v963, 88
      %v990 = vpop.permute.xlu0 %989
      %991 = vrot.lane.b32.xlu0 %v964, 88
      %v992 = vpop.permute.xlu0 %991
      %v997 = vmax.f32 %v981, %v986
      %v998 = vmax.f32 %v982, %v988
      %v999 = vmax.f32 %v983, %v990
      %v1000 = vmax.f32 %v984, %v992
      %1005 = vrot.lane.b32.xlu0 %v997, 96
      %v1006 = vpop.permute.xlu0 %1005
      %1007 = vrot.lane.b32.xlu0 %v998, 96
      %v1008 = vpop.permute.xlu0 %1007
      %1009 = vrot.lane.b32.xlu0 %v999, 96
      %v1010 = vpop.permute.xlu0 %1009
      %1011 = vrot.lane.b32.xlu0 %v1000, 96
      %v1012 = vpop.permute.xlu0 %1011
      %v1013 = vsel %vm289, %v1006, 0
      %v1015 = vsel %vm289, %v1008, 0
      %v1017 = vsel %vm289, %v1010, 0
      %v1019 = vsel %vm289, %v1012, 0
      %1021 = vmatprep.subr.mxu0 0.0
      %1022 = vmatpush1.msra.mxu0 0.0
      %1023 = vmatprep.subr.mxu0 0.0
      %1024 = vmatpush1.msra.mxu0 0.0
      %1025 = vmatprep.subr.mxu0 0.0
      %1026 = vmatpush1.msra.mxu0 0.0
      %1027 = vmatprep.subr.mxu0 0.0
      %1028 = vmatpush1.msra.mxu0 0.0
      %1029 = vmatprep.subr.mxu0 0.0
      %1030 = vmatpush1.msra.mxu0 0.0
      %1031 = vmatprep.subr.mxu0 0.0
      %1032 = vmatpush1.msra.mxu0 0.0
      %1033 = vmatprep.subr.mxu0 0.0
      %1034 = vmatpush1.msra.mxu0 0.0
      %1035 = vmatprep.subr.mxu0 0.0
      %1036 = vmatpush1.msra.mxu0 0.0
      %1037 = vmatprep.subr.mxu0 0.0
      %1038 = vmatpush1.msra.mxu0 0.0
      %1039 = vmatprep.subr.mxu0 0.0
      %1040 = vmatpush1.msra.mxu0 0.0
      %1041 = vmatprep.subr.mxu0 0.0
      %1042 = vmatpush1.msra.mxu0 0.0
      %1043 = vmatprep.subr.mxu0 0.0
      %1044 = vmatpush1.msra.mxu0 0.0
      %1045 = vmatprep.subr.mxu0 0.0
      %1046 = vmatpush1.msra.mxu0 0.0
      %1047 = vmatprep.subr.mxu0 0.0
      %1048 = vmatpush1.msra.mxu0 %v304
      %1049 = vmatprep.subr.mxu0 0.0
      %1050 = vmatpush1.msra.mxu0 %v207
      %1051 = vmatprep.subr.mxu0 0.0
      %1052 = vmatpush1.msra.mxu0 %v206
      %1053 = vmatprep.subr.mxu0 0.0
      %1054 = vmatpush2.msra.mxu0 0.0
      %1055 = vmatprep.subr.mxu0 0.0
      %1056 = vmatpush2.msra.mxu0 0.0
      %1057 = vmatprep.subr.mxu0 0.0
      %1058 = vmatpush2.msra.mxu0 0.0
      %1059 = vmatprep.subr.mxu0 0.0
      %1060 = vmatpush2.msra.mxu0 0.0
      %1061 = vmatprep.subr.mxu0 0.0
      %1062 = vmatpush2.msra.mxu0 0.0
      %1063 = vmatprep.subr.mxu0 0.0
      %1064 = vmatpush2.msra.mxu0 0.0
      %1065 = vmatprep.subr.mxu0 0.0
      %1066 = vmatpush2.msra.mxu0 0.0
      %1067 = vmatprep.subr.mxu0 0.0
      %1068 = vmatpush2.msra.mxu0 0.0
      %1069 = vmatprep.subr.mxu0 0.0
      %1070 = vmatpush2.msra.mxu0 0.0
      %1071 = vmatprep.subr.mxu0 0.0
      %1072 = vmatpush2.msra.mxu0 0.0
      %1073 = vmatprep.subr.mxu0 0.0
      %1074 = vmatpush2.msra.mxu0 0.0
      %1075 = vmatprep.subr.mxu0 0.0
      %1076 = vmatpush2.msra.mxu0 0.0
      %1077 = vmatprep.subr.mxu0 0.0
      %1078 = vmatpush2.msra.mxu0 0.0
      %1079 = vmatprep.subr.mxu0 0.0
      %1080 = vmatpush2.msra.mxu0 0.0
      %1081 = vmatprep.subr.mxu0 0.0
      %1082 = vmatpush2.msra.mxu0 0.0
      %1083 = vmatprep.subr.mxu0 0.0
      %1084 = vmatpush2.msra.mxu0 0.0
      %1085 = vmatprep.mubr.f32.mxu0 0.0
      %1086 = vmatmul.mubr.f32.gmra.mxu0 %v1013
      %v1087 = vpop.f32.mrf.mxu0
      %v1088 = vadd.f32 0.0, %v1087
      %v1089 = vpop.f32.mrf.mxu0
      %1090 = vmatprep.mubr.f32.mxu0 0.0
      %1091 = vmatmul.mubr.f32.gmra.mxu0 %v1015
      %v1092 = vpop.f32.mrf.mxu0
      %v1093 = vadd.f32 0.0, %v1092
      %v1094 = vpop.f32.mrf.mxu0
      %1095 = vmatprep.mubr.f32.mxu0 0.0
      %1096 = vmatmul.mubr.f32.gmra.mxu0 %v1017
      %v1097 = vpop.f32.mrf.mxu0
      %v1098 = vadd.f32 0.0, %v1097
      %v1099 = vpop.f32.mrf.mxu0
      %1100 = vmatprep.mubr.f32.mxu0 0.0
      %1101 = vmatmul.mubr.f32.gmra.mxu0 %v1019
      %v1102 = vpop.f32.mrf.mxu0
      %v1103 = vadd.f32 0.0, %v1102
      %v1104 = vpop.f32.mrf.mxu0
      %1105 = vdwg.mxu0
      %1110 = vrot.lane.b32.xlu0 %v1088, 122
      %v1111 = vpop.permute.xlu0 %1110
      %1112 = vrot.lane.b32.xlu0 %v1093, 122
      %v1113 = vpop.permute.xlu0 %1112
      %1114 = vrot.lane.b32.xlu0 %v1098, 122
      %v1115 = vpop.permute.xlu0 %1114
      %1116 = vrot.lane.b32.xlu0 %v1103, 122
      %v1117 = vpop.permute.xlu0 %1116
      %v1122 = vmax.f32 %v1088, %v1111
      %v1123 = vmax.f32 %v1093, %v1113
      %v1124 = vmax.f32 %v1098, %v1115
      %v1125 = vmax.f32 %v1103, %v1117
      %1126 = vrot.lane.b32.xlu0 %v1088, 116
      %v1127 = vpop.permute.xlu0 %1126
      %1128 = vrot.lane.b32.xlu0 %v1093, 116
      %v1129 = vpop.permute.xlu0 %1128
      %1130 = vrot.lane.b32.xlu0 %v1098, 116
      %v1131 = vpop.permute.xlu0 %1130
      %1132 = vrot.lane.b32.xlu0 %v1103, 116
      %v1133 = vpop.permute.xlu0 %1132
      %v1138 = vmax.f32 %v1122, %v1127
      %v1139 = vmax.f32 %v1123, %v1129
      %v1140 = vmax.f32 %v1124, %v1131
      %v1141 = vmax.f32 %v1125, %v1133
      %1146 = vrot.lane.b32.xlu0 %v1138, 18
      %v1147 = vpop.permute.xlu0 %1146
      %1148 = vrot.lane.b32.xlu0 %v1139, 18
      %v1149 = vpop.permute.xlu0 %1148
      %1150 = vrot.lane.b32.xlu0 %v1140, 18
      %v1151 = vpop.permute.xlu0 %1150
      %1152 = vrot.lane.b32.xlu0 %v1141, 18
      %v1153 = vpop.permute.xlu0 %1152
      %vm1158 = vcmask 195728
      %1159 = vst.msk [vmem:[%s197] sm:$0xff] %vm1158, %v1147
      %1160 = vst.msk [vmem:[%s197 + $0x8] sm:$0xff] %vm1158, %v1149
      %1161 = vst.msk [vmem:[%s197 + $0x10] sm:$0xff] %vm1158, %v1151
      %1162 = vst.msk [vmem:[%s197 + $0x18] sm:$0xff] %vm1158, %v1153
      %v1163 = vld [vmem:[%s192 + $0x4] sm:$0xf]
      %v1164 = vld [vmem:[%s192 + $0x10] sm:$0xf]
      %v1165 = vld [vmem:[%s192 + $0x1c] sm:$0xf]
      %v1166 = vld [vmem:[%s192 + $0x28] sm:$0xf]
      %v1167 = vunpack.c.l.bf16 %v1163
      %v1168 = vunpack.c.l.bf16 %v1164
      %v1169 = vunpack.c.l.bf16 %v1165
      %v1170 = vunpack.c.l.bf16 %v1166
      %v1171 = vmul.f32 %v1167, %v220
      %v1172 = vmul.f32 %v1168, %v225
      %v1173 = vmul.f32 %v1169, %v230
      %v1174 = vmul.f32 %v1170, %v235
      %v1175 = vadd.f32 %v1171, %v244
      %v1176 = vadd.f32 %v1172, %v249
      %v1177 = vadd.f32 %v1173, %v254
      %v1178 = vadd.f32 %v1174, %v259
      %v1179 = vmax.f32 %v1175, 0.0
      %v1180 = vmax.f32 %v1176, 0.0
      %v1181 = vmax.f32 %v1177, 0.0
      %v1182 = vmax.f32 %v1178, 0.0
      %v1183 = vld [vmem:[%s192 + $0x4] sm:$0xff]
      %v1184 = vld [vmem:[%s192 + $0x10] sm:$0xff]
      %v1185 = vld [vmem:[%s192 + $0x1c] sm:$0xff]
      %v1186 = vld [vmem:[%s192 + $0x28] sm:$0xff]
      %v1187 = vunpack.c.l.bf16 %v1183
      %v1188 = vunpack.c.h.bf16 %v1183
      %v1189 = vunpack.c.l.bf16 %v1184
      %v1190 = vunpack.c.h.bf16 %v1184
      %v1191 = vunpack.c.l.bf16 %v1185
      %v1192 = vunpack.c.h.bf16 %v1185
      %v1193 = vunpack.c.l.bf16 %v1186
      %v1194 = vunpack.c.h.bf16 %v1186
      %v1195 = vmul.f32 %v1187, %v220
      %v1196 = vmul.f32 %v1188, %v220
      %v1197 = vmul.f32 %v1189, %v225
      %v1198 = vmul.f32 %v1190, %v225
      %v1199 = vmul.f32 %v1191, %v230
      %v1200 = vmul.f32 %v1192, %v230
      %v1201 = vmul.f32 %v1193, %v235
      %v1202 = vmul.f32 %v1194, %v235
      %v1203 = vadd.f32 %v1195, %v244
      %v1204 = vadd.f32 %v1196, %v244
      %v1205 = vadd.f32 %v1197, %v249
      %v1206 = vadd.f32 %v1198, %v249
      %v1207 = vadd.f32 %v1199, %v254
      %v1208 = vadd.f32 %v1200, %v254
      %v1209 = vadd.f32 %v1201, %v259
      %v1210 = vadd.f32 %v1202, %v259
      %v1211 = vmax.f32 %v1203, 0.0
      %v1212 = vmax.f32 %v1204, 0.0
      %v1213 = vmax.f32 %v1205, 0.0
      %v1214 = vmax.f32 %v1206, 0.0
      %v1215 = vmax.f32 %v1207, 0.0
      %v1216 = vmax.f32 %v1208, 0.0
      %v1217 = vmax.f32 %v1209, 0.0
      %v1218 = vmax.f32 %v1210, 0.0
      %1227 = vrot.lane.b32.xlu0 %v1211, 108
      %v1228 = vpop.permute.xlu0 %1227
      %1229 = vrot.lane.b32.xlu0 %v1212, 108
      %v1230 = vpop.permute.xlu0 %1229
      %1231 = vrot.lane.b32.xlu0 %v1213, 108
      %v1232 = vpop.permute.xlu0 %1231
      %1233 = vrot.lane.b32.xlu0 %v1214, 108
      %v1234 = vpop.permute.xlu0 %1233
      %1235 = vrot.lane.b32.xlu0 %v1215, 108
      %v1236 = vpop.permute.xlu0 %1235
      %1237 = vrot.lane.b32.xlu0 %v1216, 108
      %v1238 = vpop.permute.xlu0 %1237
      %1239 = vrot.lane.b32.xlu0 %v1217, 108
      %v1240 = vpop.permute.xlu0 %1239
      %1241 = vrot.lane.b32.xlu0 %v1218, 108
      %v1242 = vpop.permute.xlu0 %1241
      %v1243 = vsel %vm730, %v1228, %v1230
      %v1244 = vsel %vm730, %v1232, %v1234
      %v1245 = vsel %vm730, %v1236, %v1238
      %v1246 = vsel %vm730, %v1240, %v1242
      %v1251 = vmax.f32 %v1179, %v1243
      %v1252 = vmax.f32 %v1180, %v1244
      %v1253 = vmax.f32 %v1181, %v1245
      %v1254 = vmax.f32 %v1182, %v1246
      %v1255 = vld [vmem:[%s192 + $0x8] sm:$0xf]
      %v1256 = vld [vmem:[%s192 + $0x14] sm:$0xf]
      %v1257 = vld [vmem:[%s192 + $0x20] sm:$0xf]
      %v1258 = vld [vmem:[%s192 + $0x2c] sm:$0xf]
      %v1259 = vunpack.c.l.bf16 %v1255
      %v1260 = vunpack.c.l.bf16 %v1256
      %v1261 = vunpack.c.l.bf16 %v1257
      %v1262 = vunpack.c.l.bf16 %v1258
      %v1263 = vmul.f32 %v1259, %v220
      %v1264 = vmul.f32 %v1260, %v225
      %v1265 = vmul.f32 %v1261, %v230
      %v1266 = vmul.f32 %v1262, %v235
      %v1267 = vadd.f32 %v1263, %v244
      %v1268 = vadd.f32 %v1264, %v249
      %v1269 = vadd.f32 %v1265, %v254
      %v1270 = vadd.f32 %v1266, %v259
      %v1271 = vmax.f32 %v1267, 0.0
      %v1272 = vmax.f32 %v1268, 0.0
      %v1273 = vmax.f32 %v1269, 0.0
      %v1274 = vmax.f32 %v1270, 0.0
      %1279 = vrot.lane.b32.xlu0 %v1271, 88
      %v1280 = vpop.permute.xlu0 %1279
      %1281 = vrot.lane.b32.xlu0 %v1272, 88
      %v1282 = vpop.permute.xlu0 %1281
      %1283 = vrot.lane.b32.xlu0 %v1273, 88
      %v1284 = vpop.permute.xlu0 %1283
      %1285 = vrot.lane.b32.xlu0 %v1274, 88
      %v1286 = vpop.permute.xlu0 %1285
      %v1291 = vmax.f32 %v1251, %v1280
      %v1292 = vmax.f32 %v1252, %v1282
      %v1293 = vmax.f32 %v1253, %v1284
      %v1294 = vmax.f32 %v1254, %v1286
      %1299 = vrot.lane.b32.xlu0 %v1291, 36
      %v1300 = vpop.permute.xlu0 %1299
      %1301 = vrot.lane.b32.xlu0 %v1292, 36
      %v1302 = vpop.permute.xlu0 %1301
      %1303 = vrot.lane.b32.xlu0 %v1293, 36
      %v1304 = vpop.permute.xlu0 %1303
      %1305 = vrot.lane.b32.xlu0 %v1294, 36
      %v1306 = vpop.permute.xlu0 %1305
      %v1307 = vsel %vm289, %v1300, 0
      %v1309 = vsel %vm289, %v1302, 0
      %v1311 = vsel %vm289, %v1304, 0
      %v1313 = vsel %vm289, %v1306, 0
      %1315 = vmatprep.subr.mxu0 0.0
      %1316 = vmatpush1.msra.mxu0 0.0
      %1317 = vmatprep.subr.mxu0 0.0
      %1318 = vmatpush1.msra.mxu0 0.0
      %1319 = vmatprep.subr.mxu0 0.0
      %1320 = vmatpush1.msra.mxu0 0.0
      %1321 = vmatprep.subr.mxu0 0.0
      %1322 = vmatpush1.msra.mxu0 0.0
      %1323 = vmatprep.subr.mxu0 0.0
      %1324 = vmatpush1.msra.mxu0 0.0
      %1325 = vmatprep.subr.mxu0 0.0
      %1326 = vmatpush1.msra.mxu0 0.0
      %1327 = vmatprep.subr.mxu0 0.0
      %1328 = vmatpush1.msra.mxu0 0.0
      %1329 = vmatprep.subr.mxu0 0.0
      %1330 = vmatpush1.msra.mxu0 0.0
      %1331 = vmatprep.subr.mxu0 0.0
      %1332 = vmatpush1.msra.mxu0 0.0
      %1333 = vmatprep.subr.mxu0 0.0
      %1334 = vmatpush1.msra.mxu0 0.0
      %1335 = vmatprep.subr.mxu0 0.0
      %1336 = vmatpush1.msra.mxu0 0.0
      %1337 = vmatprep.subr.mxu0 0.0
      %1338 = vmatpush1.msra.mxu0 0.0
      %1339 = vmatprep.subr.mxu0 0.0
      %1340 = vmatpush1.msra.mxu0 0.0
      %1341 = vmatprep.subr.mxu0 0.0
      %1342 = vmatpush1.msra.mxu0 %v304
      %1343 = vmatprep.subr.mxu0 0.0
      %1344 = vmatpush1.msra.mxu0 %v207
      %1345 = vmatprep.subr.mxu0 0.0
      %1346 = vmatpush1.msra.mxu0 %v206
      %1347 = vmatprep.subr.mxu0 0.0
      %1348 = vmatpush2.msra.mxu0 0.0
      %1349 = vmatprep.subr.mxu0 0.0
      %1350 = vmatpush2.msra.mxu0 0.0
      %1351 = vmatprep.subr.mxu0 0.0
      %1352 = vmatpush2.msra.mxu0 0.0
      %1353 = vmatprep.subr.mxu0 0.0
      %1354 = vmatpush2.msra.mxu0 0.0
      %1355 = vmatprep.subr.mxu0 0.0
      %1356 = vmatpush2.msra.mxu0 0.0
      %1357 = vmatprep.subr.mxu0 0.0
      %1358 = vmatpush2.msra.mxu0 0.0
      %1359 = vmatprep.subr.mxu0 0.0
      %1360 = vmatpush2.msra.mxu0 0.0
      %1361 = vmatprep.subr.mxu0 0.0
      %1362 = vmatpush2.msra.mxu0 0.0
      %1363 = vmatprep.subr.mxu0 0.0
      %1364 = vmatpush2.msra.mxu0 0.0
      %1365 = vmatprep.subr.mxu0 0.0
      %1366 = vmatpush2.msra.mxu0 0.0
      %1367 = vmatprep.subr.mxu0 0.0
      %1368 = vmatpush2.msra.mxu0 0.0
      %1369 = vmatprep.subr.mxu0 0.0
      %1370 = vmatpush2.msra.mxu0 0.0
      %1371 = vmatprep.subr.mxu0 0.0
      %1372 = vmatpush2.msra.mxu0 0.0
      %1373 = vmatprep.subr.mxu0 0.0
      %1374 = vmatpush2.msra.mxu0 0.0
      %1375 = vmatprep.subr.mxu0 0.0
      %1376 = vmatpush2.msra.mxu0 0.0
      %1377 = vmatprep.subr.mxu0 0.0
      %1378 = vmatpush2.msra.mxu0 0.0
      %1379 = vmatprep.mubr.f32.mxu0 0.0
      %1380 = vmatmul.mubr.f32.gmra.mxu0 %v1307
      %v1381 = vpop.f32.mrf.mxu0
      %v1382 = vadd.f32 0.0, %v1381
      %v1383 = vpop.f32.mrf.mxu0
      %1384 = vmatprep.mubr.f32.mxu0 0.0
      %1385 = vmatmul.mubr.f32.gmra.mxu0 %v1309
      %v1386 = vpop.f32.mrf.mxu0
      %v1387 = vadd.f32 0.0, %v1386
      %v1388 = vpop.f32.mrf.mxu0
      %1389 = vmatprep.mubr.f32.mxu0 0.0
      %1390 = vmatmul.mubr.f32.gmra.mxu0 %v1311
      %v1391 = vpop.f32.mrf.mxu0
      %v1392 = vadd.f32 0.0, %v1391
      %v1393 = vpop.f32.mrf.mxu0
      %1394 = vmatprep.mubr.f32.mxu0 0.0
      %1395 = vmatmul.mubr.f32.gmra.mxu0 %v1313
      %v1396 = vpop.f32.mrf.mxu0
      %v1397 = vadd.f32 0.0, %v1396
      %v1398 = vpop.f32.mrf.mxu0
      %1399 = vdwg.mxu0
      %1404 = vrot.lane.b32.xlu0 %v1382, 122
      %v1405 = vpop.permute.xlu0 %1404
      %1406 = vrot.lane.b32.xlu0 %v1387, 122
      %v1407 = vpop.permute.xlu0 %1406
      %1408 = vrot.lane.b32.xlu0 %v1392, 122
      %v1409 = vpop.permute.xlu0 %1408
      %1410 = vrot.lane.b32.xlu0 %v1397, 122
      %v1411 = vpop.permute.xlu0 %1410
      %v1416 = vmax.f32 %v1382, %v1405
      %v1417 = vmax.f32 %v1387, %v1407
      %v1418 = vmax.f32 %v1392, %v1409
      %v1419 = vmax.f32 %v1397, %v1411
      %1420 = vrot.lane.b32.xlu0 %v1382, 116
      %v1421 = vpop.permute.xlu0 %1420
      %1422 = vrot.lane.b32.xlu0 %v1387, 116
      %v1423 = vpop.permute.xlu0 %1422
      %1424 = vrot.lane.b32.xlu0 %v1392, 116
      %v1425 = vpop.permute.xlu0 %1424
      %1426 = vrot.lane.b32.xlu0 %v1397, 116
      %v1427 = vpop.permute.xlu0 %1426
      %v1432 = vmax.f32 %v1416, %v1421
      %v1433 = vmax.f32 %v1417, %v1423
      %v1434 = vmax.f32 %v1418, %v1425
      %v1435 = vmax.f32 %v1419, %v1427
      %1440 = vrot.lane.b32.xlu0 %v1432, 24
      %v1441 = vpop.permute.xlu0 %1440
      %1442 = vrot.lane.b32.xlu0 %v1433, 24
      %v1443 = vpop.permute.xlu0 %1442
      %1444 = vrot.lane.b32.xlu0 %v1434, 24
      %v1445 = vpop.permute.xlu0 %1444
      %1446 = vrot.lane.b32.xlu0 %v1435, 24
      %v1447 = vpop.permute.xlu0 %1446
      %vm1452 = vcmask 244928
      %1453 = vst.msk [vmem:[%s197] sm:$0xff] %vm1452, %v1441
      %1454 = vst.msk [vmem:[%s197 + $0x8] sm:$0xff] %vm1452, %v1443
      %1455 = vst.msk [vmem:[%s197 + $0x10] sm:$0xff] %vm1452, %v1445
      %1456 = vst.msk [vmem:[%s197 + $0x18] sm:$0xff] %vm1452, %v1447
      %v1457 = vld [vmem:[%s192 + $0x8] sm:$0xf]
      %v1458 = vld [vmem:[%s192 + $0x14] sm:$0xf]
      %v1459 = vld [vmem:[%s192 + $0x20] sm:$0xf]
      %v1460 = vld [vmem:[%s192 + $0x2c] sm:$0xf]
      %v1461 = vunpack.c.l.bf16 %v1457
      %v1462 = vunpack.c.l.bf16 %v1458
      %v1463 = vunpack.c.l.bf16 %v1459
      %v1464 = vunpack.c.l.bf16 %v1460
      %v1465 = vmul.f32 %v1461, %v220
      %v1466 = vmul.f32 %v1462, %v225
      %v1467 = vmul.f32 %v1463, %v230
      %v1468 = vmul.f32 %v1464, %v235
      %v1469 = vadd.f32 %v1465, %v244
      %v1470 = vadd.f32 %v1466, %v249
      %v1471 = vadd.f32 %v1467, %v254
      %v1472 = vadd.f32 %v1468, %v259
      %v1473 = vmax.f32 %v1469, 0.0
      %v1474 = vmax.f32 %v1470, 0.0
      %v1475 = vmax.f32 %v1471, 0.0
      %v1476 = vmax.f32 %v1472, 0.0
      %1481 = vrot.lane.b32.xlu0 %v1473, 108
      %v1482 = vpop.permute.xlu0 %1481
      %1483 = vrot.lane.b32.xlu0 %v1474, 108
      %v1484 = vpop.permute.xlu0 %1483
      %1485 = vrot.lane.b32.xlu0 %v1475, 108
      %v1486 = vpop.permute.xlu0 %1485
      %1487 = vrot.lane.b32.xlu0 %v1476, 108
      %v1488 = vpop.permute.xlu0 %1487
      %v1493 = vmax.f32 %v1473, %v1482
      %v1494 = vmax.f32 %v1474, %v1484
      %v1495 = vmax.f32 %v1475, %v1486
      %v1496 = vmax.f32 %v1476, %v1488
      %1501 = vrot.lane.b32.xlu0 %v1493, 104
      %v1502 = vpop.permute.xlu0 %1501
      %1503 = vrot.lane.b32.xlu0 %v1494, 104
      %v1504 = vpop.permute.xlu0 %1503
      %1505 = vrot.lane.b32.xlu0 %v1495, 104
      %v1506 = vpop.permute.xlu0 %1505
      %1507 = vrot.lane.b32.xlu0 %v1496, 104
      %v1508 = vpop.permute.xlu0 %1507
      %v1509 = vsel %vm289, %v1502, 0
      %v1511 = vsel %vm289, %v1504, 0
      %v1513 = vsel %vm289, %v1506, 0
      %v1515 = vsel %vm289, %v1508, 0
      %1517 = vmatprep.subr.mxu0 0.0
      %1518 = vmatpush1.msra.mxu0 0.0
      %1519 = vmatprep.subr.mxu0 0.0
      %1520 = vmatpush1.msra.mxu0 0.0
      %1521 = vmatprep.subr.mxu0 0.0
      %1522 = vmatpush1.msra.mxu0 0.0
      %1523 = vmatprep.subr.mxu0 0.0
      %1524 = vmatpush1.msra.mxu0 0.0
      %1525 = vmatprep.subr.mxu0 0.0
      %1526 = vmatpush1.msra.mxu0 0.0
      %1527 = vmatprep.subr.mxu0 0.0
      %1528 = vmatpush1.msra.mxu0 0.0
      %1529 = vmatprep.subr.mxu0 0.0
      %1530 = vmatpush1.msra.mxu0 0.0
      %1531 = vmatprep.subr.mxu0 0.0
      %1532 = vmatpush1.msra.mxu0 0.0
      %1533 = vmatprep.subr.mxu0 0.0
      %1534 = vmatpush1.msra.mxu0 0.0
      %1535 = vmatprep.subr.mxu0 0.0
      %1536 = vmatpush1.msra.mxu0 0.0
      %1537 = vmatprep.subr.mxu0 0.0
      %1538 = vmatpush1.msra.mxu0 0.0
      %1539 = vmatprep.subr.mxu0 0.0
      %1540 = vmatpush1.msra.mxu0 0.0
      %1541 = vmatprep.subr.mxu0 0.0
      %1542 = vmatpush1.msra.mxu0 0.0
      %1543 = vmatprep.subr.mxu0 0.0
      %1544 = vmatpush1.msra.mxu0 %v304
      %1545 = vmatprep.subr.mxu0 0.0
      %1546 = vmatpush1.msra.mxu0 %v207
      %1547 = vmatprep.subr.mxu0 0.0
      %1548 = vmatpush1.msra.mxu0 %v206
      %1549 = vmatprep.subr.mxu0 0.0
      %1550 = vmatpush2.msra.mxu0 0.0
      %1551 = vmatprep.subr.mxu0 0.0
      %1552 = vmatpush2.msra.mxu0 0.0
      %1553 = vmatprep.subr.mxu0 0.0
      %1554 = vmatpush2.msra.mxu0 0.0
      %1555 = vmatprep.subr.mxu0 0.0
      %1556 = vmatpush2.msra.mxu0 0.0
      %1557 = vmatprep.subr.mxu0 0.0
      %1558 = vmatpush2.msra.mxu0 0.0
      %1559 = vmatprep.subr.mxu0 0.0
      %1560 = vmatpush2.msra.mxu0 0.0
      %1561 = vmatprep.subr.mxu0 0.0
      %1562 = vmatpush2.msra.mxu0 0.0
      %1563 = vmatprep.subr.mxu0 0.0
      %1564 = vmatpush2.msra.mxu0 0.0
      %1565 = vmatprep.subr.mxu0 0.0
      %1566 = vmatpush2.msra.mxu0 0.0
      %1567 = vmatprep.subr.mxu0 0.0
      %1568 = vmatpush2.msra.mxu0 0.0
      %1569 = vmatprep.subr.mxu0 0.0
      %1570 = vmatpush2.msra.mxu0 0.0
      %1571 = vmatprep.subr.mxu0 0.0
      %1572 = vmatpush2.msra.mxu0 0.0
      %1573 = vmatprep.subr.mxu0 0.0
      %1574 = vmatpush2.msra.mxu0 0.0
      %1575 = vmatprep.subr.mxu0 0.0
      %1576 = vmatpush2.msra.mxu0 0.0
      %1577 = vmatprep.subr.mxu0 0.0
      %1578 = vmatpush2.msra.mxu0 0.0
      %1579 = vmatprep.subr.mxu0 0.0
      %1580 = vmatpush2.msra.mxu0 0.0
      %1581 = vmatprep.mubr.f32.mxu0 0.0
      %1582 = vmatmul.mubr.f32.gmra.mxu0 %v1509
      %v1583 = vpop.f32.mrf.mxu0
      %v1584 = vadd.f32 0.0, %v1583
      %v1585 = vpop.f32.mrf.mxu0
      %1586 = vmatprep.mubr.f32.mxu0 0.0
      %1587 = vmatmul.mubr.f32.gmra.mxu0 %v1511
      %v1588 = vpop.f32.mrf.mxu0
      %v1589 = vadd.f32 0.0, %v1588
      %v1590 = vpop.f32.mrf.mxu0
      %1591 = vmatprep.mubr.f32.mxu0 0.0
      %1592 = vmatmul.mubr.f32.gmra.mxu0 %v1513
      %v1593 = vpop.f32.mrf.mxu0
      %v1594 = vadd.f32 0.0, %v1593
      %v1595 = vpop.f32.mrf.mxu0
      %1596 = vmatprep.mubr.f32.mxu0 0.0
      %1597 = vmatmul.mubr.f32.gmra.mxu0 %v1515
      %v1598 = vpop.f32.mrf.mxu0
      %v1599 = vadd.f32 0.0, %v1598
      %v1600 = vpop.f32.mrf.mxu0
      %1601 = vdwg.mxu0
      %1606 = vrot.lane.b32.xlu0 %v1584, 122
      %v1607 = vpop.permute.xlu0 %1606
      %1608 = vrot.lane.b32.xlu0 %v1589, 122
      %v1609 = vpop.permute.xlu0 %1608
      %1610 = vrot.lane.b32.xlu0 %v1594, 122
      %v1611 = vpop.permute.xlu0 %1610
      %1612 = vrot.lane.b32.xlu0 %v1599, 122
      %v1613 = vpop.permute.xlu0 %1612
      %v1618 = vmax.f32 %v1584, %v1607
      %v1619 = vmax.f32 %v1589, %v1609
      %v1620 = vmax.f32 %v1594, %v1611
      %v1621 = vmax.f32 %v1599, %v1613
      %1622 = vrot.lane.b32.xlu0 %v1584, 116
      %v1623 = vpop.permute.xlu0 %1622
      %1624 = vrot.lane.b32.xlu0 %v1589, 116
      %v1625 = vpop.permute.xlu0 %1624
      %1626 = vrot.lane.b32.xlu0 %v1594, 116
      %v1627 = vpop.permute.xlu0 %1626
      %1628 = vrot.lane.b32.xlu0 %v1599, 116
      %v1629 = vpop.permute.xlu0 %1628
      %v1634 = vmax.f32 %v1618, %v1623
      %v1635 = vmax.f32 %v1619, %v1625
      %v1636 = vmax.f32 %v1620, %v1627
      %v1637 = vmax.f32 %v1621, %v1629
      %1642 = vrot.lane.b32.xlu0 %v1634, 30
      %v1643 = vpop.permute.xlu0 %1642
      %1644 = vrot.lane.b32.xlu0 %v1635, 30
      %v1645 = vpop.permute.xlu0 %1644
      %1646 = vrot.lane.b32.xlu0 %v1636, 30
      %v1647 = vpop.permute.xlu0 %1646
      %1648 = vrot.lane.b32.xlu0 %v1637, 30
      %v1649 = vpop.permute.xlu0 %1648
      %vm1654 = vcmask 294128
      %1655 = vst.msk [vmem:[%s197] sm:$0xff] %vm1654, %v1643
      %1656 = vst.msk [vmem:[%s197 + $0x8] sm:$0xff] %vm1654, %v1645
      %1657 = vst.msk [vmem:[%s197 + $0x10] sm:$0xff] %vm1654, %v1647
      %1658 = vst.msk [vmem:[%s197 + $0x18] sm:$0xff] %vm1654, %v1649
      %p1659 = scmp.lt.s32.totalorder %s15, 1
      %s1660 = scalar_select %p1659, %s15, 1
      %s1661 = smul.addr %s1660, 4
      %s1662 = smul.addr %s1661, 8
      %s1663 = scalar_lea.vmem %s4, %s1662
      // Predicated region
      $region37: #{alex_conv_block_forward.3} parent=35 // pred_check
        %p1664 = pneg %p122
      $region38: #{alex_conv_block_forward.3} parent=35 // pred_check_branch
        %1666 = sbr.rel (%p1664) target = $region40
      $region39: #{alex_conv_block_forward.3} parent=35 // pred_region
        _
      $region40: #{alex_conv_block_forward.3} parent=35 // pred_fallthru
        _
    $region36: #{alex_conv_block_forward.3} parent=5 // pred_fallthru
      _
    %p1667 = scmp.le.s32.totalorder 2, %s10
    // Predicated region
    $region41: #{alex_conv_block_forward.3} parent=5 // pred_check
      %p1668 = pneg %p1667
    $region42: #{alex_conv_block_forward.3} parent=5 // pred_check_branch
      %1670 = sbr.rel (%p1668) target = $region44
    $region43: #{alex_conv_block_forward.3} parent=5 // pred_region
      %s1671 = ssub.s32 %s10, 2
      // Predicated region
      $region45: #{alex_conv_block_forward.3} parent=43 // pred_check
        %p1672 = pneg %p128
      $region46: #{alex_conv_block_forward.3} parent=43 // pred_check_branch
        %1674 = sbr.rel (%p1672) target = $region48
      $region47: #{alex_conv_block_forward.3} parent=43 // pred_region
        %p1675 = scmp.lt.s32.totalorder %s16, 1
        %s1676 = scalar_select %p1675, %s16, 1
        %s1677 = smul.addr %s1676, 4
        %s1678 = smul.addr %s1677, 8
        %s1679 = scalar_lea.vmem %s4, %s1678
      $region48: #{alex_conv_block_forward.3} parent=43 // pred_fallthru
        _
    $region44: #{alex_conv_block_forward.3} parent=5 // pred_fallthru
      _
  $region6: #{alex_conv_block_forward.3} parent=0 // loop_footer
    %s14 = sadd.s32 1, %s10
  $region7: #{alex_conv_block_forward.3} parent=0 // loop_footer_branch
    %9 = sbr.rel target = $region3
  $region8: #{alex_conv_block_forward.3} parent=0 // loop_exit
    _

// kernel: alex_conv_block_forward.2
$region0: #{alex_conv_block_forward.2}
  #allocation0 [shape = 'u32[]', space=smem, size = 0x4, offset = 0x4, fixed_abs, tag = 'smem constant byte address 0x4 - core index']
  #allocation1 [shape = 'u32[144,128]{1,0:T(1,128)}', space=vmem, size = 0x12000, scoped, tag = 'internal scratch']
  #allocation2 [shape = 'bf16[200,320]{1,0:T(8,128)(2,1)}', space=vmem, size = 0x25800, scoped, tag = 'scratch operand']
  %s0 = inlined_call_operand.vmem [shape: bf16[2,8,420], index: 0, kind: input, shape index: {}]
  %s1 = inlined_call_operand.vmem [shape: bf16[32,200], index: 1, kind: input, shape index: {}]
  %s2 = inlined_call_operand.vmem [shape: f32[1,320], index: 2, kind: input, shape index: {}]
  %s3 = inlined_call_operand.vmem [shape: bf16[2,32,320], index: 3, kind: output, shape index: {0}]
  %s4 = inlined_call_operand.vmem [shape: f32[2,32,1], index: 4, kind: output, shape index: {1}]
  %s5 = inlined_call_operand.vmem [shape: f32[2,32,1], index: 5, kind: output, shape index: {2}]
  %6 = xla_tuple %s3, %s4, %s5
  %s7 = sld [smem:[#allocation0]]
  $region61: #{alex_conv_block_forward.2} parent=0
    _
  %s9 = ssub.s32 1, %s7
  %s10 = scalar_select 0, %s9, %s7
  loop: start=0, step=1, limit=4
  $region2: #{alex_conv_block_forward.2} parent=0 // loop_pre_header
    _
  $region3: #{alex_conv_block_forward.2} parent=0 // loop_header
    %s12 = sphi 0, %s16
    %p13 = scmp.ge.s32.totalorder %s12, 4
    %s22 = sphi 0, %s24
    %s25 = sphi 0, %s22
    %s26 = sphi 0, %s25
    %s42 = sphi 0, %s26
    %s46 = sphi 0, %s46
    %s48 = sphi 0, %s46
    %s49 = sphi 0, %s48
    %s63 = sphi 0, %s49
    %s67 = sphi 0, %s67
    %s69 = sphi 0, %s67
    %s70 = sphi 0, %s69
    %s84 = sphi 0, %s70
    %s90 = sphi 0, %s92
    %s93 = sphi 0, %s90
    %s94 = sphi 0, %s93
    %s110 = sphi 0, %s94
    %s116 = sphi 0, %s118
    %s119 = sphi 0, %s116
    %s120 = sphi 0, %s119
    %s136 = sphi 0, %s120
    %s142 = sphi 0, %s144
    %s145 = sphi 0, %s142
    %s146 = sphi 0, %s145
    %s162 = sphi 0, %s146
  $region4: #{alex_conv_block_forward.2} parent=0 // loop_header_branch
    %15 = sbr.rel (%p13) target = $region8
  $region5: #{alex_conv_block_forward.2} parent=0 // loop_body
    %s17 = ssub.s32 %s12, 1
    %s18 = ssub.s32 %s12, 2
    %s19 = sadd.s32 %s12, 1
    %s20 = ssub.s32 %s12, %s19
    %p21 = scmp.eq.s32.totalorder %s20, 0
    %s23 = sadd.s32 %s22, 1
    %s24 = scalar_select %p21, %s22, %s23
    %p27 = pneg %p21
    %p28 = scmp.eq.s32.totalorder %s12, 1
    %p29 = por %p27, %p28
    %p30 = scmp.ne.s32.totalorder %s22, %s25
    %p31 = scmp.eq.s32.totalorder %s12, 0
    %p32 = por %p30, %p31
    %p33 = scmp.ne.s32.totalorder %s22, %s25
    %p34 = scmp.eq.s32.totalorder %s17, 1
    %p35 = por %p33, %p34
    %p36 = scmp.ne.s32.totalorder %s25, %s26
    %p37 = scmp.eq.s32.totalorder %s17, 0
    %p38 = por %p36, %p37
    %p39 = scmp.ne.s32.totalorder %s25, %s26
    %p40 = scmp.eq.s32.totalorder %s18, 1
    %p41 = por %p39, %p40
    %p43 = scmp.ne.s32.totalorder %s26, %s42
    %p44 = scmp.eq.s32.totalorder %s18, 0
    %p45 = por %p43, %p44
    %s47 = sadd.s32 %s46, 1
    %p50 = scmp.eq.s32.totalorder %s12, 1
    %p51 = scmp.ne.s32.totalorder %s46, %s48
    %p52 = scmp.eq.s32.totalorder %s12, 0
    %p53 = por %p51, %p52
    %p54 = scmp.ne.s32.totalorder %s46, %s48
    %p55 = scmp.eq.s32.totalorder %s17, 1
    %p56 = por %p54, %p55
    %p57 = scmp.ne.s32.totalorder %s48, %s49
    %p58 = scmp.eq.s32.totalorder %s17, 0
    %p59 = por %p57, %p58
    %p60 = scmp.ne.s32.totalorder %s48, %s49
    %p61 = scmp.eq.s32.totalorder %s18, 1
    %p62 = por %p60, %p61
    %p64 = scmp.ne.s32.totalorder %s49, %s63
    %p65 = scmp.eq.s32.totalorder %s18, 0
    %p66 = por %p64, %p65
    %s68 = sadd.s32 %s67, 1
    %p71 = scmp.eq.s32.totalorder %s12, 1
    %p72 = scmp.ne.s32.totalorder %s67, %s69
    %p73 = scmp.eq.s32.totalorder %s12, 0
    %p74 = por %p72, %p73
    %p75 = scmp.ne.s32.totalorder %s67, %s69
    %p76 = scmp.eq.s32.totalorder %s17, 1
    %p77 = por %p75, %p76
    %p78 = scmp.ne.s32.totalorder %s69, %s70
    %p79 = scmp.eq.s32.totalorder %s17, 0
    %p80 = por %p78, %p79
    %p81 = scmp.ne.s32.totalorder %s69, %s70
    %p82 = scmp.eq.s32.totalorder %s18, 1
    %p83 = por %p81, %p82
    %p85 = scmp.ne.s32.totalorder %s70, %s84
    %p86 = scmp.eq.s32.totalorder %s18, 0
    %p87 = por %p85, %p86
    %s88 = ssub.s32 %s12, %s19
    %p89 = scmp.eq.s32.totalorder %s88, 0
    %s91 = sadd.s32 %s90, 1
    %s92 = scalar_select %p89, %s90, %s91
    %p95 = pneg %p89
    %p96 = scmp.eq.s32.totalorder %s12, 1
    %p97 = por %p95, %p96
    %p98 = scmp.ne.s32.totalorder %s90, %s93
    %p99 = scmp.eq.s32.totalorder %s12, 0
    %p100 = por %p98, %p99
    %p101 = scmp.ne.s32.totalorder %s90, %s93
    %p102 = scmp.eq.s32.totalorder %s17, 1
    %p103 = por %p101, %p102
    %p104 = scmp.ne.s32.totalorder %s93, %s94
    %p105 = scmp.eq.s32.totalorder %s17, 0
    %p106 = por %p104, %p105
    %p107 = scmp.ne.s32.totalorder %s93, %s94
    %p108 = scmp.eq.s32.totalorder %s18, 1
    %p109 = por %p107, %p108
    %p111 = scmp.ne.s32.totalorder %s94, %s110
    %p112 = scmp.eq.s32.totalorder %s18, 0
    %p113 = por %p111, %p112
    %s114 = ssub.s32 %s12, %s19
    %p115 = scmp.eq.s32.totalorder %s114, 0
    %s117 = sadd.s32 %s116, 1
    %s118 = scalar_select %p115, %s116, %s117
    %p121 = pneg %p115
    %p122 = scmp.eq.s32.totalorder %s12, 1
    %p123 = por %p121, %p122
    %p124 = scmp.ne.s32.totalorder %s116, %s119
    %p125 = scmp.eq.s32.totalorder %s12, 0
    %p126 = por %p124, %p125
    %p127 = scmp.ne.s32.totalorder %s116, %s119
    %p128 = scmp.eq.s32.totalorder %s17, 1
    %p129 = por %p127, %p128
    %p130 = scmp.ne.s32.totalorder %s119, %s120
    %p131 = scmp.eq.s32.totalorder %s17, 0
    %p132 = por %p130, %p131
    %p133 = scmp.ne.s32.totalorder %s119, %s120
    %p134 = scmp.eq.s32.totalorder %s18, 1
    %p135 = por %p133, %p134
    %p137 = scmp.ne.s32.totalorder %s120, %s136
    %p138 = scmp.eq.s32.totalorder %s18, 0
    %p139 = por %p137, %p138
    %s140 = ssub.s32 %s12, %s19
    %p141 = scmp.eq.s32.totalorder %s140, 0
    %s143 = sadd.s32 %s142, 1
    %s144 = scalar_select %p141, %s142, %s143
    %p147 = pneg %p141
    %p148 = scmp.eq.s32.totalorder %s12, 1
    %p149 = por %p147, %p148
    %p150 = scmp.ne.s32.totalorder %s142, %s145
    %p151 = scmp.eq.s32.totalorder %s12, 0
    %p152 = por %p150, %p151
    %p153 = scmp.ne.s32.totalorder %s142, %s145
    %p154 = scmp.eq.s32.totalorder %s17, 1
    %p155 = por %p153, %p154
    %p156 = scmp.ne.s32.totalorder %s145, %s146
    %p157 = scmp.eq.s32.totalorder %s17, 0
    %p158 = por %p156, %p157
    %p159 = scmp.ne.s32.totalorder %s145, %s146
    %p160 = scmp.eq.s32.totalorder %s18, 1
    %p161 = por %p159, %p160
    %p163 = scmp.ne.s32.totalorder %s146, %s162
    %p164 = scmp.eq.s32.totalorder %s18, 0
    %p165 = por %p163, %p164
    %p166 = scmp.le.s32.totalorder 1, %s12
    %p167 = scmp.lt.s32.totalorder %s12, 3
    %p168 = pnand %p166, %p167
    %p169 = pneg %p168
    // Predicated region
    $region9: #{alex_conv_block_forward.2} parent=5 // pred_check
      _
    $region10: #{alex_conv_block_forward.2} parent=5 // pred_check_branch
      %171 = sbr.rel (%p168) target = $region12
    $region11: #{alex_conv_block_forward.2} parent=5 // pred_region
      %s172 = ssub.s32 %s12, 1
      // Predicated region
      $region13: #{alex_conv_block_forward.2} parent=11 // pred_check
        %p173 = pneg %p59
      $region14: #{alex_conv_block_forward.2} parent=11 // pred_check_branch
        %175 = sbr.rel (%p173) target = $region16
      $region15: #{alex_conv_block_forward.2} parent=11 // pred_region
        _
      $region16: #{alex_conv_block_forward.2} parent=11 // pred_fallthru
        _
      // Predicated region
      $region17: #{alex_conv_block_forward.2} parent=11 // pred_check
        %p176 = pneg %p80
      $region18: #{alex_conv_block_forward.2} parent=11 // pred_check_branch
        %178 = sbr.rel (%p176) target = $region20
      $region19: #{alex_conv_block_forward.2} parent=11 // pred_region
        _
      $region20: #{alex_conv_block_forward.2} parent=11 // pred_fallthru
        _
    $region12: #{alex_conv_block_forward.2} parent=5 // pred_fallthru
      _
    %p179 = scmp.lt.s32.totalorder %s12, 2
    // Predicated region
    $region21: #{alex_conv_block_forward.2} parent=5 // pred_check
      %p180 = pneg %p179
    $region22: #{alex_conv_block_forward.2} parent=5 // pred_check_branch
      %182 = sbr.rel (%p180) target = $region24
    $region23: #{alex_conv_block_forward.2} parent=5 // pred_region
      // Predicated region
      $region25: #{alex_conv_block_forward.2} parent=23 // pred_check
        %p183 = pneg %p32
      $region26: #{alex_conv_block_forward.2} parent=23 // pred_check_branch
        %185 = sbr.rel (%p183) target = $region28
      $region27: #{alex_conv_block_forward.2} parent=23 // pred_region
        %p186 = scmp.lt.s32.totalorder %s12, 1
        %s187 = scalar_select %p186, %s12, 1
        %s188 = smul.addr %s187, 4
        %s189 = smul.addr %s188, 4
        %s190 = scalar_lea.vmem %s0, %s189
      $region28: #{alex_conv_block_forward.2} parent=23 // pred_fallthru
        _
    $region24: #{alex_conv_block_forward.2} parent=5 // pred_fallthru
      _
    %p191 = scmp.le.s32.totalorder 1, %s12
    %p192 = scmp.lt.s32.totalorder %s12, 3
    %p193 = pnand %p191, %p192
    %p194 = pneg %p193
    // Predicated region
    $region29: #{alex_conv_block_forward.2} parent=5 // pred_check
      _
    $region30: #{alex_conv_block_forward.2} parent=5 // pred_check_branch
      %196 = sbr.rel (%p193) target = $region32
    $region31: #{alex_conv_block_forward.2} parent=5 // pred_region
      %s197 = ssub.s32 %s12, 1
      %p198 = scmp.lt.s32.totalorder %s17, 1
      %s199 = scalar_select %p198, %s17, 1
      %s200 = smul.addr %s199, 4
      %s201 = smul.addr %s200, 4
      %s202 = scalar_lea.vmem %s0, %s201
      %p203 = pneg %p38
      %p204 = pneg %p35
      %p205 = pneg %p59
      %p206 = pneg %p56
      %p207 = pneg %p80
      %p208 = pneg %p77
      %p209 = pneg %p106
      %p210 = pneg %p103
      %p211 = scmp.lt.s32.totalorder %s17, 1
      %s212 = scalar_select %p211, %s17, 1
      %s213 = smul.addr %s212, 12
      %s214 = smul.addr %s213, 4
      %s215 = scalar_lea.vmem %s3, %s214
      %p216 = pneg %p132
      %p217 = pneg %p129
      %p218 = scmp.lt.s32.totalorder %s17, 1
      %s219 = scalar_select %p218, %s17, 1
      %s220 = smul.addr %s219, 4
      %s221 = smul.addr %s220, 8
      %s222 = scalar_lea.vmem %s4, %s221
      %p223 = pneg %p158
      %p224 = pneg %p155
      %p225 = scmp.lt.s32.totalorder %s17, 1
      %s226 = scalar_select %p225, %s17, 1
      %s227 = smul.addr %s226, 4
      %s228 = smul.addr %s227, 8
      %s229 = scalar_lea.vmem %s5, %s228
      %p230 = scmp.lt.s32.totalorder %s17, 1
      %s231 = scalar_select %p230, %s17, 1
      %s232 = smul.addr %s231, 4
      %s233 = smul.addr %s232, 4
      %s234 = scalar_lea.vmem %s0, %s233
      %p235 = scmp.lt.s32.totalorder %s17, 1
      %s236 = scalar_select %p235, %s17, 1
      %s237 = smul.addr %s236, 12
      %s238 = smul.addr %s237, 4
      %s239 = scalar_lea.vmem %s3, %s238
      %p240 = scmp.lt.s32.totalorder %s17, 1
      %s241 = scalar_select %p240, %s17, 1
      %s242 = smul.addr %s241, 4
      %s243 = smul.addr %s242, 8
      %s244 = scalar_lea.vmem %s4, %s243
      %p245 = scmp.lt.s32.totalorder %s17, 1
      %s246 = scalar_select %p245, %s17, 1
      %s247 = smul.addr %s246, 4
      %s248 = smul.addr %s247, 8
      %s249 = scalar_lea.vmem %s5, %s248
      %v251 = vld [vmem:[%s234] sm:$0xff]
      %v252 = vld [vmem:[%s234 + $0x8] sm:$0xf]
      %253 = vst [vmem:[#allocation2] sm:$0xff] %v251
      %vm254 = vcmask 519168
      %255 = vst.msk [vmem:[#allocation2 + $0x8] sm:$0xf] %vm254, %v252
      %v256 = vld [vmem:[%s234] sm:$0xff]
      %v257 = vld [vmem:[%s234 + $0x8] sm:$0xf]
      %260 = vrot.lane.b32.xlu0 %v256, 127
      %v261 = vpop.permute.xlu0 %260
      %262 = vrot.lane.b32.xlu0 %v257, 127
      %v263 = vpop.permute.xlu0 %262
      %v264 = vrot.slane %v261, 4
      %v265 = vrot.slane %v263, 4
      %vm266 = vcmask 1043456
      %v267 = vsel %vm266, %v264, %v265
      %vm268 = vcmask 1039360
      %v269 = vsel %vm268, %v261, %v267
      %272 = vst [vmem:[#allocation2 + $0xc] sm:$0xff] %v269
      %273 = vst.msk [vmem:[#allocation2 + $0x14] sm:$0xf] %vm254, %v263
      %v274 = vld [vmem:[%s234] sm:$0xff]
      %v275 = vld [vmem:[%s234 + $0x8] sm:$0xf]
      %278 = vrot.lane.b32.xlu0 %v274, 126
      %v279 = vpop.permute.xlu0 %278
      %280 = vrot.lane.b32.xlu0 %v275, 126
      %v281 = vpop.permute.xlu0 %280
      %v282 = vrot.slane %v279, 4
      %v283 = vrot.slane %v281, 4
      %v284 = vsel %vm266, %v282, %v283
      %vm285 = vcmask 1031168
      %v286 = vsel %vm285, %v279, %v284
      %289 = vst [vmem:[#allocation2 + $0x18] sm:$0xff] %v286
      %290 = vst.msk [vmem:[#allocation2 + $0x20] sm:$0xf] %vm254, %v281
      %v291 = vld [vmem:[%s234] sm:$0xff]
      %v292 = vld [vmem:[%s234 + $0x8] sm:$0xf]
      %295 = vrot.lane.b32.xlu0 %v291, 125
      %v296 = vpop.permute.xlu0 %295
      %297 = vrot.lane.b32.xlu0 %v292, 125
      %v298 = vpop.permute.xlu0 %297
      %v299 = vrot.slane %v296, 4
      %v300 = vrot.slane %v298, 4
      %v301 = vsel %vm266, %v299, %v300
      %vm302 = vcmask 1022976
      %v303 = vsel %vm302, %v296, %v301
      %306 = vst [vmem:[#allocation2 + $0x24] sm:$0xff] %v303
      %307 = vst.msk [vmem:[#allocation2 + $0x2c] sm:$0xf] %vm254, %v298
      %v308 = vld [vmem:[%s234] sm:$0xff]
      %v309 = vld [vmem:[%s234 + $0x8] sm:$0xf]
      %312 = vrot.lane.b32.xlu0 %v308, 124
      %v313 = vpop.permute.xlu0 %312
      %314 = vrot.lane.b32.xlu0 %v309, 124
      %v315 = vpop.permute.xlu0 %314
      %v316 = vrot.slane %v313, 4
      %v317 = vrot.slane %v315, 4
      %v318 = vsel %vm266, %v316, %v317
      %vm319 = vcmask 1014784
      %v320 = vsel %vm319, %v313, %v318
      %323 = vst [vmem:[#allocation2 + $0x30] sm:$0xff] %v320
      %324 = vst.msk [vmem:[#allocation2 + $0x38] sm:$0xf] %vm254, %v315
      %v325 = vld [vmem:[%s234] sm:$0xff]
      %v326 = vld [vmem:[%s234 + $0x8] sm:$0xf]
      %329 = vrot.lane.b32.xlu0 %v325, 108
      %v330 = vpop.permute.xlu0 %329
      %331 = vrot.lane.b32.xlu0 %v326, 108
      %v332 = vpop.permute.xlu0 %331
      %v333 = vrot.slane %v330, 4
      %v334 = vrot.slane %v332, 4
      %v335 = vsel %vm266, %v333, %v334
      %vm336 = vcmask 883712
      %v337 = vsel %vm336, %v330, %v335
      %340 = vst [vmem:[#allocation2 + $0x3c] sm:$0xff] %v337
      %341 = vst.msk [vmem:[#allocation2 + $0x44] sm:$0xf] %vm254, %v332
      %v342 = vld [vmem:[%s234] sm:$0xff]
      %v343 = vld [vmem:[%s234 + $0x8] sm:$0xf]
      %346 = vrot.lane.b32.xlu0 %v342, 107
      %v347 = vpop.permute.xlu0 %346
      %348 = vrot.lane.b32.xlu0 %v343, 107
      %v349 = vpop.permute.xlu0 %348
      %v350 = vrot.slane %v347, 4
      %v351 = vrot.slane %v349, 4
      %v352 = vsel %vm266, %v350, %v351
      %vm353 = vcmask 875520
      %v354 = vsel %vm353, %v347, %v352
      %357 = vst [vmem:[#allocation2 + $0x48] sm:$0xff] %v354
      %358 = vst.msk [vmem:[#allocation2 + $0x50] sm:$0xf] %vm254, %v349
      %v359 = vld [vmem:[%s234] sm:$0xff]
      %v360 = vld [vmem:[%s234 + $0x8] sm:$0xf]
      %363 = vrot.lane.b32.xlu0 %v359, 106
      %v364 = vpop.permute.xlu0 %363
      %365 = vrot.lane.b32.xlu0 %v360, 106
      %v366 = vpop.permute.xlu0 %365
      %v367 = vrot.slane %v364, 4
      %v368 = vrot.slane %v366, 4
      %v369 = vsel %vm266, %v367, %v368
      %vm370 = vcmask 867328
      %v371 = vsel %vm370, %v364, %v369
      %374 = vst [vmem:[#allocation2 + $0x54] sm:$0xff] %v371
      %375 = vst.msk [vmem:[#allocation2 + $0x5c] sm:$0xf] %vm254, %v366
      %v376 = vld [vmem:[%s234] sm:$0xff]
      %v377 = vld [vmem:[%s234 + $0x8] sm:$0xf]
      %380 = vrot.lane.b32.xlu0 %v376, 105
      %v381 = vpop.permute.xlu0 %380
      %382 = vrot.lane.b32.xlu0 %v377, 105
      %v383 = vpop.permute.xlu0 %382
      %v384 = vrot.slane %v381, 4
      %v385 = vrot.slane %v383, 4
      %v386 = vsel %vm266, %v384, %v385
      %vm387 = vcmask 859136
      %v388 = vsel %vm387, %v381, %v386
      %391 = vst [vmem:[#allocation2 + $0x60] sm:$0xff] %v388
      %392 = vst.msk [vmem:[#allocation2 + $0x68] sm:$0xf] %vm254, %v383
      %v393 = vld [vmem:[%s234] sm:$0xff]
      %v394 = vld [vmem:[%s234 + $0x8] sm:$0xf]
      %397 = vrot.lane.b32.xlu0 %v393, 104
      %v398 = vpop.permute.xlu0 %397
      %399 = vrot.lane.b32.xlu0 %v394, 104
      %v400 = vpop.permute.xlu0 %399
      %v401 = vrot.slane %v398, 4
      %v402 = vrot.slane %v400, 4
      %v403 = vsel %vm266, %v401, %v402
      %vm404 = vcmask 850944
      %v405 = vsel %vm404, %v398, %v403
      %408 = vst [vmem:[#allocation2 + $0x6c] sm:$0xff] %v405
      %409 = vst.msk [vmem:[#allocation2 + $0x74] sm:$0xf] %vm254, %v400
      %v410 = vld [vmem:[%s234] sm:$0xff]
      %v411 = vld [vmem:[%s234 + $0x8] sm:$0xf]
      %414 = vrot.lane.b32.xlu0 %v410, 88
      %v415 = vpop.permute.xlu0 %414
      %416 = vrot.lane.b32.xlu0 %v411, 88
      %v417 = vpop.permute.xlu0 %416
      %v418 = vrot.slane %v415, 4
      %v419 = vrot.slane %v417, 4
      %v420 = vsel %vm266, %v418, %v419
      %vm421 = vcmask 719872
      %v422 = vsel %vm421, %v415, %v420
      %425 = vst [vmem:[#allocation2 + $0x78] sm:$0xff] %v422
      %426 = vst.msk [vmem:[#allocation2 + $0x80] sm:$0xf] %vm254, %v417
      %v427 = vld [vmem:[%s234] sm:$0xff]
      %v428 = vld [vmem:[%s234 + $0x8] sm:$0xf]
      %431 = vrot.lane.b32.xlu0 %v427, 87
      %v432 = vpop.permute.xlu0 %431
      %433 = vrot.lane.b32.xlu0 %v428, 87
      %v434 = vpop.permute.xlu0 %433
      %v435 = vrot.slane %v432, 4
      %v436 = vrot.slane %v434, 4
      %v437 = vsel %vm266, %v435, %v436
      %vm438 = vcmask 711680
      %v439 = vsel %vm438, %v432, %v437
      %442 = vst [vmem:[#allocation2 + $0x84] sm:$0xff] %v439
      %443 = vst.msk [vmem:[#allocation2 + $0x8c] sm:$0xf] %vm254, %v434
      %v444 = vld [vmem:[%s234] sm:$0xff]
      %v445 = vld [vmem:[%s234 + $0x8] sm:$0xf]
      %448 = vrot.lane.b32.xlu0 %v444, 86
      %v449 = vpop.permute.xlu0 %448
      %450 = vrot.lane.b32.xlu0 %v445, 86
      %v451 = vpop.permute.xlu0 %450
      %v452 = vrot.slane %v449, 4
      %v453 = vrot.slane %v451, 4
      %v454 = vsel %vm266, %v452, %v453
      %vm455 = vcmask 703488
      %v456 = vsel %vm455, %v449, %v454
      %459 = vst [vmem:[#allocation2 + $0x90] sm:$0xff] %v456
      %460 = vst.msk [vmem:[#allocation2 + $0x98] sm:$0xf] %vm254, %v451
      %v461 = vld [vmem:[%s234] sm:$0xff]
      %v462 = vld [vmem:[%s234 + $0x8] sm:$0xf]
      %465 = vrot.lane.b32.xlu0 %v461, 85
      %v466 = vpop.permute.xlu0 %465
      %467 = vrot.lane.b32.xlu0 %v462, 85
      %v468 = vpop.permute.xlu0 %467
      %v469 = vrot.slane %v466, 4
      %v470 = vrot.slane %v468, 4
      %v471 = vsel %vm266, %v469, %v470
      %vm472 = vcmask 695296
      %v473 = vsel %vm472, %v466, %v471
      %476 = vst [vmem:[#allocation2 + $0x9c] sm:$0xff] %v473
      %477 = vst.msk [vmem:[#allocation2 + $0xa4] sm:$0xf] %vm254, %v468
      %v478 = vld [vmem:[%s234] sm:$0xff]
      %v479 = vld [vmem:[%s234 + $0x8] sm:$0xf]
      %482 = vrot.lane.b32.xlu0 %v478, 84
      %v483 = vpop.permute.xlu0 %482
      %484 = vrot.lane.b32.xlu0 %v479, 84
      %v485 = vpop.permute.xlu0 %484
      %v486 = vrot.slane %v483, 4
      %v487 = vrot.slane %v485, 4
      %v488 = vsel %vm266, %v486, %v487
      %vm489 = vcmask 687104
      %v490 = vsel %vm489, %v483, %v488
      %493 = vst [vmem:[#allocation2 + $0xa8] sm:$0xff] %v490
      %494 = vst.msk [vmem:[#allocation2 + $0xb0] sm:$0xf] %vm254, %v485
      %v495 = vld [vmem:[%s234] sm:$0xff]
      %v496 = vld [vmem:[%s234 + $0x8] sm:$0xf]
      %499 = vrot.lane.b32.xlu0 %v495, 68
      %v500 = vpop.permute.xlu0 %499
      %501 = vrot.lane.b32.xlu0 %v496, 68
      %v502 = vpop.permute.xlu0 %501
      %v503 = vrot.slane %v500, 4
      %v504 = vrot.slane %v502, 4
      %v505 = vsel %vm266, %v503, %v504
      %vm506 = vcmask 556032
      %v507 = vsel %vm506, %v500, %v505
      %510 = vst [vmem:[#allocation2 + $0xb4] sm:$0xff] %v507
      %511 = vst.msk [vmem:[#allocation2 + $0xbc] sm:$0xf] %vm254, %v502
      %v512 = vld [vmem:[%s234] sm:$0xff]
      %v513 = vld [vmem:[%s234 + $0x8] sm:$0xf]
      %516 = vrot.lane.b32.xlu0 %v512, 67
      %v517 = vpop.permute.xlu0 %516
      %518 = vrot.lane.b32.xlu0 %v513, 67
      %v519 = vpop.permute.xlu0 %518
      %v520 = vrot.slane %v517, 4
      %v521 = vrot.slane %v519, 4
      %v522 = vsel %vm266, %v520, %v521
      %vm523 = vcmask 547840
      %v524 = vsel %vm523, %v517, %v522
      %527 = vst [vmem:[#allocation2 + $0xc0] sm:$0xff] %v524
      %528 = vst.msk [vmem:[#allocation2 + $0xc8] sm:$0xf] %vm254, %v519
      %v529 = vld [vmem:[%s234] sm:$0xff]
      %v530 = vld [vmem:[%s234 + $0x8] sm:$0xf]
      %533 = vrot.lane.b32.xlu0 %v529, 66
      %v534 = vpop.permute.xlu0 %533
      %535 = vrot.lane.b32.xlu0 %v530, 66
      %v536 = vpop.permute.xlu0 %535
      %v537 = vrot.slane %v534, 4
      %v538 = vrot.slane %v536, 4
      %v539 = vsel %vm266, %v537, %v538
      %vm540 = vcmask 539648
      %v541 = vsel %vm540, %v534, %v539
      %544 = vst [vmem:[#allocation2 + $0xcc] sm:$0xff] %v541
      %545 = vst.msk [vmem:[#allocation2 + $0xd4] sm:$0xf] %vm254, %v536
      %v546 = vld [vmem:[%s234] sm:$0xff]
      %v547 = vld [vmem:[%s234 + $0x8] sm:$0xf]
      %550 = vrot.lane.b32.xlu0 %v546, 65
      %v551 = vpop.permute.xlu0 %550
      %552 = vrot.lane.b32.xlu0 %v547, 65
      %v553 = vpop.permute.xlu0 %552
      %v554 = vrot.slane %v551, 4
      %v555 = vrot.slane %v553, 4
      %v556 = vsel %vm266, %v554, %v555
      %vm557 = vcmask 531456
      %v558 = vsel %vm557, %v551, %v556
      %561 = vst [vmem:[#allocation2 + $0xd8] sm:$0xff] %v558
      %562 = vst.msk [vmem:[#allocation2 + $0xe0] sm:$0xf] %vm254, %v553
      %v563 = vld [vmem:[%s234] sm:$0xff]
      %v564 = vld [vmem:[%s234 + $0x8] sm:$0xf]
      %567 = vrot.lane.b32.xlu0 %v563, 64
      %v568 = vpop.permute.xlu0 %567
      %569 = vrot.lane.b32.xlu0 %v564, 64
      %v570 = vpop.permute.xlu0 %569
      %v571 = vrot.slane %v568, 4
      %v572 = vrot.slane %v570, 4
      %v573 = vsel %vm266, %v571, %v572
      %vm574 = vcmask 523264
      %v575 = vsel %vm574, %v568, %v573
      %578 = vst [vmem:[#allocation2 + $0xe4] sm:$0xff] %v575
      %579 = vst.msk [vmem:[#allocation2 + $0xec] sm:$0xf] %vm254, %v570
      %v580 = vld [vmem:[%s234] sm:$0xff]
      %v581 = vld [vmem:[%s234 + $0x8] sm:$0xff]
      %584 = vrot.lane.b32.xlu0 %v580, 48
      %v585 = vpop.permute.xlu0 %584
      %586 = vrot.lane.b32.xlu0 %v581, 48
      %v587 = vpop.permute.xlu0 %586
      %v588 = vrot.slane %v585, 4
      %v589 = vrot.slane %v587, 4
      %v590 = vsel %vm266, %v588, %v589
      %vm591 = vcmask 392192
      %v592 = vsel %vm591, %v585, %v590
      %v593 = vsel %vm591, %v587, %v589
      %596 = vst [vmem:[#allocation2 + $0xf0] sm:$0xff] %v592
      %597 = vst.msk [vmem:[#allocation2 + $0xf8] sm:$0xf] %vm254, %v593
      %v598 = vld [vmem:[%s234] sm:$0xff]
      %v599 = vld [vmem:[%s234 + $0x8] sm:$0xff]
      %602 = vrot.lane.b32.xlu0 %v598, 47
      %v603 = vpop.permute.xlu0 %602
      %604 = vrot.lane.b32.xlu0 %v599, 47
      %v605 = vpop.permute.xlu0 %604
      %v606 = vrot.slane %v603, 4
      %v607 = vrot.slane %v605, 4
      %v608 = vsel %vm266, %v606, %v607
      %vm609 = vcmask 384000
      %v610 = vsel %vm609, %v603, %v608
      %v611 = vsel %vm609, %v605, %v607
      %614 = vst [vmem:[#allocation2 + $0xfc] sm:$0xff] %v610
      %615 = vst.msk [vmem:[#allocation2 + $0x104] sm:$0xf] %vm254, %v611
      %v616 = vld [vmem:[%s234] sm:$0xff]
      %v617 = vld [vmem:[%s234 + $0x8] sm:$0xff]
      %620 = vrot.lane.b32.xlu0 %v616, 46
      %v621 = vpop.permute.xlu0 %620
      %622 = vrot.lane.b32.xlu0 %v617, 46
      %v623 = vpop.permute.xlu0 %622
      %v624 = vrot.slane %v621, 4
      %v625 = vrot.slane %v623, 4
      %v626 = vsel %vm266, %v624, %v625
      %vm627 = vcmask 375808
      %v628 = vsel %vm627, %v621, %v626
      %v629 = vsel %vm627, %v623, %v625
      %632 = vst [vmem:[#allocation2 + $0x108] sm:$0xff] %v628
      %633 = vst.msk [vmem:[#allocation2 + $0x110] sm:$0xf] %vm254, %v629
      %v634 = vld [vmem:[%s234] sm:$0xff]
      %v635 = vld [vmem:[%s234 + $0x8] sm:$0xff]
      %638 = vrot.lane.b32.xlu0 %v634, 45
      %v639 = vpop.permute.xlu0 %638
      %640 = vrot.lane.b32.xlu0 %v635, 45
      %v641 = vpop.permute.xlu0 %640
      %v642 = vrot.slane %v639, 4
      %v643 = vrot.slane %v641, 4
      %v644 = vsel %vm266, %v642, %v643
      %vm645 = vcmask 367616
      %v646 = vsel %vm645, %v639, %v644
      %v647 = vsel %vm645, %v641, %v643
      %650 = vst [vmem:[#allocation2 + $0x114] sm:$0xff] %v646
      %651 = vst.msk [vmem:[#allocation2 + $0x11c] sm:$0xf] %vm254, %v647
      %v652 = vld [vmem:[%s234] sm:$0xff]
      %v653 = vld [vmem:[%s234 + $0x8] sm:$0xff]
      %656 = vrot.lane.b32.xlu0 %v652, 44
      %v657 = vpop.permute.xlu0 %656
      %658 = vrot.lane.b32.xlu0 %v653, 44
      %v659 = vpop.permute.xlu0 %658
      %v660 = vrot.slane %v657, 4
      %v661 = vrot.slane %v659, 4
      %v662 = vsel %vm266, %v660, %v661
      %vm663 = vcmask 359424
      %v664 = vsel %vm663, %v657, %v662
      %v665 = vsel %vm663, %v659, %v661
      %668 = vst [vmem:[#allocation2 + $0x120] sm:$0xff] %v664
      %669 = vst.msk [vmem:[#allocation2 + $0x128] sm:$0xf] %vm254, %v665
      %v670 = vld [vmem:[%s1] sm:$0xff]
      %v671 = vld [vmem:[%s1 + $0x8] sm:$0xff]
      %v672 = vld [vmem:[%s1 + $0x10] sm:$0xff]
      %v673 = vld [vmem:[%s1 + $0x18] sm:$0xff]
      %v674 = vld [vmem:[#allocation2] sm:$0xff]
      %v675 = vld [vmem:[#allocation2 + $0x8] sm:$0xf]
      %v676 = vld [vmem:[#allocation2 + $0xc] sm:$0xff]
      %v677 = vld [vmem:[#allocation2 + $0x14] sm:$0xf]
      %v678 = vld [vmem:[#allocation2 + $0x18] sm:$0xff]
      %v679 = vld [vmem:[#allocation2 + $0x20] sm:$0xf]
      %v680 = vld [vmem:[#allocation2 + $0x24] sm:$0xff]
      %v681 = vld [vmem:[#allocation2 + $0x2c] sm:$0xf]
      %v682 = vld [vmem:[#allocation2 + $0x30] sm:$0xff]
      %v683 = vld [vmem:[#allocation2 + $0x38] sm:$0xf]
      %v684 = vld [vmem:[#allocation2 + $0x3c] sm:$0xff]
      %v685 = vld [vmem:[#allocation2 + $0x44] sm:$0xf]
      %v686 = vld [vmem:[#allocation2 + $0x48] sm:$0xff]
      %v687 = vld [vmem:[#allocation2 + $0x50] sm:$0xf]
      %v688 = vld [vmem:[#allocation2 + $0x54] sm:$0xff]
      %v689 = vld [vmem:[#allocation2 + $0x5c] sm:$0xf]
      %v690 = vld [vmem:[#allocation2 + $0x60] sm:$0xff]
      %v691 = vld [vmem:[#allocation2 + $0x68] sm:$0xf]
      %v692 = vld [vmem:[#allocation2 + $0x6c] sm:$0xff]
      %v693 = vld [vmem:[#allocation2 + $0x74] sm:$0xf]
      %v694 = vld [vmem:[#allocation2 + $0x78] sm:$0xff]
      %v695 = vld [vmem:[#allocation2 + $0x80] sm:$0xf]
      %v696 = vld [vmem:[#allocation2 + $0x84] sm:$0xff]
      %v697 = vld [vmem:[#allocation2 + $0x8c] sm:$0xf]
      %v698 = vld [vmem:[#allocation2 + $0x90] sm:$0xff]
      %v699 = vld [vmem:[#allocation2 + $0x98] sm:$0xf]
      %v700 = vld [vmem:[#allocation2 + $0x9c] sm:$0xff]
      %v701 = vld [vmem:[#allocation2 + $0xa4] sm:$0xf]
      %v702 = vld [vmem:[#allocation2 + $0xa8] sm:$0xff]
      %v703 = vld [vmem:[#allocation2 + $0xb0] sm:$0xf]
      %v704 = vld [vmem:[#allocation2 + $0xb4] sm:$0xff]
      %v705 = vld [vmem:[#allocation2 + $0xbc] sm:$0xf]
      %v706 = vld [vmem:[#allocation2 + $0xc0] sm:$0xff]
      %v707 = vld [vmem:[#allocation2 + $0xc8] sm:$0xf]
      %v708 = vld [vmem:[#allocation2 + $0xcc] sm:$0xff]
      %v709 = vld [vmem:[#allocation2 + $0xd4] sm:$0xf]
      %v710 = vld [vmem:[#allocation2 + $0xd8] sm:$0xff]
      %v711 = vld [vmem:[#allocation2 + $0xe0] sm:$0xf]
      %v712 = vld [vmem:[#allocation2 + $0xe4] sm:$0xff]
      %v713 = vld [vmem:[#allocation2 + $0xec] sm:$0xf]
      %v714 = vld [vmem:[#allocation2 + $0xf0] sm:$0xff]
      %v715 = vld [vmem:[#allocation2 + $0xf8] sm:$0xf]
      %v716 = vld [vmem:[#allocation2 + $0xfc] sm:$0xff]
      %v717 = vld [vmem:[#allocation2 + $0x104] sm:$0xf]
      %v718 = vld [vmem:[#allocation2 + $0x108] sm:$0xff]
      %v719 = vld [vmem:[#allocation2 + $0x110] sm:$0xf]
      %v720 = vld [vmem:[#allocation2 + $0x114] sm:$0xff]
      %v721 = vld [vmem:[#allocation2 + $0x11c] sm:$0xf]
      %v722 = vld [vmem:[#allocation2 + $0x120] sm:$0xff]
      %v723 = vld [vmem:[#allocation2 + $0x128] sm:$0xf]
      %v728 = vunpack.c.l.b16 %v670
      %v729 = vunpack.c.h.b16 %v670
      %v730 = vunpack.c.l.b16 %v671
      %v731 = vunpack.c.h.b16 %v671
      %v732 = vunpack.c.l.b16 %v672
      %v733 = vunpack.c.h.b16 %v672
      %v734 = vunpack.c.l.b16 %v673
      %v735 = vunpack.c.h.b16 %v673
      %v736 = vpack.c.b16 %v730, %v728
      %v737 = vpack.c.b16 %v731, %v729
      %v738 = vpack.c.b16 %v734, %v732
      %v739 = vpack.c.b16 %v735, %v733
      %v792 = vunpack.c.l.b16 %v674
      %v793 = vunpack.c.h.b16 %v674
      %v794 = vunpack.c.l.b16 %v675
      %v795 = vunpack.c.l.b16 %v676
      %v796 = vunpack.c.h.b16 %v676
      %v797 = vunpack.c.l.b16 %v677
      %v798 = vunpack.c.l.b16 %v678
      %v799 = vunpack.c.h.b16 %v678
      %v800 = vunpack.c.l.b16 %v679
      %v801 = vunpack.c.l.b16 %v680
      %v802 = vunpack.c.h.b16 %v680
      %v803 = vunpack.c.l.b16 %v681
      %v804 = vunpack.c.l.b16 %v682
      %v805 = vunpack.c.h.b16 %v682
      %v806 = vunpack.c.l.b16 %v683
      %v807 = vunpack.c.l.b16 %v684
      %v808 = vunpack.c.h.b16 %v684
      %v809 = vunpack.c.l.b16 %v685
      %v810 = vunpack.c.l.b16 %v686
      %v811 = vunpack.c.h.b16 %v686
      %v812 = vunpack.c.l.b16 %v687
      %v813 = vunpack.c.l.b16 %v688
      %v814 = vunpack.c.h.b16 %v688
      %v815 = vunpack.c.l.b16 %v689
      %v816 = vunpack.c.l.b16 %v690
      %v817 = vunpack.c.h.b16 %v690
      %v818 = vunpack.c.l.b16 %v691
      %v819 = vunpack.c.l.b16 %v692
      %v820 = vunpack.c.h.b16 %v692
      %v821 = vunpack.c.l.b16 %v693
      %v822 = vunpack.c.l.b16 %v694
      %v823 = vunpack.c.h.b16 %v694
      %v824 = vunpack.c.l.b16 %v695
      %v825 = vunpack.c.l.b16 %v696
      %v826 = vunpack.c.h.b16 %v696
      %v827 = vunpack.c.l.b16 %v697
      %v828 = vunpack.c.l.b16 %v698
      %v829 = vunpack.c.h.b16 %v698
      %v830 = vunpack.c.l.b16 %v699
      %v831 = vunpack.c.l.b16 %v700
      %v832 = vunpack.c.h.b16 %v700
      %v833 = vunpack.c.l.b16 %v701
      %v834 = vunpack.c.l.b16 %v702
      %v835 = vunpack.c.h.b16 %v702
      %v836 = vunpack.c.l.b16 %v703
      %v837 = vunpack.c.l.b16 %v704
      %v838 = vunpack.c.h.b16 %v704
      %v839 = vunpack.c.l.b16 %v705
      %v840 = vunpack.c.l.b16 %v706
      %v841 = vunpack.c.h.b16 %v706
      %v842 = vunpack.c.l.b16 %v707
      %v843 = vunpack.c.l.b16 %v708
      %v844 = vunpack.c.h.b16 %v708
      %v845 = vunpack.c.l.b16 %v709
      %v846 = vunpack.c.l.b16 %v710
      %v847 = vunpack.c.h.b16 %v710
      %v848 = vunpack.c.l.b16 %v711
      %v849 = vunpack.c.l.b16 %v712
      %v850 = vunpack.c.h.b16 %v712
      %v851 = vunpack.c.l.b16 %v713
      %v852 = vunpack.c.l.b16 %v714
      %v853 = vunpack.c.h.b16 %v714
      %v854 = vunpack.c.l.b16 %v715
      %v855 = vunpack.c.l.b16 %v716
      %v856 = vunpack.c.h.b16 %v716
      %v857 = vunpack.c.l.b16 %v717
      %v858 = vunpack.c.l.b16 %v718
      %v859 = vunpack.c.h.b16 %v718
      %v860 = vunpack.c.l.b16 %v719
      %v861 = vunpack.c.l.b16 %v720
      %v862 = vunpack.c.h.b16 %v720
      %v863 = vunpack.c.l.b16 %v721
      %v864 = vunpack.c.l.b16 %v722
      %v865 = vunpack.c.h.b16 %v722
      %v866 = vunpack.c.l.b16 %v723
      %v867 = vpack.c.b16 %v795, %v792
      %v868 = vpack.c.b16 %v796, %v793
      %v869 = vpack.c.b16 %v797, %v794
      %v870 = vpack.c.b16 %v801, %v798
      %v871 = vpack.c.b16 %v802, %v799
      %v872 = vpack.c.b16 %v803, %v800
      %v873 = vpack.c.b16 %v807, %v804
      %v874 = vpack.c.b16 %v808, %v805
      %v875 = vpack.c.b16 %v809, %v806
      %v876 = vpack.c.b16 %v813, %v810
      %v877 = vpack.c.b16 %v814, %v811
      %v878 = vpack.c.b16 %v815, %v812
      %v879 = vpack.c.b16 %v819, %v816
      %v880 = vpack.c.b16 %v820, %v817
      %v881 = vpack.c.b16 %v821, %v818
      %v882 = vpack.c.b16 %v825, %v822
      %v883 = vpack.c.b16 %v826, %v823
      %v884 = vpack.c.b16 %v827, %v824
      %v885 = vpack.c.b16 %v831, %v828
      %v886 = vpack.c.b16 %v832, %v829
      %v887 = vpack.c.b16 %v833, %v830
      %v888 = vpack.c.b16 %v837, %v834
      %v889 = vpack.c.b16 %v838, %v835
      %v890 = vpack.c.b16 %v839, %v836
      %v891 = vpack.c.b16 %v843, %v840
      %v892 = vpack.c.b16 %v844, %v841
      %v893 = vpack.c.b16 %v845, %v842
      %v894 = vpack.c.b16 %v849, %v846
      %v895 = vpack.c.b16 %v850, %v847
      %v896 = vpack.c.b16 %v851, %v848
      %v897 = vpack.c.b16 %v855, %v852
      %v898 = vpack.c.b16 %v856, %v853
      %v899 = vpack.c.b16 %v857, %v854
      %v900 = vpack.c.b16 %v861, %v858
      %v901 = vpack.c.b16 %v862, %v859
      %v902 = vpack.c.b16 %v863, %v860
      %v903 = vpack.c.b16 %v864, %v864
      %v904 = vpack.c.b16 %v865, %v865
      %v905 = vpack.c.b16 %v866, %v866
      %vm942 = vcmask 588800
      %v944 = vsel %vm942, %v737, 0
      %v947 = vsel %vm942, %v739, 0
      %vm949 = vcmask 1043456
      %v951 = vsel %vm949, %v903, 0
      %v954 = vsel %vm949, %v904, 0
      %v957 = vsel %vm949, %v905, 0
      %959 = vmatprep.subr.bf16.mxu0 %v889
      %960 = vmatpush1.bf16.msra.mxu0 %v888
      %961 = vmatprep.subr.bf16.mxu0 %v886
      %962 = vmatpush1.bf16.msra.mxu0 %v885
      %963 = vmatprep.subr.bf16.mxu0 %v883
      %964 = vmatpush1.bf16.msra.mxu0 %v882
      %965 = vmatprep.subr.bf16.mxu0 %v880
      %966 = vmatpush1.bf16.msra.mxu0 %v879
      %967 = vmatprep.subr.bf16.mxu0 %v877
      %968 = vmatpush1.bf16.msra.mxu0 %v876
      %969 = vmatprep.subr.bf16.mxu0 %v874
      %970 = vmatpush1.bf16.msra.mxu0 %v873
      %971 = vmatprep.subr.bf16.mxu0 %v871
      %972 = vmatpush1.bf16.msra.mxu0 %v870
      %973 = vmatprep.subr.bf16.mxu0 %v868
      %974 = vmatpush1.bf16.msra.mxu0 %v867
      %975 = vmatprep.subr.bf16.mxu0 0
      %976 = vmatpush2.bf16.msra.mxu0 0
      %977 = vmatprep.subr.bf16.mxu0 0
      %978 = vmatpush2.bf16.msra.mxu0 0
      %979 = vmatprep.subr.bf16.mxu0 0
      %980 = vmatpush2.bf16.msra.mxu0 0
      %981 = vmatprep.subr.bf16.mxu0 %v954
      %982 = vmatpush2.bf16.msra.mxu0 %v951
      %983 = vmatprep.subr.bf16.mxu0 %v901
      %984 = vmatpush2.bf16.msra.mxu0 %v900
      %985 = vmatprep.subr.bf16.mxu0 %v898
      %986 = vmatpush2.bf16.msra.mxu0 %v897
      %987 = vmatprep.subr.bf16.mxu0 %v895
      %988 = vmatpush2.bf16.msra.mxu0 %v894
      %989 = vmatprep.subr.bf16.mxu0 %v892
      %990 = vmatpush2.bf16.msra.mxu0 %v891
      %991 = vmatprep.mubr.bf16.mxu0 %v944
      %992 = vmatmul.mubr.bf16.gmra.mxu0 %v736
      %v993 = vpop.f32.mrf.mxu0
      %v994 = vadd.f32 0.0, %v993
      %v995 = vpop.f32.mrf.mxu0
      %v996 = vadd.f32 0.0, %v995
      %v997 = vpop.f32.mrf.mxu0
      %v998 = vadd.f32 0.0, %v997
      %v999 = vpop.f32.mrf.mxu0
      %v1000 = vadd.f32 0.0, %v999
      %1001 = vmatprep.mubr.bf16.mxu0 %v947
      %1002 = vmatmul.mubr.bf16.gmra.mxu0 %v738
      %v1003 = vpop.f32.mrf.mxu0
      %v1004 = vadd.f32 0.0, %v1003
      %v1005 = vpop.f32.mrf.mxu0
      %v1006 = vadd.f32 0.0, %v1005
      %v1007 = vpop.f32.mrf.mxu0
      %v1008 = vadd.f32 0.0, %v1007
      %v1009 = vpop.f32.mrf.mxu0
      %v1010 = vadd.f32 0.0, %v1009
      %1011 = vdwg.mxu0
      %1012 = vmatprep.subr.bf16.mxu0 0
      %1013 = vmatpush1.bf16.msra.mxu0 %v890
      %1014 = vmatprep.subr.bf16.mxu0 0
      %1015 = vmatpush1.bf16.msra.mxu0 %v887
      %1016 = vmatprep.subr.bf16.mxu0 0
      %1017 = vmatpush1.bf16.msra.mxu0 %v884
      %1018 = vmatprep.subr.bf16.mxu0 0
      %1019 = vmatpush1.bf16.msra.mxu0 %v881
      %1020 = vmatprep.subr.bf16.mxu0 0
      %1021 = vmatpush1.bf16.msra.mxu0 %v878
      %1022 = vmatprep.subr.bf16.mxu0 0
      %1023 = vmatpush1.bf16.msra.mxu0 %v875
      %1024 = vmatprep.subr.bf16.mxu0 0
      %1025 = vmatpush1.bf16.msra.mxu0 %v872
      %1026 = vmatprep.subr.bf16.mxu0 0
      %1027 = vmatpush1.bf16.msra.mxu0 %v869
      %1028 = vmatprep.subr.bf16.mxu0 0
      %1029 = vmatpush2.bf16.msra.mxu0 0
      %1030 = vmatprep.subr.bf16.mxu0 0
      %1031 = vmatpush2.bf16.msra.mxu0 0
      %1032 = vmatprep.subr.bf16.mxu0 0
      %1033 = vmatpush2.bf16.msra.mxu0 0
      %1034 = vmatprep.subr.bf16.mxu0 0
      %1035 = vmatpush2.bf16.msra.mxu0 %v957
      %1036 = vmatprep.subr.bf16.mxu0 0
      %1037 = vmatpush2.bf16.msra.mxu0 %v902
      %1038 = vmatprep.subr.bf16.mxu0 0
      %1039 = vmatpush2.bf16.msra.mxu0 %v899
      %1040 = vmatprep.subr.bf16.mxu0 0
      %1041 = vmatpush2.bf16.msra.mxu0 %v896
      %1042 = vmatprep.subr.bf16.mxu0 0
      %1043 = vmatpush2.bf16.msra.mxu0 %v893
      %1044 = vmatprep.mubr.bf16.mxu0 %v944
      %1045 = vmatmul.mubr.bf16.gmra.mxu0 %v736
      %v1046 = vpop.f32.mrf.mxu0
      %v1047 = vadd.f32 0.0, %v1046
      %v1048 = vpop.f32.mrf.mxu0
      %v1049 = vpop.f32.mrf.mxu0
      %v1050 = vadd.f32 0.0, %v1049
      %v1051 = vpop.f32.mrf.mxu0
      %1052 = vmatprep.mubr.bf16.mxu0 %v947
      %1053 = vmatmul.mubr.bf16.gmra.mxu0 %v738
      %v1054 = vpop.f32.mrf.mxu0
      %v1055 = vadd.f32 0.0, %v1054
      %v1056 = vpop.f32.mrf.mxu0
      %v1057 = vpop.f32.mrf.mxu0
      %v1058 = vadd.f32 0.0, %v1057
      %v1059 = vpop.f32.mrf.mxu0
      %1060 = vdwg.mxu0
      %v1061 = vpack.c.bf16 %v998, %v994
      %v1062 = vpack.c.bf16 %v1000, %v996
      %v1063 = vpack.c.bf16 %v1050, %v1047
      %v1064 = vpack.c.bf16 %v1008, %v1004
      %v1065 = vpack.c.bf16 %v1010, %v1006
      %v1066 = vpack.c.bf16 %v1058, %v1055
      %v1073 = vunpack.c.l.b16 %v1061
      %v1074 = vunpack.c.l.b16 %v1062
      %v1075 = vunpack.c.l.b16 %v1063
      %v1076 = vunpack.c.h.b16 %v1061
      %v1077 = vunpack.c.h.b16 %v1062
      %v1078 = vunpack.c.h.b16 %v1063
      %v1079 = vunpack.c.l.b16 %v1064
      %v1080 = vunpack.c.l.b16 %v1065
      %v1081 = vunpack.c.l.b16 %v1066
      %v1082 = vunpack.c.h.b16 %v1064
      %v1083 = vunpack.c.h.b16 %v1065
      %v1084 = vunpack.c.h.b16 %v1066
      %v1085 = vpack.c.b16 %v1074, %v1073
      %v1086 = vpack.c.b16 %v1075, %v1075
      %v1087 = vpack.c.b16 %v1077, %v1076
      %v1088 = vpack.c.b16 %v1078, %v1078
      %v1089 = vpack.c.b16 %v1080, %v1079
      %v1090 = vpack.c.b16 %v1081, %v1081
      %v1091 = vpack.c.b16 %v1083, %v1082
      %v1092 = vpack.c.b16 %v1084, %v1084
      %1101 = vst [vmem:[%s239] sm:$0xff] %v1085
      %1102 = vst.msk [vmem:[%s239 + $0x8] sm:$0xf] %vm254, %v1086
      %1103 = vst [vmem:[%s239 + $0xc] sm:$0xff] %v1087
      %1104 = vst.msk [vmem:[%s239 + $0x14] sm:$0xf] %vm254, %v1088
      %1105 = vst [vmem:[%s239 + $0x18] sm:$0xff] %v1089
      %1106 = vst.msk [vmem:[%s239 + $0x20] sm:$0xf] %vm254, %v1090
      %1107 = vst [vmem:[%s239 + $0x24] sm:$0xff] %v1091
      %1108 = vst.msk [vmem:[%s239 + $0x2c] sm:$0xf] %vm254, %v1092
      %v1109 = vld [vmem:[%s2] sm:$0x7]
      %v1111 = vlaneseq
      %v1112 = vshrl.u32 %v1111, 7
      %v1113 = vsub.s32 0, %v1112
      %v1114 = vrot.slane %v1109, %v1113
      %v1115 = vlaneseq
      %v1116 = vshrl.u32 %v1115, 7
      %v1117 = vsub.s32 1, %v1116
      %v1118 = vrot.slane %v1109, %v1117
      %v1119 = vlaneseq
      %v1120 = vshrl.u32 %v1119, 7
      %v1121 = vsub.s32 2, %v1120
      %v1122 = vrot.slane %v1109, %v1121
      %v1126 = vmul.f32 %v994, %v1114
      %v1127 = vmul.f32 %v996, %v1118
      %v1128 = vmul.f32 %v1047, %v1122
      %v1129 = vmul.f32 %v998, %v1114
      %v1130 = vmul.f32 %v1000, %v1118
      %v1131 = vmul.f32 %v1050, %v1122
      %v1132 = vmul.f32 %v1004, %v1114
      %v1133 = vmul.f32 %v1006, %v1118
      %v1134 = vmul.f32 %v1055, %v1122
      %v1135 = vmul.f32 %v1008, %v1114
      %v1136 = vmul.f32 %v1010, %v1118
      %v1137 = vmul.f32 %v1058, %v1122
      %v1138 = vadd.f32 %v1126, %v1127
      %vm1139 = vcmask 523264
      %v1140 = vsel %vm1139, %v1128, 0.0
      %v1141 = vadd.f32 %v1138, %v1140
      %1142 = vadd.xlane.f32.xlu0 %v1141
      %v1143 = vpop.xlane.xlu0 %1142
      %v1144 = vadd.f32 %v1129, %v1130
      %v1145 = vsel %vm1139, %v1131, 0.0
      %v1146 = vadd.f32 %v1144, %v1145
      %1147 = vadd.xlane.f32.xlu0 %v1146
      %v1148 = vpop.xlane.xlu0 %1147
      %v1149 = vadd.f32 %v1132, %v1133
      %v1150 = vsel %vm1139, %v1134, 0.0
      %v1151 = vadd.f32 %v1149, %v1150
      %1152 = vadd.xlane.f32.xlu0 %v1151
      %v1153 = vpop.xlane.xlu0 %1152
      %v1154 = vadd.f32 %v1135, %v1136
      %v1155 = vsel %vm1139, %v1137, 0.0
      %v1156 = vadd.f32 %v1154, %v1155
      %1157 = vadd.xlane.f32.xlu0 %v1156
      %v1158 = vpop.xlane.xlu0 %1157
      %vm1159 = vcmask 7168
      %1160 = vst.msk [vmem:[%s244] sm:$0xff] %vm1159, %v1143
      %1161 = vst.msk [vmem:[%s244 + $0x8] sm:$0xff] %vm1159, %v1148
      %1162 = vst.msk [vmem:[%s244 + $0x10] sm:$0xff] %vm1159, %v1153
      %1163 = vst.msk [vmem:[%s244 + $0x18] sm:$0xff] %vm1159, %v1158
      %v1164 = vmul.f32 %v1126, %v1126
      %v1165 = vmul.f32 %v1127, %v1127
      %v1166 = vmul.f32 %v1128, %v1128
      %v1167 = vmul.f32 %v1129, %v1129
      %v1168 = vmul.f32 %v1130, %v1130
      %v1169 = vmul.f32 %v1131, %v1131
      %v1170 = vmul.f32 %v1132, %v1132
      %v1171 = vmul.f32 %v1133, %v1133
      %v1172 = vmul.f32 %v1134, %v1134
      %v1173 = vmul.f32 %v1135, %v1135
      %v1174 = vmul.f32 %v1136, %v1136
      %v1175 = vmul.f32 %v1137, %v1137
      %v1176 = vadd.f32 %v1164, %v1165
      %v1177 = vsel %vm1139, %v1166, 0.0
      %v1178 = vadd.f32 %v1176, %v1177
      %1179 = vadd.xlane.f32.xlu0 %v1178
      %v1180 = vpop.xlane.xlu0 %1179
      %v1181 = vadd.f32 %v1167, %v1168
      %v1182 = vsel %vm1139, %v1169, 0.0
      %v1183 = vadd.f32 %v1181, %v1182
      %1184 = vadd.xlane.f32.xlu0 %v1183
      %v1185 = vpop.xlane.xlu0 %1184
      %v1186 = vadd.f32 %v1170, %v1171
      %v1187 = vsel %vm1139, %v1172, 0.0
      %v1188 = vadd.f32 %v1186, %v1187
      %1189 = vadd.xlane.f32.xlu0 %v1188
      %v1190 = vpop.xlane.xlu0 %1189
      %v1191 = vadd.f32 %v1173, %v1174
      %v1192 = vsel %vm1139, %v1175, 0.0
      %v1193 = vadd.f32 %v1191, %v1192
      %1194 = vadd.xlane.f32.xlu0 %v1193
      %v1195 = vpop.xlane.xlu0 %1194
      %1196 = vst.msk [vmem:[%s249] sm:$0xff] %vm1159, %v1180
      %1197 = vst.msk [vmem:[%s249 + $0x8] sm:$0xff] %vm1159, %v1185
      %1198 = vst.msk [vmem:[%s249 + $0x10] sm:$0xff] %vm1159, %v1190
      %1199 = vst.msk [vmem:[%s249 + $0x18] sm:$0xff] %vm1159, %v1195
      %p1200 = scmp.lt.s32.totalorder %s17, 1
      %s1201 = scalar_select %p1200, %s17, 1
      %s1202 = smul.addr %s1201, 12
      %s1203 = smul.addr %s1202, 4
      %s1204 = scalar_lea.vmem %s3, %s1203
      %p1205 = scmp.lt.s32.totalorder %s17, 1
      %s1206 = scalar_select %p1205, %s17, 1
      %s1207 = smul.addr %s1206, 4
      %s1208 = smul.addr %s1207, 8
      %s1209 = scalar_lea.vmem %s4, %s1208
      %p1210 = scmp.lt.s32.totalorder %s17, 1
      %s1211 = scalar_select %p1210, %s17, 1
      %s1212 = smul.addr %s1211, 4
      %s1213 = smul.addr %s1212, 8
      %s1214 = scalar_lea.vmem %s5, %s1213
      // Predicated region
      $region33: #{alex_conv_block_forward.2} parent=31 // pred_check
        %p1215 = pneg %p103
      $region34: #{alex_conv_block_forward.2} parent=31 // pred_check_branch
        %1217 = sbr.rel (%p1215) target = $region36
      $region35: #{alex_conv_block_forward.2} parent=31 // pred_region
        _
      $region36: #{alex_conv_block_forward.2} parent=31 // pred_fallthru
        _
      // Predicated region
      $region37: #{alex_conv_block_forward.2} parent=31 // pred_check
        %p1218 = pneg %p129
      $region38: #{alex_conv_block_forward.2} parent=31 // pred_check_branch
        %1220 = sbr.rel (%p1218) target = $region40
      $region39: #{alex_conv_block_forward.2} parent=31 // pred_region
        _
      $region40: #{alex_conv_block_forward.2} parent=31 // pred_fallthru
        _
      // Predicated region
      $region41: #{alex_conv_block_forward.2} parent=31 // pred_check
        %p1221 = pneg %p155
      $region42: #{alex_conv_block_forward.2} parent=31 // pred_check_branch
        %1223 = sbr.rel (%p1221) target = $region44
      $region43: #{alex_conv_block_forward.2} parent=31 // pred_region
        _
      $region44: #{alex_conv_block_forward.2} parent=31 // pred_fallthru
        _
    $region32: #{alex_conv_block_forward.2} parent=5 // pred_fallthru
      _
    %p1224 = scmp.le.s32.totalorder 2, %s12
    // Predicated region
    $region45: #{alex_conv_block_forward.2} parent=5 // pred_check
      %p1225 = pneg %p1224
    $region46: #{alex_conv_block_forward.2} parent=5 // pred_check_branch
      %1227 = sbr.rel (%p1225) target = $region48
    $region47: #{alex_conv_block_forward.2} parent=5 // pred_region
      %s1228 = ssub.s32 %s12, 2
      // Predicated region
      $region49: #{alex_conv_block_forward.2} parent=47 // pred_check
        %p1229 = pneg %p109
      $region50: #{alex_conv_block_forward.2} parent=47 // pred_check_branch
        %1231 = sbr.rel (%p1229) target = $region52
      $region51: #{alex_conv_block_forward.2} parent=47 // pred_region
        %p1232 = scmp.lt.s32.totalorder %s18, 1
        %s1233 = scalar_select %p1232, %s18, 1
        %s1234 = smul.addr %s1233, 12
        %s1235 = smul.addr %s1234, 4
        %s1236 = scalar_lea.vmem %s3, %s1235
      $region52: #{alex_conv_block_forward.2} parent=47 // pred_fallthru
        _
      // Predicated region
      $region53: #{alex_conv_block_forward.2} parent=47 // pred_check
        %p1237 = pneg %p135
      $region54: #{alex_conv_block_forward.2} parent=47 // pred_check_branch
        %1239 = sbr.rel (%p1237) target = $region56
      $region55: #{alex_conv_block_forward.2} parent=47 // pred_region
        %p1240 = scmp.lt.s32.totalorder %s18, 1
        %s1241 = scalar_select %p1240, %s18, 1
        %s1242 = smul.addr %s1241, 4
        %s1243 = smul.addr %s1242, 8
        %s1244 = scalar_lea.vmem %s4, %s1243
      $region56: #{alex_conv_block_forward.2} parent=47 // pred_fallthru
        _
      // Predicated region
      $region57: #{alex_conv_block_forward.2} parent=47 // pred_check
        %p1245 = pneg %p161
      $region58: #{alex_conv_block_forward.2} parent=47 // pred_check_branch
        %1247 = sbr.rel (%p1245) target = $region60
      $region59: #{alex_conv_block_forward.2} parent=47 // pred_region
        %p1248 = scmp.lt.s32.totalorder %s18, 1
        %s1249 = scalar_select %p1248, %s18, 1
        %s1250 = smul.addr %s1249, 4
        %s1251 = smul.addr %s1250, 8
        %s1252 = scalar_lea.vmem %s5, %s1251
      $region60: #{alex_conv_block_forward.2} parent=47 // pred_fallthru
        _
    $region48: #{alex_conv_block_forward.2} parent=5 // pred_fallthru
      _
  $region6: #{alex_conv_block_forward.2} parent=0 // loop_footer
    %s16 = sadd.s32 1, %s12
  $region7: #{alex_conv_block_forward.2} parent=0 // loop_footer_branch
    %11 = sbr.rel target = $region3
  $region8: #{alex_conv_block_forward.2} parent=0 // loop_exit
    _

</llo_original>
